<compile_context>
chip_gen: v7x
topology: tpu7x:2x2x1
jax: 0.10.0
libtpu: 0.0.40
codegen_flags: <defaults>
</compile_context>

<pallas_src>
import jax
import jax.numpy as jnp
from jax.experimental import pallas as pl
from jax.experimental.pallas import tpu as pltpu

# ---- model hyper-params (stand-in for the configparser `config` object) ----
INPUT_DIM = 12
SELF_STATE_DIM = 5
MLP21_DIMS = [64, 32]           # mlp21 (last_relu=True)
MLP23_DIMS = [64, 32]
ATTENTION_DIMS = [32, 32, 1]
LSTM_HIDDEN = 32                # hn_state_dim
MLP11_DIMS = [64, 32]
MLP_FINAL_DIMS = [64, 64]
N_ACTIONS = 5
WITH_GLOBAL_STATE = True
CURRENT_DIST_WEIGHT = 0.8
TIME_STEP = 0.25
LANES = 128


# --------------------------- parameter slab layout ---------------------------
def _round8(x):
    return -(-x // 8) * 8


def _build_layout():
    H, L, S = LSTM_HIDDEN, LANES, SELF_STATE_DIM
    D21, D23, D11 = MLP21_DIMS[-1], MLP23_DIMS[-1], MLP11_DIMS[-1]
    A1, A2 = ATTENTION_DIMS[0], ATTENTION_DIMS[1]
    # (name, natural_rows, natural_cols, stored_rows)
    # stored_rows == 128 whenever the consuming activation is a lane-dense 128-wide
    # intermediate -> the matmul chain never lane-slices weights or activations.
    entries = [
        ("w21a", INPUT_DIM, MLP21_DIMS[0], INPUT_DIM), ("b21a", 1, MLP21_DIMS[0], 1),
        ("w21b", MLP21_DIMS[0], D21, L),               ("b21b", 1, D21, 1),
        ("wa1e", D21, A1, L), ("wa1g", D21, A1, L),    ("ba1", 1, A1, 1),
        ("wa2", A1, A2, L),                            ("ba2", 1, A2, 1),
        ("wa3r", 1, A2, 1),                            ("ba3", 1, 1, 1),
        ("w23as", S, MLP23_DIMS[0], S), ("w23aw", D21, MLP23_DIMS[0], L),
        ("b23a", 1, MLP23_DIMS[0], 1),
        ("w23b", MLP23_DIMS[0], D23, L),               ("b23b", 1, D23, 1),
        ("wihf", INPUT_DIM - S, 4 * H, INPUT_DIM - S),  # fused gates [i|f|o|g]
        ("whhf", H, 4 * H, H),
        ("blstm", 1, 4 * H, 1),                         # bih + bhh, fused
        ("w11as", S, MLP11_DIMS[0], S), ("w11ah", H, MLP11_DIMS[0], H),
        ("b11a", 1, MLP11_DIMS[0], 1),
        ("w11b", MLP11_DIMS[0], D11, L),               ("b11b", 1, D11, 1),
        ("wfa1", D11, MLP_FINAL_DIMS[0], L), ("wfa2", D23, MLP_FINAL_DIMS[0], L),
        ("bfa", 1, MLP_FINAL_DIMS[0], 1),
        ("wfb", MLP_FINAL_DIMS[0], MLP_FINAL_DIMS[1], L), ("bfb", 1, MLP_FINAL_DIMS[1], 1),
        ("wfc", MLP_FINAL_DIMS[1], N_ACTIONS, L),      ("bfc", 1, N_ACTIONS, 1),
    ]
    layout, off = {}, 0
    for name, nr, nc, sr in entries:
        assert nc <= LANES and nr <= sr
        layout[name] = (off, nr, nc, sr)
        off += _round8(sr)
    return layout, _round8(off)


_LAYOUT, _SLAB_ROWS = _build_layout()


def pack_params(params):
    """Pack raw parameter tuple into one lane-dense (SLAB_ROWS, 128) f32 slab."""
    (w21a, b21a, w21b, b21b, wa1, ba1, wa2, ba2, wa3, ba3,
     w23a, b23a, w23b, b23b, wih, whh, bih, bhh,
     w11a, b11a, w11b, b11b, wfa, bfa, wfb, bfb, wfc, bfc) = params
    D21, S = MLP21_DIMS[-1], SELF_STATE_DIM
    gate_order = (0, 1, 3, 2)                    # [i|f|o|g]: 96-lane sigmoid + 32-lane tanh
    blstm = bih + bhh                            # fold the two LSTM biases here (f32)
    tensors = {
        "w21a": w21a, "b21a": b21a, "w21b": w21b, "b21b": b21b,
        "wa1e": wa1[:D21], "wa1g": wa1[D21:], "ba1": ba1,
        "wa2": wa2, "ba2": ba2,
        "wa3r": wa3.T, "ba3": ba3,
        "w23as": w23a[:S], "w23aw": w23a[S:], "b23a": b23a,
        "w23b": w23b, "b23b": b23b,
        "wihf": jnp.concatenate([wih[k] for k in gate_order], axis=1),
        "whhf": jnp.concatenate([whh[k] for k in gate_order], axis=1),
        "blstm": jnp.concatenate([blstm[k] for k in gate_order], axis=1),
        "w11as": w11a[:S], "w11ah": w11a[S:], "b11a": b11a,
        "w11b": w11b, "b11b": b11b,
        "wfa1": wfa[:MLP11_DIMS[-1]], "wfa2": wfa[MLP11_DIMS[-1]:], "bfa": bfa,
        "wfb": wfb, "bfb": bfb, "wfc": wfc, "bfc": bfc,
    }
    slab = jnp.zeros((_SLAB_ROWS, LANES), jnp.float32)
    for name, (off, nr, nc, sr) in _LAYOUT.items():
        t = jnp.asarray(tensors[name], jnp.float32)
        assert t.shape == (nr, nc), (name, t.shape, (nr, nc))
        slab = slab.at[off:off + nr, :nc].set(t)   # padding (rows/cols) stays zero
    return slab


# --------------------------------- kernel -----------------------------------
def _esa_kernel(state3_ref, statef_ref, slab_ref, out_ref):
    f32, bf16 = jnp.float32, jnp.bfloat16
    S, H = SELF_STATE_DIM, LSTM_HIDDEN

    def w(name, lanes=LANES):
        off, _, _, sr = _LAYOUT[name]
        return slab_ref[off:off + sr, :lanes]       # full-lane, row-padded weight read

    def dot(x, ww):
        # bf16 MXU operands (per perf review), f32 accumulation; biases added in f32.
        return jnp.dot(x.astype(bf16), ww.astype(bf16), preferred_element_type=f32)

    state = state3_ref[...]                         # (TB, N, F) - sort/self_state/LSTM
    xflat = statef_ref[...]                         # (TB*N, F)  - pre-flattened by XLA
    TB, N, F = state.shape

    # ---- mlp21 (last_relu=True): 128-lane-dense intermediates throughout ----
    h = jax.nn.relu(dot(xflat, w("w21a")) + w("b21a"))
    e = jax.nn.relu(dot(h, w("w21b")) + w("b21b"))          # (TB*N, 128), cols>=32 zero
    feat = e.reshape(TB, N, LANES)

    # ---- global state + attention scores ----
    gmean = jnp.mean(feat, axis=1, keepdims=True)           # (TB, 1, 128)
    g = jnp.broadcast_to(gmean, (TB, N, LANES)).reshape(TB * N, LANES)
    a = jax.nn.relu(dot(e, w("wa1e")) + dot(g, w("wa1g")) + w("ba1"))
    a = jax.nn.relu(dot(a, w("wa2")) + w("ba2"))            # (TB*N, 128)
    # 1-wide score layer as VPU multiply + lane reduce (humans end up on lanes)
    scores = jnp.sum(a.reshape(TB, N, LANES) * w("wa3r").reshape(1, 1, LANES), axis=-1)
    scores = scores + w("ba3", 1)                           # (TB, N) + (1, 1)

    # ---- softmax over humans + weighted feature sum ----
    m = jnp.max(scores, axis=-1, keepdims=True)
    ex = jnp.exp(scores - m)
    attw = ex / jnp.sum(ex, axis=-1, keepdims=True)         # (TB, N), f32
    weighted = jnp.sum(attw[:, :, None] * feat, axis=1)     # (TB, 128)

    self_state = state[:, 0, :S]                            # (TB, 5)

    # ---- mlp23 on cat([self_state, weighted]) (split-weight trick) ----
    h2 = jax.nn.relu(dot(self_state, w("w23as")) + dot(weighted, w("w23aw")) + w("b23a"))
    x2 = dot(h2, w("w23b")) + w("b23b")                     # (TB, 128)

    # ---- in-kernel "sort humans by distance" (stable, descending) -> int32 rank ----
    s5, s6 = state[:, :, 5], state[:, :, 6]
    s7, s8 = state[:, :, 7], state[:, :, 8]
    cur = jnp.sqrt(s5 * s5 + s6 * s6)
    fhx = TIME_STEP * s7 + s5
    fhy = TIME_STEP * s8 + s6
    nxt = jnp.sqrt(fhx * fhx + fhy * fhy)
    d = CURRENT_DIST_WEIGHT * cur + (1.0 - CURRENT_DIST_WEIGHT) * nxt
    # original: `if np.all(state[5:7]) == 0 -> inf` (i.e. any of s5, s6 is zero)
    d = jnp.where((s5 == 0.0) | (s6 == 0.0), jnp.inf, d)    # (TB, N)
    dj = d[:, :, None]
    dk = d[:, None, :]
    j_idx = jax.lax.broadcasted_iota(jnp.int32, (TB, N, N), 1)
    k_idx = jax.lax.broadcasted_iota(jnp.int32, (TB, N, N), 2)
    cnt = (dk > dj).astype(jnp.int32) + ((dk == dj) & (k_idx < j_idx)).astype(jnp.int32)
    rank = jnp.sum(cnt, axis=-1)                            # int32 (TB, N): sorted position

    # ---- LSTM: gather + input-gate matmul hoisted OUT of the recurrence ----
    state_h = state[:, :, S:]                               # (TB, N, F-S)
    picks = []
    for t in range(N):                                      # one-hot gather, off the h/c chain
        sel = rank == t                                     # int32 compare (exact)
        picks.append(jnp.sum(jnp.where(sel[:, :, None], state_h, 0.0), axis=1))  # (TB, F-S)
    xh_sorted = jnp.concatenate(picks, axis=0)              # (N*TB, F-S), step-major
    pre_gates = dot(xh_sorted, w("wihf")) + w("blstm")      # (N*TB, 128) - ONE dot, all steps

    whhf = w("whhf")
    hcur = jnp.zeros((TB, H), f32)
    ccur = jnp.zeros((TB, H), f32)
    H3 = 3 * H
    for t in range(N):                                      # N is static -> unrolled
        gates = pre_gates[t * TB:(t + 1) * TB, :] + dot(hcur, whhf)   # (TB, 128)
        sio = jax.nn.sigmoid(gates[:, :H3])                 # [i|f|o] one contiguous 96-lane slice
        g_g = jnp.tanh(gates[:, H3:])                       # g, trailing 32 lanes
        i_g, f_g, o_g = sio[:, :H], sio[:, H:2 * H], sio[:, 2 * H:H3]
        ccur = f_g * ccur + i_g * g_g
        hcur = o_g * jnp.tanh(ccur)

    # ---- mlp11 on cat([self_state, hn]) ----
    h1 = jax.nn.relu(dot(self_state, w("w11as")) + dot(hcur, w("w11ah")) + w("b11a"))
    x1 = dot(h1, w("w11b")) + w("b11b")                     # (TB, 128)

    # ---- mlp_final2 on cat([x1, x2]) ----
    hf = jax.nn.relu(dot(x1, w("wfa1")) + dot(x2, w("wfa2")) + w("bfa"))
    hf = jax.nn.relu(dot(hf, w("wfb")) + w("bfb"))
    # lane-dense (TB, 128) store: wfc/bfc columns >= N_ACTIONS are zero in the slab
    out_ref[...] = dot(hf, w("wfc")) + w("bfc")
    # TODO(synk): pfrl.action_value.DiscreteActionValue wrapper has no Pallas equivalent;
    # the kernel returns the raw Q-values tensor.


# -------------------------------- wrapper ------------------------------------
def _choose_tb(B):
    """Batch rows per grid step: big (<=128, multiple-of-8) blocks to fill the MXU M
    dim, with >=2 grid steps whenever possible so v7x can shard the 'parallel' batch
    axis across its two TensorCores."""
    if B <= 8 or B % 8 != 0:
        return B                                  # tiny / odd batch: single block
    tb = min(128, B)
    tb -= tb % 8
    if B // tb < 2:                               # prefer >=2 steps (v7x megacore)
        tb = max(8, (B // 2) - ((B // 2) % 8))
    while B % tb != 0:
        tb -= 8
    return max(tb, 8)


def esa_forward(state, slab):
    B, N, F = state.shape
    state_flat = state.reshape(B * N, F)          # layout change done in XLA, not in-kernel
    tb = _choose_tb(B)
    out = pl.pallas_call(
        _esa_kernel,
        out_shape=jax.ShapeDtypeStruct((B, LANES), jnp.float32),
        grid=(B // tb,),
        in_specs=[
            pl.BlockSpec((tb, N, F), lambda i: (i, 0, 0)),
            pl.BlockSpec((tb * N, F), lambda i: (i, 0)),
            # weight slab: untiled, single VMEM-resident copy (no double buffering)
            pl.BlockSpec(memory_space=pltpu.MemorySpace.VMEM),
        ],
        out_specs=pl.BlockSpec((tb, LANES), lambda i: (i, 0)),
        compiler_params=pltpu.CompilerParams(dimension_semantics=("parallel",)),
    )(state, state_flat, slab)
    return out[:, :N_ACTIONS]


# ---------------------------- parameter init ---------------------------------
def _linear_init(key, fan_in, fan_out):
    k1, k2 = jax.random.split(key)
    bound = 1.0 / float(fan_in) ** 0.5
    w_ = jax.random.uniform(k1, (fan_in, fan_out), jnp.float32, -bound, bound)
    b_ = jax.random.uniform(k2, (1, fan_out), jnp.float32, -bound, bound)
    return w_, b_


def init_params(key):
    keys = jax.random.split(key, 20)
    p = []
    p += _linear_init(keys[0], INPUT_DIM, MLP21_DIMS[0])
    p += _linear_init(keys[1], MLP21_DIMS[0], MLP21_DIMS[1])
    att_in = MLP21_DIMS[-1] * 2 if WITH_GLOBAL_STATE else MLP21_DIMS[-1]
    p += _linear_init(keys[2], att_in, ATTENTION_DIMS[0])
    p += _linear_init(keys[3], ATTENTION_DIMS[0], ATTENTION_DIMS[1])
    p += _linear_init(keys[4], ATTENTION_DIMS[1], ATTENTION_DIMS[2])
    p += _linear_init(keys[5], MLP21_DIMS[-1] + SELF_STATE_DIM, MLP23_DIMS[0])
    p += _linear_init(keys[6], MLP23_DIMS[0], MLP23_DIMS[1])
    lstm_in = INPUT_DIM - SELF_STATE_DIM
    bound = 1.0 / float(LSTM_HIDDEN) ** 0.5
    wih = jax.random.uniform(keys[7], (4, lstm_in, LSTM_HIDDEN), jnp.float32, -bound, bound)
    whh = jax.random.uniform(keys[8], (4, LSTM_HIDDEN, LSTM_HIDDEN), jnp.float32, -bound, bound)
    bih = jax.random.uniform(keys[9], (4, 1, LSTM_HIDDEN), jnp.float32, -bound, bound)
    bhh = jax.random.uniform(keys[10], (4, 1, LSTM_HIDDEN), jnp.float32, -bound, bound)
    p += [wih, whh, bih, bhh]
    p += _linear_init(keys[11], SELF_STATE_DIM + LSTM_HIDDEN, MLP11_DIMS[0])
    p += _linear_init(keys[12], MLP11_DIMS[0], MLP11_DIMS[1])
    p += _linear_init(keys[13], MLP11_DIMS[-1] + MLP23_DIMS[-1], MLP_FINAL_DIMS[0])
    p += _linear_init(keys[14], MLP_FINAL_DIMS[0], MLP_FINAL_DIMS[1])
    p += _linear_init(keys[15], MLP_FINAL_DIMS[1], N_ACTIONS)
    return tuple(p)


# --------------------------- pure-JAX reference -------------------------------
def sort_states(state):
    s5, s6 = state[..., 5], state[..., 6]
    s7, s8 = state[..., 7], state[..., 8]
    cur = jnp.sqrt(s5 ** 2 + s6 ** 2)
    fhx = TIME_STEP * s7 + s5
    fhy = TIME_STEP * s8 + s6
    nxt = jnp.sqrt(fhx ** 2 + fhy ** 2)
    d = CURRENT_DIST_WEIGHT * cur + (1.0 - CURRENT_DIST_WEIGHT) * nxt
    d = jnp.where((s5 == 0) | (s6 == 0), jnp.inf, d)
    order = jnp.argsort(-d, axis=1, stable=True)            # descending, stable
    return jnp.take_along_axis(state, order[:, :, None], axis=1)


def esa_reference(state, params, matmul_dtype=jnp.float32):
    (w21a, b21a, w21b, b21b, wa1, ba1, wa2, ba2, wa3, ba3,
     w23a, b23a, w23b, b23b, wih, whh, bih, bhh,
     w11a, b11a, w11b, b11b, wfa, bfa, wfb, bfb, wfc, bfc) = params

    def mm(a_, b_):
        return jnp.dot(a_.astype(matmul_dtype), b_.astype(matmul_dtype),
                       preferred_element_type=jnp.float32)

    B, N, F = state.shape
    S, H, D21 = SELF_STATE_DIM, LSTM_HIDDEN, MLP21_DIMS[-1]
    x = state.reshape(B * N, F)
    e = jax.nn.relu(mm(jax.nn.relu(mm(x, w21a) + b21a), w21b) + b21b)
    feat = e.reshape(B, N, D21)
    g = jnp.broadcast_to(jnp.mean(feat, axis=1, keepdims=True), (B, N, D21)).reshape(B * N, D21)
    att_in = jnp.concatenate([e, g], axis=1)
    a = jax.nn.relu(mm(att_in, wa1) + ba1)
    a = jax.nn.relu(mm(a, wa2) + ba2)
    scores = (mm(a, wa3) + ba3).reshape(B, N)
    weights = jax.nn.softmax(scores, axis=1)[:, :, None]
    weighted = jnp.sum(weights * feat, axis=1)
    self_state = state[:, 0, :S]
    x2 = mm(jax.nn.relu(mm(jnp.concatenate([self_state, weighted], 1), w23a) + b23a), w23b) + b23b
    sh = sort_states(state)[:, :, S:]
    hcur = jnp.zeros((B, H), jnp.float32)
    ccur = jnp.zeros((B, H), jnp.float32)
    bias = bih + bhh
    for t in range(N):
        xt = sh[:, t, :]
        gate = [mm(xt, wih[k]) + mm(hcur, whh[k]) + bias[k] for k in range(4)]
        i_g, f_g = jax.nn.sigmoid(gate[0]), jax.nn.sigmoid(gate[1])
        g_g, o_g = jnp.tanh(gate[2]), jax.nn.sigmoid(gate[3])
        ccur = f_g * ccur + i_g * g_g
        hcur = o_g * jnp.tanh(ccur)
    x1 = mm(jax.nn.relu(mm(jnp.concatenate([self_state, hcur], 1), w11a) + b11a), w11b) + b11b
    xf = jnp.concatenate([x1, x2], axis=1)
    hf = jax.nn.relu(mm(xf, wfa) + bfa)
    hf = jax.nn.relu(mm(hf, wfb) + bfb)
    return mm(hf, wfc) + bfc


if __name__ == "__main__":
    key = jax.random.PRNGKey(0)
    pkey, skey = jax.random.split(key)
    raw_params = init_params(pkey)
    slab = pack_params(raw_params)

    B, N_HUMANS = 2, 5
    state = jax.random.normal(skey, (B, N_HUMANS, INPUT_DIM), jnp.float32)
    out = jax.block_until_ready(esa_forward(state, slab))
    assert out.shape == (B, N_ACTIONS), out.shape

    # tight check vs a reference using the same bf16 matmul-operand rounding
    ref_bf16 = esa_reference(state, raw_params, matmul_dtype=jnp.bfloat16)
    assert bool(jnp.allclose(out, ref_bf16, atol=5e-3, rtol=5e-3)), (out, ref_bf16)
    # sanity check vs the exact f32 reference (looser: deliberate bf16 MXU operands)
    with jax.default_matmul_precision("highest"):
        ref_f32 = esa_reference(state, raw_params)
    assert bool(jnp.allclose(out, ref_f32, atol=1e-1, rtol=1e-1)), (out, ref_f32)

    # also exercise the blocked / multi-grid-step batch path (tb=8, grid=(2,))
    B2 = 16
    state2 = jax.random.normal(jax.random.PRNGKey(1), (B2, N_HUMANS, INPUT_DIM), jnp.float32)
    out2 = jax.block_until_ready(esa_forward(state2, slab))
    ref2 = esa_reference(state2, raw_params, matmul_dtype=jnp.bfloat16)
    assert out2.shape == (B2, N_ACTIONS), out2.shape
    assert bool(jnp.allclose(out2, ref2, atol=5e-3, rtol=5e-3)), (out2, ref2)

    print("KERNEL_OK")
</pallas_src>

<mosaic_0001>
module attributes {stable_mosaic.version = 11 : i64} {
  func.func @_esa_kernel(%arg0: i32, %arg1: memref<2x5x12xf32, #tpu.memory_space<vmem>>, %arg2: memref<10x12xf32, #tpu.memory_space<vmem>>, %arg3: memref<1624x128xf32, #tpu.memory_space<vmem>>, %arg4: memref<2x128xf32, #tpu.memory_space<vmem>>) attributes {dimension_semantics = [#tpu.dimension_semantics<parallel>], iteration_bounds = array<i64: 1>, scalar_prefetch = 0 : i64, scratch_operands = 0 : i64, tpu.core_type = #tpu.core_type<tc>, window_params = [{transform_indices = @transform_0, window_bounds = array<i64: 2, 5, 12>}, {transform_indices = @transform_1, window_bounds = array<i64: 10, 12>}, {pipeline_mode = #tpu.pipeline_mode<synchronous>, transform_indices = @transform_2, window_bounds = array<i64: 1624, 128>}, {transform_indices = @transform_3, window_bounds = array<i64: 2, 128>}]} {
    %c0 = arith.constant 0 : index
    %c0_0 = arith.constant 0 : index
    %c0_1 = arith.constant 0 : index
    %0 = vector.load %arg1[%c0, %c0_0, %c0_1] : memref<2x5x12xf32, #tpu.memory_space<vmem>>, vector<2x5x12xf32>
    %c0_2 = arith.constant 0 : index
    %c0_3 = arith.constant 0 : index
    %1 = vector.load %arg2[%c0_2, %c0_3] : memref<10x12xf32, #tpu.memory_space<vmem>>, vector<10x12xf32>
    %c0_4 = arith.constant 0 : index
    %c0_5 = arith.constant 0 : index
    %2 = vector.load %arg3[%c0_4, %c0_5] : memref<1624x128xf32, #tpu.memory_space<vmem>>, vector<12x128xf32>
    %3 = arith.truncf %1 : vector<10x12xf32> to vector<10x12xbf16>
    %4 = arith.truncf %2 : vector<12x128xf32> to vector<12x128xbf16>
    %cst = arith.constant dense<0.000000e+00> : vector<10x128xf32>
    %5 = tpu.matmul %3, %4, %cst {dimension_numbers = #tpu.dot_dimension_numbers<[1], [0], [0], [1], [0, 0, 1, 1], [], []>} : vector<10x12xbf16>, vector<12x128xbf16>, vector<10x128xf32> -> vector<10x128xf32>
    %c16 = arith.constant 16 : index
    %c0_6 = arith.constant 0 : index
    %6 = vector.load %arg3[%c16, %c0_6] : memref<1624x128xf32, #tpu.memory_space<vmem>>, vector<1x128xf32>
    %7 = vector.broadcast %6 : vector<1x128xf32> to vector<10x128xf32>
    %8 = arith.addf %5, %7 : vector<10x128xf32>
    %cst_7 = arith.constant 0.000000e+00 : f32
    %9 = vector.broadcast %cst_7 : f32 to vector<10x128xf32>
    %10 = arith.maximumf %8, %9 : vector<10x128xf32>
    %c24 = arith.constant 24 : index
    %c0_8 = arith.constant 0 : index
    %11 = vector.load %arg3[%c24, %c0_8] : memref<1624x128xf32, #tpu.memory_space<vmem>>, vector<128x128xf32>
    %12 = arith.truncf %10 : vector<10x128xf32> to vector<10x128xbf16>
    %13 = arith.truncf %11 : vector<128x128xf32> to vector<128x128xbf16>
    %cst_9 = arith.constant dense<0.000000e+00> : vector<10x128xf32>
    %14 = tpu.matmul %12, %13, %cst_9 {dimension_numbers = #tpu.dot_dimension_numbers<[1], [0], [0], [1], [0, 0, 1, 1], [], []>} : vector<10x128xbf16>, vector<128x128xbf16>, vector<10x128xf32> -> vector<10x128xf32>
    %c152 = arith.constant 152 : index
    %c0_10 = arith.constant 0 : index
    %15 = vector.load %arg3[%c152, %c0_10] : memref<1624x128xf32, #tpu.memory_space<vmem>>, vector<1x128xf32>
    %16 = vector.broadcast %15 : vector<1x128xf32> to vector<10x128xf32>
    %17 = arith.addf %14, %16 : vector<10x128xf32>
    %cst_11 = arith.constant 0.000000e+00 : f32
    %18 = vector.broadcast %cst_11 : f32 to vector<10x128xf32>
    %19 = arith.maximumf %17, %18 : vector<10x128xf32>
    %20 = vector.shape_cast %19 : vector<10x128xf32> to vector<2x5x128xf32>
    %cst_12 = arith.constant dense<0.000000e+00> : vector<2x128xf32>
    %21 = vector.multi_reduction <add>, %20, %cst_12 [1] : vector<2x5x128xf32> to vector<2x128xf32>
    %22 = vector.shape_cast %21 : vector<2x128xf32> to vector<2x1x128xf32>
    %cst_13 = arith.constant 5.000000e+00 : f32
    %23 = vector.broadcast %cst_13 : f32 to vector<2x1x128xf32>
    %24 = arith.divf %22, %23 : vector<2x1x128xf32>
    %25 = vector.shape_cast %24 : vector<2x1x128xf32> to vector<2x1x128xf32>
    %26 = vector.broadcast %25 : vector<2x1x128xf32> to vector<2x5x128xf32>
    %27 = vector.shape_cast %26 : vector<2x5x128xf32> to vector<10x128xf32>
    %c160 = arith.constant 160 : index
    %c0_14 = arith.constant 0 : index
    %28 = vector.load %arg3[%c160, %c0_14] : memref<1624x128xf32, #tpu.memory_space<vmem>>, vector<128x128xf32>
    %29 = arith.truncf %19 : vector<10x128xf32> to vector<10x128xbf16>
    %30 = arith.truncf %28 : vector<128x128xf32> to vector<128x128xbf16>
    %cst_15 = arith.constant dense<0.000000e+00> : vector<10x128xf32>
    %31 = tpu.matmul %29, %30, %cst_15 {dimension_numbers = #tpu.dot_dimension_numbers<[1], [0], [0], [1], [0, 0, 1, 1], [], []>} : vector<10x128xbf16>, vector<128x128xbf16>, vector<10x128xf32> -> vector<10x128xf32>
    %c288 = arith.constant 288 : index
    %c0_16 = arith.constant 0 : index
    %32 = vector.load %arg3[%c288, %c0_16] : memref<1624x128xf32, #tpu.memory_space<vmem>>, vector<128x128xf32>
    %33 = arith.truncf %27 : vector<10x128xf32> to vector<10x128xbf16>
    %34 = arith.truncf %32 : vector<128x128xf32> to vector<128x128xbf16>
    %cst_17 = arith.constant dense<0.000000e+00> : vector<10x128xf32>
    %35 = tpu.matmul %33, %34, %cst_17 {dimension_numbers = #tpu.dot_dimension_numbers<[1], [0], [0], [1], [0, 0, 1, 1], [], []>} : vector<10x128xbf16>, vector<128x128xbf16>, vector<10x128xf32> -> vector<10x128xf32>
    %36 = arith.addf %31, %35 : vector<10x128xf32>
    %c416 = arith.constant 416 : index
    %c0_18 = arith.constant 0 : index
    %37 = vector.load %arg3[%c416, %c0_18] : memref<1624x128xf32, #tpu.memory_space<vmem>>, vector<1x128xf32>
    %38 = vector.broadcast %37 : vector<1x128xf32> to vector<10x128xf32>
    %39 = arith.addf %36, %38 : vector<10x128xf32>
    %cst_19 = arith.constant 0.000000e+00 : f32
    %40 = vector.broadcast %cst_19 : f32 to vector<10x128xf32>
    %41 = arith.maximumf %39, %40 : vector<10x128xf32>
    %c424 = arith.constant 424 : index
    %c0_20 = arith.constant 0 : index
    %42 = vector.load %arg3[%c424, %c0_20] : memref<1624x128xf32, #tpu.memory_space<vmem>>, vector<128x128xf32>
    %43 = arith.truncf %41 : vector<10x128xf32> to vector<10x128xbf16>
    %44 = arith.truncf %42 : vector<128x128xf32> to vector<128x128xbf16>
    %cst_21 = arith.constant dense<0.000000e+00> : vector<10x128xf32>
    %45 = tpu.matmul %43, %44, %cst_21 {dimension_numbers = #tpu.dot_dimension_numbers<[1], [0], [0], [1], [0, 0, 1, 1], [], []>} : vector<10x128xbf16>, vector<128x128xbf16>, vector<10x128xf32> -> vector<10x128xf32>
    %c552 = arith.constant 552 : index
    %c0_22 = arith.constant 0 : index
    %46 = vector.load %arg3[%c552, %c0_22] : memref<1624x128xf32, #tpu.memory_space<vmem>>, vector<1x128xf32>
    %47 = vector.broadcast %46 : vector<1x128xf32> to vector<10x128xf32>
    %48 = arith.addf %45, %47 : vector<10x128xf32>
    %cst_23 = arith.constant 0.000000e+00 : f32
    %49 = vector.broadcast %cst_23 : f32 to vector<10x128xf32>
    %50 = arith.maximumf %48, %49 : vector<10x128xf32>
    %51 = vector.shape_cast %50 : vector<10x128xf32> to vector<2x5x128xf32>
    %c560 = arith.constant 560 : index
    %c0_24 = arith.constant 0 : index
    %52 = vector.load %arg3[%c560, %c0_24] : memref<1624x128xf32, #tpu.memory_space<vmem>>, vector<1x128xf32>
    %53 = vector.shape_cast %52 : vector<1x128xf32> to vector<1x1x128xf32>
    %54 = vector.broadcast %53 : vector<1x1x128xf32> to vector<2x5x128xf32>
    %55 = arith.mulf %51, %54 : vector<2x5x128xf32>
    %cst_25 = arith.constant dense<0.000000e+00> : vector<2x5xf32>
    %56 = vector.multi_reduction <add>, %55, %cst_25 [2] : vector<2x5x128xf32> to vector<2x5xf32>
    %c568 = arith.constant 568 : index
    %c0_26 = arith.constant 0 : index
    %57 = vector.load %arg3[%c568, %c0_26] : memref<1624x128xf32, #tpu.memory_space<vmem>>, vector<1x1xf32>
    %58 = vector.broadcast %57 : vector<1x1xf32> to vector<2x5xf32>
    %59 = arith.addf %56, %58 : vector<2x5xf32>
    %cst_27 = arith.constant dense<0xFF800000> : vector<2xf32>
    %60 = vector.multi_reduction <maximumf>, %59, %cst_27 [1] : vector<2x5xf32> to vector<2xf32>
    %61 = vector.shape_cast %60 : vector<2xf32> to vector<2x1xf32>
    %62 = vector.broadcast %61 : vector<2x1xf32> to vector<2x5xf32>
    %63 = arith.subf %59, %62 : vector<2x5xf32>
    %64 = math.exp %63 : vector<2x5xf32>
    %cst_28 = arith.constant dense<0.000000e+00> : vector<2xf32>
    %65 = vector.multi_reduction <add>, %64, %cst_28 [1] : vector<2x5xf32> to vector<2xf32>
    %66 = vector.shape_cast %65 : vector<2xf32> to vector<2x1xf32>
    %67 = vector.broadcast %66 : vector<2x1xf32> to vector<2x5xf32>
    %68 = arith.divf %64, %67 : vector<2x5xf32>
    %69 = vector.shape_cast %68 : vector<2x5xf32> to vector<2x5x1xf32>
    %70 = vector.broadcast %69 : vector<2x5x1xf32> to vector<2x5x128xf32>
    %71 = arith.mulf %70, %20 : vector<2x5x128xf32>
    %cst_29 = arith.constant dense<0.000000e+00> : vector<2x128xf32>
    %72 = vector.multi_reduction <add>, %71, %cst_29 [1] : vector<2x5x128xf32> to vector<2x128xf32>
    %73 = vector.extract_strided_slice %0 {offsets = [0, 0, 0], sizes = [2, 1, 5], strides = [1, 1, 1]} : vector<2x5x12xf32> to vector<2x1x5xf32>
    %74 = vector.shape_cast %73 : vector<2x1x5xf32> to vector<2x5xf32>
    %c576 = arith.constant 576 : index
    %c0_30 = arith.constant 0 : index
    %75 = vector.load %arg3[%c576, %c0_30] : memref<1624x128xf32, #tpu.memory_space<vmem>>, vector<5x128xf32>
    %76 = arith.truncf %74 : vector<2x5xf32> to vector<2x5xbf16>
    %77 = arith.truncf %75 : vector<5x128xf32> to vector<5x128xbf16>
    %cst_31 = arith.constant dense<0.000000e+00> : vector<2x128xf32>
    %78 = tpu.matmul %76, %77, %cst_31 {dimension_numbers = #tpu.dot_dimension_numbers<[1], [0], [0], [1], [0, 0, 1, 1], [], []>} : vector<2x5xbf16>, vector<5x128xbf16>, vector<2x128xf32> -> vector<2x128xf32>
    %c584 = arith.constant 584 : index
    %c0_32 = arith.constant 0 : index
    %79 = vector.load %arg3[%c584, %c0_32] : memref<1624x128xf32, #tpu.memory_space<vmem>>, vector<128x128xf32>
    %80 = arith.truncf %72 : vector<2x128xf32> to vector<2x128xbf16>
    %81 = arith.truncf %79 : vector<128x128xf32> to vector<128x128xbf16>
    %cst_33 = arith.constant dense<0.000000e+00> : vector<2x128xf32>
    %82 = tpu.matmul %80, %81, %cst_33 {dimension_numbers = #tpu.dot_dimension_numbers<[1], [0], [0], [1], [0, 0, 1, 1], [], []>} : vector<2x128xbf16>, vector<128x128xbf16>, vector<2x128xf32> -> vector<2x128xf32>
    %83 = arith.addf %78, %82 : vector<2x128xf32>
    %c712 = arith.constant 712 : index
    %c0_34 = arith.constant 0 : index
    %84 = vector.load %arg3[%c712, %c0_34] : memref<1624x128xf32, #tpu.memory_space<vmem>>, vector<1x128xf32>
    %85 = vector.broadcast %84 : vector<1x128xf32> to vector<2x128xf32>
    %86 = arith.addf %83, %85 : vector<2x128xf32>
    %cst_35 = arith.constant 0.000000e+00 : f32
    %87 = vector.broadcast %cst_35 : f32 to vector<2x128xf32>
    %88 = arith.maximumf %86, %87 : vector<2x128xf32>
    %c720 = arith.constant 720 : index
    %c0_36 = arith.constant 0 : index
    %89 = vector.load %arg3[%c720, %c0_36] : memref<1624x128xf32, #tpu.memory_space<vmem>>, vector<128x128xf32>
    %90 = arith.truncf %88 : vector<2x128xf32> to vector<2x128xbf16>
    %91 = arith.truncf %89 : vector<128x128xf32> to vector<128x128xbf16>
    %cst_37 = arith.constant dense<0.000000e+00> : vector<2x128xf32>
    %92 = tpu.matmul %90, %91, %cst_37 {dimension_numbers = #tpu.dot_dimension_numbers<[1], [0], [0], [1], [0, 0, 1, 1], [], []>} : vector<2x128xbf16>, vector<128x128xbf16>, vector<2x128xf32> -> vector<2x128xf32>
    %c848 = arith.constant 848 : index
    %c0_38 = arith.constant 0 : index
    %93 = vector.load %arg3[%c848, %c0_38] : memref<1624x128xf32, #tpu.memory_space<vmem>>, vector<1x128xf32>
    %94 = vector.broadcast %93 : vector<1x128xf32> to vector<2x128xf32>
    %95 = arith.addf %92, %94 : vector<2x128xf32>
    %96 = vector.extract_strided_slice %0 {offsets = [0, 0, 5], sizes = [2, 5, 1], strides = [1, 1, 1]} : vector<2x5x12xf32> to vector<2x5x1xf32>
    %97 = vector.shape_cast %96 : vector<2x5x1xf32> to vector<2x5xf32>
    %98 = vector.extract_strided_slice %0 {offsets = [0, 0, 6], sizes = [2, 5, 1], strides = [1, 1, 1]} : vector<2x5x12xf32> to vector<2x5x1xf32>
    %99 = vector.shape_cast %98 : vector<2x5x1xf32> to vector<2x5xf32>
    %100 = vector.extract_strided_slice %0 {offsets = [0, 0, 7], sizes = [2, 5, 1], strides = [1, 1, 1]} : vector<2x5x12xf32> to vector<2x5x1xf32>
    %101 = vector.shape_cast %100 : vector<2x5x1xf32> to vector<2x5xf32>
    %102 = vector.extract_strided_slice %0 {offsets = [0, 0, 8], sizes = [2, 5, 1], strides = [1, 1, 1]} : vector<2x5x12xf32> to vector<2x5x1xf32>
    %103 = vector.shape_cast %102 : vector<2x5x1xf32> to vector<2x5xf32>
    %104 = arith.mulf %97, %97 : vector<2x5xf32>
    %105 = arith.mulf %99, %99 : vector<2x5xf32>
    %106 = arith.addf %104, %105 : vector<2x5xf32>
    %107 = math.sqrt %106 : vector<2x5xf32>
    %cst_39 = arith.constant 2.500000e-01 : f32
    %108 = vector.broadcast %cst_39 : f32 to vector<2x5xf32>
    %109 = arith.mulf %108, %101 : vector<2x5xf32>
    %110 = arith.addf %109, %97 : vector<2x5xf32>
    %cst_40 = arith.constant 2.500000e-01 : f32
    %111 = vector.broadcast %cst_40 : f32 to vector<2x5xf32>
    %112 = arith.mulf %111, %103 : vector<2x5xf32>
    %113 = arith.addf %112, %99 : vector<2x5xf32>
    %114 = arith.mulf %110, %110 : vector<2x5xf32>
    %115 = arith.mulf %113, %113 : vector<2x5xf32>
    %116 = arith.addf %114, %115 : vector<2x5xf32>
    %117 = math.sqrt %116 : vector<2x5xf32>
    %cst_41 = arith.constant 8.000000e-01 : f32
    %118 = vector.broadcast %cst_41 : f32 to vector<2x5xf32>
    %119 = arith.mulf %118, %107 : vector<2x5xf32>
    %cst_42 = arith.constant 2.000000e-01 : f32
    %120 = vector.broadcast %cst_42 : f32 to vector<2x5xf32>
    %121 = arith.mulf %120, %117 : vector<2x5xf32>
    %122 = arith.addf %119, %121 : vector<2x5xf32>
    %cst_43 = arith.constant 0.000000e+00 : f32
    %123 = vector.broadcast %cst_43 : f32 to vector<2x5xf32>
    %124 = arith.cmpf oeq, %97, %123 : vector<2x5xf32>
    %cst_44 = arith.constant 0.000000e+00 : f32
    %125 = vector.broadcast %cst_44 : f32 to vector<2x5xf32>
    %126 = arith.cmpf oeq, %99, %125 : vector<2x5xf32>
    %127 = arith.ori %124, %126 : vector<2x5xi1>
    %cst_45 = arith.constant 0x7F800000 : f32
    %128 = vector.broadcast %cst_45 : f32 to vector<2x5xf32>
    %129 = arith.select %127, %128, %122 : vector<2x5xi1>, vector<2x5xf32>
    %130 = vector.shape_cast %129 : vector<2x5xf32> to vector<2x5x1xf32>
    %131 = vector.shape_cast %129 : vector<2x5xf32> to vector<2x1x5xf32>
    %132 = tpu.iota {dimensions = array<i32: 1>} : vector<2x5x5xi32>
    %133 = tpu.iota {dimensions = array<i32: 2>} : vector<2x5x5xi32>
    %134 = vector.broadcast %131 : vector<2x1x5xf32> to vector<2x5x5xf32>
    %135 = vector.broadcast %130 : vector<2x5x1xf32> to vector<2x5x5xf32>
    %136 = arith.cmpf ogt, %134, %135 : vector<2x5x5xf32>
    %137 = arith.extui %136 : vector<2x5x5xi1> to vector<2x5x5xi32>
    %138 = vector.broadcast %131 : vector<2x1x5xf32> to vector<2x5x5xf32>
    %139 = vector.broadcast %130 : vector<2x5x1xf32> to vector<2x5x5xf32>
    %140 = arith.cmpf oeq, %138, %139 : vector<2x5x5xf32>
    %141 = arith.cmpi slt, %133, %132 : vector<2x5x5xi32>
    %142 = arith.andi %140, %141 : vector<2x5x5xi1>
    %143 = arith.extui %142 : vector<2x5x5xi1> to vector<2x5x5xi32>
    %144 = arith.addi %137, %143 : vector<2x5x5xi32>
    %cst_46 = arith.constant dense<0> : vector<2x5xi32>
    %145 = vector.multi_reduction <add>, %144, %cst_46 [2] : vector<2x5x5xi32> to vector<2x5xi32>
    %146 = vector.extract_strided_slice %0 {offsets = [0, 0, 5], sizes = [2, 5, 7], strides = [1, 1, 1]} : vector<2x5x12xf32> to vector<2x5x7xf32>
    %c0_i32 = arith.constant 0 : i32
    %147 = vector.broadcast %c0_i32 : i32 to vector<2x5xi32>
    %148 = arith.cmpi eq, %145, %147 : vector<2x5xi32>
    %149 = vector.shape_cast %148 : vector<2x5xi1> to vector<2x5x1xi1>
    %cst_47 = arith.constant 0.000000e+00 : f32
    %150 = vector.shape_cast %149 : vector<2x5x1xi1> to vector<2x5x1xi1>
    %151 = vector.broadcast %150 : vector<2x5x1xi1> to vector<2x5x7xi1>
    %152 = vector.broadcast %cst_47 : f32 to vector<2x5x7xf32>
    %153 = arith.select %151, %146, %152 : vector<2x5x7xi1>, vector<2x5x7xf32>
    %cst_48 = arith.constant dense<0.000000e+00> : vector<2x7xf32>
    %154 = vector.multi_reduction <add>, %153, %cst_48 [1] : vector<2x5x7xf32> to vector<2x7xf32>
    %c1_i32 = arith.constant 1 : i32
    %155 = vector.broadcast %c1_i32 : i32 to vector<2x5xi32>
    %156 = arith.cmpi eq, %145, %155 : vector<2x5xi32>
    %157 = vector.shape_cast %156 : vector<2x5xi1> to vector<2x5x1xi1>
    %cst_49 = arith.constant 0.000000e+00 : f32
    %158 = vector.shape_cast %157 : vector<2x5x1xi1> to vector<2x5x1xi1>
    %159 = vector.broadcast %158 : vector<2x5x1xi1> to vector<2x5x7xi1>
    %160 = vector.broadcast %cst_49 : f32 to vector<2x5x7xf32>
    %161 = arith.select %159, %146, %160 : vector<2x5x7xi1>, vector<2x5x7xf32>
    %cst_50 = arith.constant dense<0.000000e+00> : vector<2x7xf32>
    %162 = vector.multi_reduction <add>, %161, %cst_50 [1] : vector<2x5x7xf32> to vector<2x7xf32>
    %c2_i32 = arith.constant 2 : i32
    %163 = vector.broadcast %c2_i32 : i32 to vector<2x5xi32>
    %164 = arith.cmpi eq, %145, %163 : vector<2x5xi32>
    %165 = vector.shape_cast %164 : vector<2x5xi1> to vector<2x5x1xi1>
    %cst_51 = arith.constant 0.000000e+00 : f32
    %166 = vector.shape_cast %165 : vector<2x5x1xi1> to vector<2x5x1xi1>
    %167 = vector.broadcast %166 : vector<2x5x1xi1> to vector<2x5x7xi1>
    %168 = vector.broadcast %cst_51 : f32 to vector<2x5x7xf32>
    %169 = arith.select %167, %146, %168 : vector<2x5x7xi1>, vector<2x5x7xf32>
    %cst_52 = arith.constant dense<0.000000e+00> : vector<2x7xf32>
    %170 = vector.multi_reduction <add>, %169, %cst_52 [1] : vector<2x5x7xf32> to vector<2x7xf32>
    %c3_i32 = arith.constant 3 : i32
    %171 = vector.broadcast %c3_i32 : i32 to vector<2x5xi32>
    %172 = arith.cmpi eq, %145, %171 : vector<2x5xi32>
    %173 = vector.shape_cast %172 : vector<2x5xi1> to vector<2x5x1xi1>
    %cst_53 = arith.constant 0.000000e+00 : f32
    %174 = vector.shape_cast %173 : vector<2x5x1xi1> to vector<2x5x1xi1>
    %175 = vector.broadcast %174 : vector<2x5x1xi1> to vector<2x5x7xi1>
    %176 = vector.broadcast %cst_53 : f32 to vector<2x5x7xf32>
    %177 = arith.select %175, %146, %176 : vector<2x5x7xi1>, vector<2x5x7xf32>
    %cst_54 = arith.constant dense<0.000000e+00> : vector<2x7xf32>
    %178 = vector.multi_reduction <add>, %177, %cst_54 [1] : vector<2x5x7xf32> to vector<2x7xf32>
    %c4_i32 = arith.constant 4 : i32
    %179 = vector.broadcast %c4_i32 : i32 to vector<2x5xi32>
    %180 = arith.cmpi eq, %145, %179 : vector<2x5xi32>
    %181 = vector.shape_cast %180 : vector<2x5xi1> to vector<2x5x1xi1>
    %cst_55 = arith.constant 0.000000e+00 : f32
    %182 = vector.shape_cast %181 : vector<2x5x1xi1> to vector<2x5x1xi1>
    %183 = vector.broadcast %182 : vector<2x5x1xi1> to vector<2x5x7xi1>
    %184 = vector.broadcast %cst_55 : f32 to vector<2x5x7xf32>
    %185 = arith.select %183, %146, %184 : vector<2x5x7xi1>, vector<2x5x7xf32>
    %cst_56 = arith.constant dense<0.000000e+00> : vector<2x7xf32>
    %186 = vector.multi_reduction <add>, %185, %cst_56 [1] : vector<2x5x7xf32> to vector<2x7xf32>
    %187 = tpu.concatenate %154, %162, %170, %178, %186 in 0 : vector<2x7xf32>, vector<2x7xf32>, vector<2x7xf32>, vector<2x7xf32>, vector<2x7xf32> -> vector<10x7xf32>
    %c856 = arith.constant 856 : index
    %c0_57 = arith.constant 0 : index
    %188 = vector.load %arg3[%c856, %c0_57] : memref<1624x128xf32, #tpu.memory_space<vmem>>, vector<7x128xf32>
    %189 = arith.truncf %187 : vector<10x7xf32> to vector<10x7xbf16>
    %190 = arith.truncf %188 : vector<7x128xf32> to vector<7x128xbf16>
    %cst_58 = arith.constant dense<0.000000e+00> : vector<10x128xf32>
    %191 = tpu.matmul %189, %190, %cst_58 {dimension_numbers = #tpu.dot_dimension_numbers<[1], [0], [0], [1], [0, 0, 1, 1], [], []>} : vector<10x7xbf16>, vector<7x128xbf16>, vector<10x128xf32> -> vector<10x128xf32>
    %c896 = arith.constant 896 : index
    %c0_59 = arith.constant 0 : index
    %192 = vector.load %arg3[%c896, %c0_59] : memref<1624x128xf32, #tpu.memory_space<vmem>>, vector<1x128xf32>
    %193 = vector.broadcast %192 : vector<1x128xf32> to vector<10x128xf32>
    %194 = arith.addf %191, %193 : vector<10x128xf32>
    %c864 = arith.constant 864 : index
    %c0_60 = arith.constant 0 : index
    %195 = vector.load %arg3[%c864, %c0_60] : memref<1624x128xf32, #tpu.memory_space<vmem>>, vector<32x128xf32>
    %cst_61 = arith.constant 0.000000e+00 : f32
    %196 = vector.broadcast %cst_61 : f32 to vector<2x32xf32>
    %cst_62 = arith.constant 0.000000e+00 : f32
    %197 = vector.broadcast %cst_62 : f32 to vector<2x32xf32>
    %198 = vector.extract_strided_slice %194 {offsets = [0, 0], sizes = [2, 128], strides = [1, 1]} : vector<10x128xf32> to vector<2x128xf32>
    %199 = arith.truncf %196 : vector<2x32xf32> to vector<2x32xbf16>
    %200 = arith.truncf %195 : vector<32x128xf32> to vector<32x128xbf16>
    %cst_63 = arith.constant dense<0.000000e+00> : vector<2x128xf32>
    %201 = tpu.matmul %199, %200, %cst_63 {dimension_numbers = #tpu.dot_dimension_numbers<[1], [0], [0], [1], [0, 0, 1, 1], [], []>} : vector<2x32xbf16>, vector<32x128xbf16>, vector<2x128xf32> -> vector<2x128xf32>
    %202 = arith.addf %198, %201 : vector<2x128xf32>
    %203 = vector.extract_strided_slice %202 {offsets = [0, 0], sizes = [2, 96], strides = [1, 1]} : vector<2x128xf32> to vector<2x96xf32>
    %204 = arith.negf %203 : vector<2x96xf32>
    %205 = math.exp %204 : vector<2x96xf32>
    %cst_64 = arith.constant 1.000000e+00 : f32
    %206 = vector.broadcast %cst_64 : f32 to vector<2x96xf32>
    %207 = arith.addf %206, %205 : vector<2x96xf32>
    %208 = arith.divf %206, %207 : vector<2x96xf32>
    %209 = vector.extract_strided_slice %202 {offsets = [0, 96], sizes = [2, 32], strides = [1, 1]} : vector<2x128xf32> to vector<2x32xf32>
    %210 = math.tanh %209 : vector<2x32xf32>
    %211 = vector.extract_strided_slice %208 {offsets = [0, 0], sizes = [2, 32], strides = [1, 1]} : vector<2x96xf32> to vector<2x32xf32>
    %212 = vector.extract_strided_slice %208 {offsets = [0, 32], sizes = [2, 32], strides = [1, 1]} : vector<2x96xf32> to vector<2x32xf32>
    %213 = vector.extract_strided_slice %208 {offsets = [0, 64], sizes = [2, 32], strides = [1, 1]} : vector<2x96xf32> to vector<2x32xf32>
    %214 = arith.mulf %212, %197 : vector<2x32xf32>
    %215 = arith.mulf %211, %210 : vector<2x32xf32>
    %216 = arith.addf %214, %215 : vector<2x32xf32>
    %217 = math.tanh %216 : vector<2x32xf32>
    %218 = arith.mulf %213, %217 : vector<2x32xf32>
    %219 = vector.extract_strided_slice %194 {offsets = [2, 0], sizes = [2, 128], strides = [1, 1]} : vector<10x128xf32> to vector<2x128xf32>
    %220 = arith.truncf %218 : vector<2x32xf32> to vector<2x32xbf16>
    %221 = arith.truncf %195 : vector<32x128xf32> to vector<32x128xbf16>
    %cst_65 = arith.constant dense<0.000000e+00> : vector<2x128xf32>
    %222 = tpu.matmul %220, %221, %cst_65 {dimension_numbers = #tpu.dot_dimension_numbers<[1], [0], [0], [1], [0, 0, 1, 1], [], []>} : vector<2x32xbf16>, vector<32x128xbf16>, vector<2x128xf32> -> vector<2x128xf32>
    %223 = arith.addf %219, %222 : vector<2x128xf32>
    %224 = vector.extract_strided_slice %223 {offsets = [0, 0], sizes = [2, 96], strides = [1, 1]} : vector<2x128xf32> to vector<2x96xf32>
    %225 = arith.negf %224 : vector<2x96xf32>
    %226 = math.exp %225 : vector<2x96xf32>
    %cst_66 = arith.constant 1.000000e+00 : f32
    %227 = vector.broadcast %cst_66 : f32 to vector<2x96xf32>
    %228 = arith.addf %227, %226 : vector<2x96xf32>
    %229 = arith.divf %227, %228 : vector<2x96xf32>
    %230 = vector.extract_strided_slice %223 {offsets = [0, 96], sizes = [2, 32], strides = [1, 1]} : vector<2x128xf32> to vector<2x32xf32>
    %231 = math.tanh %230 : vector<2x32xf32>
    %232 = vector.extract_strided_slice %229 {offsets = [0, 0], sizes = [2, 32], strides = [1, 1]} : vector<2x96xf32> to vector<2x32xf32>
    %233 = vector.extract_strided_slice %229 {offsets = [0, 32], sizes = [2, 32], strides = [1, 1]} : vector<2x96xf32> to vector<2x32xf32>
    %234 = vector.extract_strided_slice %229 {offsets = [0, 64], sizes = [2, 32], strides = [1, 1]} : vector<2x96xf32> to vector<2x32xf32>
    %235 = arith.mulf %233, %216 : vector<2x32xf32>
    %236 = arith.mulf %232, %231 : vector<2x32xf32>
    %237 = arith.addf %235, %236 : vector<2x32xf32>
    %238 = math.tanh %237 : vector<2x32xf32>
    %239 = arith.mulf %234, %238 : vector<2x32xf32>
    %240 = vector.extract_strided_slice %194 {offsets = [4, 0], sizes = [2, 128], strides = [1, 1]} : vector<10x128xf32> to vector<2x128xf32>
    %241 = arith.truncf %239 : vector<2x32xf32> to vector<2x32xbf16>
    %242 = arith.truncf %195 : vector<32x128xf32> to vector<32x128xbf16>
    %cst_67 = arith.constant dense<0.000000e+00> : vector<2x128xf32>
    %243 = tpu.matmul %241, %242, %cst_67 {dimension_numbers = #tpu.dot_dimension_numbers<[1], [0], [0], [1], [0, 0, 1, 1], [], []>} : vector<2x32xbf16>, vector<32x128xbf16>, vector<2x128xf32> -> vector<2x128xf32>
    %244 = arith.addf %240, %243 : vector<2x128xf32>
    %245 = vector.extract_strided_slice %244 {offsets = [0, 0], sizes = [2, 96], strides = [1, 1]} : vector<2x128xf32> to vector<2x96xf32>
    %246 = arith.negf %245 : vector<2x96xf32>
    %247 = math.exp %246 : vector<2x96xf32>
    %cst_68 = arith.constant 1.000000e+00 : f32
    %248 = vector.broadcast %cst_68 : f32 to vector<2x96xf32>
    %249 = arith.addf %248, %247 : vector<2x96xf32>
    %250 = arith.divf %248, %249 : vector<2x96xf32>
    %251 = vector.extract_strided_slice %244 {offsets = [0, 96], sizes = [2, 32], strides = [1, 1]} : vector<2x128xf32> to vector<2x32xf32>
    %252 = math.tanh %251 : vector<2x32xf32>
    %253 = vector.extract_strided_slice %250 {offsets = [0, 0], sizes = [2, 32], strides = [1, 1]} : vector<2x96xf32> to vector<2x32xf32>
    %254 = vector.extract_strided_slice %250 {offsets = [0, 32], sizes = [2, 32], strides = [1, 1]} : vector<2x96xf32> to vector<2x32xf32>
    %255 = vector.extract_strided_slice %250 {offsets = [0, 64], sizes = [2, 32], strides = [1, 1]} : vector<2x96xf32> to vector<2x32xf32>
    %256 = arith.mulf %254, %237 : vector<2x32xf32>
    %257 = arith.mulf %253, %252 : vector<2x32xf32>
    %258 = arith.addf %256, %257 : vector<2x32xf32>
    %259 = math.tanh %258 : vector<2x32xf32>
    %260 = arith.mulf %255, %259 : vector<2x32xf32>
    %261 = vector.extract_strided_slice %194 {offsets = [6, 0], sizes = [2, 128], strides = [1, 1]} : vector<10x128xf32> to vector<2x128xf32>
    %262 = arith.truncf %260 : vector<2x32xf32> to vector<2x32xbf16>
    %263 = arith.truncf %195 : vector<32x128xf32> to vector<32x128xbf16>
    %cst_69 = arith.constant dense<0.000000e+00> : vector<2x128xf32>
    %264 = tpu.matmul %262, %263, %cst_69 {dimension_numbers = #tpu.dot_dimension_numbers<[1], [0], [0], [1], [0, 0, 1, 1], [], []>} : vector<2x32xbf16>, vector<32x128xbf16>, vector<2x128xf32> -> vector<2x128xf32>
    %265 = arith.addf %261, %264 : vector<2x128xf32>
    %266 = vector.extract_strided_slice %265 {offsets = [0, 0], sizes = [2, 96], strides = [1, 1]} : vector<2x128xf32> to vector<2x96xf32>
    %267 = arith.negf %266 : vector<2x96xf32>
    %268 = math.exp %267 : vector<2x96xf32>
    %cst_70 = arith.constant 1.000000e+00 : f32
    %269 = vector.broadcast %cst_70 : f32 to vector<2x96xf32>
    %270 = arith.addf %269, %268 : vector<2x96xf32>
    %271 = arith.divf %269, %270 : vector<2x96xf32>
    %272 = vector.extract_strided_slice %265 {offsets = [0, 96], sizes = [2, 32], strides = [1, 1]} : vector<2x128xf32> to vector<2x32xf32>
    %273 = math.tanh %272 : vector<2x32xf32>
    %274 = vector.extract_strided_slice %271 {offsets = [0, 0], sizes = [2, 32], strides = [1, 1]} : vector<2x96xf32> to vector<2x32xf32>
    %275 = vector.extract_strided_slice %271 {offsets = [0, 32], sizes = [2, 32], strides = [1, 1]} : vector<2x96xf32> to vector<2x32xf32>
    %276 = vector.extract_strided_slice %271 {offsets = [0, 64], sizes = [2, 32], strides = [1, 1]} : vector<2x96xf32> to vector<2x32xf32>
    %277 = arith.mulf %275, %258 : vector<2x32xf32>
    %278 = arith.mulf %274, %273 : vector<2x32xf32>
    %279 = arith.addf %277, %278 : vector<2x32xf32>
    %280 = math.tanh %279 : vector<2x32xf32>
    %281 = arith.mulf %276, %280 : vector<2x32xf32>
    %282 = vector.extract_strided_slice %194 {offsets = [8, 0], sizes = [2, 128], strides = [1, 1]} : vector<10x128xf32> to vector<2x128xf32>
    %283 = arith.truncf %281 : vector<2x32xf32> to vector<2x32xbf16>
    %284 = arith.truncf %195 : vector<32x128xf32> to vector<32x128xbf16>
    %cst_71 = arith.constant dense<0.000000e+00> : vector<2x128xf32>
    %285 = tpu.matmul %283, %284, %cst_71 {dimension_numbers = #tpu.dot_dimension_numbers<[1], [0], [0], [1], [0, 0, 1, 1], [], []>} : vector<2x32xbf16>, vector<32x128xbf16>, vector<2x128xf32> -> vector<2x128xf32>
    %286 = arith.addf %282, %285 : vector<2x128xf32>
    %287 = vector.extract_strided_slice %286 {offsets = [0, 0], sizes = [2, 96], strides = [1, 1]} : vector<2x128xf32> to vector<2x96xf32>
    %288 = arith.negf %287 : vector<2x96xf32>
    %289 = math.exp %288 : vector<2x96xf32>
    %cst_72 = arith.constant 1.000000e+00 : f32
    %290 = vector.broadcast %cst_72 : f32 to vector<2x96xf32>
    %291 = arith.addf %290, %289 : vector<2x96xf32>
    %292 = arith.divf %290, %291 : vector<2x96xf32>
    %293 = vector.extract_strided_slice %286 {offsets = [0, 96], sizes = [2, 32], strides = [1, 1]} : vector<2x128xf32> to vector<2x32xf32>
    %294 = math.tanh %293 : vector<2x32xf32>
    %295 = vector.extract_strided_slice %292 {offsets = [0, 0], sizes = [2, 32], strides = [1, 1]} : vector<2x96xf32> to vector<2x32xf32>
    %296 = vector.extract_strided_slice %292 {offsets = [0, 32], sizes = [2, 32], strides = [1, 1]} : vector<2x96xf32> to vector<2x32xf32>
    %297 = vector.extract_strided_slice %292 {offsets = [0, 64], sizes = [2, 32], strides = [1, 1]} : vector<2x96xf32> to vector<2x32xf32>
    %298 = arith.mulf %296, %279 : vector<2x32xf32>
    %299 = arith.mulf %295, %294 : vector<2x32xf32>
    %300 = arith.addf %298, %299 : vector<2x32xf32>
    %301 = math.tanh %300 : vector<2x32xf32>
    %302 = arith.mulf %297, %301 : vector<2x32xf32>
    %c904 = arith.constant 904 : index
    %c0_73 = arith.constant 0 : index
    %303 = vector.load %arg3[%c904, %c0_73] : memref<1624x128xf32, #tpu.memory_space<vmem>>, vector<5x128xf32>
    %304 = arith.truncf %74 : vector<2x5xf32> to vector<2x5xbf16>
    %305 = arith.truncf %303 : vector<5x128xf32> to vector<5x128xbf16>
    %cst_74 = arith.constant dense<0.000000e+00> : vector<2x128xf32>
    %306 = tpu.matmul %304, %305, %cst_74 {dimension_numbers = #tpu.dot_dimension_numbers<[1], [0], [0], [1], [0, 0, 1, 1], [], []>} : vector<2x5xbf16>, vector<5x128xbf16>, vector<2x128xf32> -> vector<2x128xf32>
    %c912 = arith.constant 912 : index
    %c0_75 = arith.constant 0 : index
    %307 = vector.load %arg3[%c912, %c0_75] : memref<1624x128xf32, #tpu.memory_space<vmem>>, vector<32x128xf32>
    %308 = arith.truncf %302 : vector<2x32xf32> to vector<2x32xbf16>
    %309 = arith.truncf %307 : vector<32x128xf32> to vector<32x128xbf16>
    %cst_76 = arith.constant dense<0.000000e+00> : vector<2x128xf32>
    %310 = tpu.matmul %308, %309, %cst_76 {dimension_numbers = #tpu.dot_dimension_numbers<[1], [0], [0], [1], [0, 0, 1, 1], [], []>} : vector<2x32xbf16>, vector<32x128xbf16>, vector<2x128xf32> -> vector<2x128xf32>
    %311 = arith.addf %306, %310 : vector<2x128xf32>
    %c944 = arith.constant 944 : index
    %c0_77 = arith.constant 0 : index
    %312 = vector.load %arg3[%c944, %c0_77] : memref<1624x128xf32, #tpu.memory_space<vmem>>, vector<1x128xf32>
    %313 = vector.broadcast %312 : vector<1x128xf32> to vector<2x128xf32>
    %314 = arith.addf %311, %313 : vector<2x128xf32>
    %cst_78 = arith.constant 0.000000e+00 : f32
    %315 = vector.broadcast %cst_78 : f32 to vector<2x128xf32>
    %316 = arith.maximumf %314, %315 : vector<2x128xf32>
    %c952 = arith.constant 952 : index
    %c0_79 = arith.constant 0 : index
    %317 = vector.load %arg3[%c952, %c0_79] : memref<1624x128xf32, #tpu.memory_space<vmem>>, vector<128x128xf32>
    %318 = arith.truncf %316 : vector<2x128xf32> to vector<2x128xbf16>
    %319 = arith.truncf %317 : vector<128x128xf32> to vector<128x128xbf16>
    %cst_80 = arith.constant dense<0.000000e+00> : vector<2x128xf32>
    %320 = tpu.matmul %318, %319, %cst_80 {dimension_numbers = #tpu.dot_dimension_numbers<[1], [0], [0], [1], [0, 0, 1, 1], [], []>} : vector<2x128xbf16>, vector<128x128xbf16>, vector<2x128xf32> -> vector<2x128xf32>
    %c1080 = arith.constant 1080 : index
    %c0_81 = arith.constant 0 : index
    %321 = vector.load %arg3[%c1080, %c0_81] : memref<1624x128xf32, #tpu.memory_space<vmem>>, vector<1x128xf32>
    %322 = vector.broadcast %321 : vector<1x128xf32> to vector<2x128xf32>
    %323 = arith.addf %320, %322 : vector<2x128xf32>
    %c1088 = arith.constant 1088 : index
    %c0_82 = arith.constant 0 : index
    %324 = vector.load %arg3[%c1088, %c0_82] : memref<1624x128xf32, #tpu.memory_space<vmem>>, vector<128x128xf32>
    %325 = arith.truncf %323 : vector<2x128xf32> to vector<2x128xbf16>
    %326 = arith.truncf %324 : vector<128x128xf32> to vector<128x128xbf16>
    %cst_83 = arith.constant dense<0.000000e+00> : vector<2x128xf32>
    %327 = tpu.matmul %325, %326, %cst_83 {dimension_numbers = #tpu.dot_dimension_numbers<[1], [0], [0], [1], [0, 0, 1, 1], [], []>} : vector<2x128xbf16>, vector<128x128xbf16>, vector<2x128xf32> -> vector<2x128xf32>
    %c1216 = arith.constant 1216 : index
    %c0_84 = arith.constant 0 : index
    %328 = vector.load %arg3[%c1216, %c0_84] : memref<1624x128xf32, #tpu.memory_space<vmem>>, vector<128x128xf32>
    %329 = arith.truncf %95 : vector<2x128xf32> to vector<2x128xbf16>
    %330 = arith.truncf %328 : vector<128x128xf32> to vector<128x128xbf16>
    %cst_85 = arith.constant dense<0.000000e+00> : vector<2x128xf32>
    %331 = tpu.matmul %329, %330, %cst_85 {dimension_numbers = #tpu.dot_dimension_numbers<[1], [0], [0], [1], [0, 0, 1, 1], [], []>} : vector<2x128xbf16>, vector<128x128xbf16>, vector<2x128xf32> -> vector<2x128xf32>
    %332 = arith.addf %327, %331 : vector<2x128xf32>
    %c1344 = arith.constant 1344 : index
    %c0_86 = arith.constant 0 : index
    %333 = vector.load %arg3[%c1344, %c0_86] : memref<1624x128xf32, #tpu.memory_space<vmem>>, vector<1x128xf32>
    %334 = vector.broadcast %333 : vector<1x128xf32> to vector<2x128xf32>
    %335 = arith.addf %332, %334 : vector<2x128xf32>
    %cst_87 = arith.constant 0.000000e+00 : f32
    %336 = vector.broadcast %cst_87 : f32 to vector<2x128xf32>
    %337 = arith.maximumf %335, %336 : vector<2x128xf32>
    %c1352 = arith.constant 1352 : index
    %c0_88 = arith.constant 0 : index
    %338 = vector.load %arg3[%c1352, %c0_88] : memref<1624x128xf32, #tpu.memory_space<vmem>>, vector<128x128xf32>
    %339 = arith.truncf %337 : vector<2x128xf32> to vector<2x128xbf16>
    %340 = arith.truncf %338 : vector<128x128xf32> to vector<128x128xbf16>
    %cst_89 = arith.constant dense<0.000000e+00> : vector<2x128xf32>
    %341 = tpu.matmul %339, %340, %cst_89 {dimension_numbers = #tpu.dot_dimension_numbers<[1], [0], [0], [1], [0, 0, 1, 1], [], []>} : vector<2x128xbf16>, vector<128x128xbf16>, vector<2x128xf32> -> vector<2x128xf32>
    %c1480 = arith.constant 1480 : index
    %c0_90 = arith.constant 0 : index
    %342 = vector.load %arg3[%c1480, %c0_90] : memref<1624x128xf32, #tpu.memory_space<vmem>>, vector<1x128xf32>
    %343 = vector.broadcast %342 : vector<1x128xf32> to vector<2x128xf32>
    %344 = arith.addf %341, %343 : vector<2x128xf32>
    %cst_91 = arith.constant 0.000000e+00 : f32
    %345 = vector.broadcast %cst_91 : f32 to vector<2x128xf32>
    %346 = arith.maximumf %344, %345 : vector<2x128xf32>
    %c1488 = arith.constant 1488 : index
    %c0_92 = arith.constant 0 : index
    %347 = vector.load %arg3[%c1488, %c0_92] : memref<1624x128xf32, #tpu.memory_space<vmem>>, vector<128x128xf32>
    %348 = arith.truncf %346 : vector<2x128xf32> to vector<2x128xbf16>
    %349 = arith.truncf %347 : vector<128x128xf32> to vector<128x128xbf16>
    %cst_93 = arith.constant dense<0.000000e+00> : vector<2x128xf32>
    %350 = tpu.matmul %348, %349, %cst_93 {dimension_numbers = #tpu.dot_dimension_numbers<[1], [0], [0], [1], [0, 0, 1, 1], [], []>} : vector<2x128xbf16>, vector<128x128xbf16>, vector<2x128xf32> -> vector<2x128xf32>
    %c1616 = arith.constant 1616 : index
    %c0_94 = arith.constant 0 : index
    %351 = vector.load %arg3[%c1616, %c0_94] : memref<1624x128xf32, #tpu.memory_space<vmem>>, vector<1x128xf32>
    %352 = vector.broadcast %351 : vector<1x128xf32> to vector<2x128xf32>
    %353 = arith.addf %350, %352 : vector<2x128xf32>
    %c0_95 = arith.constant 0 : index
    %c0_96 = arith.constant 0 : index
    %354 = vector.load %arg4[%c0_95, %c0_96] : memref<2x128xf32, #tpu.memory_space<vmem>>, vector<2x128xf32>
    tpu.vector_store %arg4[%c0_95, %c0_96], %353 {strides = array<i32>} : memref<2x128xf32, #tpu.memory_space<vmem>>, vector<2x128xf32>,
    return
  }
  func.func @transform_0(%arg0: i32) -> (i32, i32, i32) {
    %c0_i32 = arith.constant 0 : i32
    %c0_i32_0 = arith.constant 0 : i32
    %c0_i32_1 = arith.constant 0 : i32
    return %arg0, %c0_i32, %c0_i32_0 : i32, i32, i32
  }
  func.func @transform_1(%arg0: i32) -> (i32, i32) {
    %c0_i32 = arith.constant 0 : i32
    %c0_i32_0 = arith.constant 0 : i32
    return %arg0, %c0_i32 : i32, i32
  }
  func.func @transform_2(%arg0: i32) -> (i32, i32) {
    %c0_i32 = arith.constant 0 : i32
    %c0_i32_0 = arith.constant 0 : i32
    %c0_i32_1 = arith.constant 0 : i32
    return %c0_i32, %c0_i32_0 : i32, i32
  }
  func.func @transform_3(%arg0: i32) -> (i32, i32) {
    %c0_i32 = arith.constant 0 : i32
    %c0_i32_0 = arith.constant 0 : i32
    return %arg0, %c0_i32 : i32, i32
  }
}

</mosaic_0001>

<llo_original>
// kernel: tpu_custom_call.1
$region0: #{tpu_custom_call.1}
  #allocation0 [shape = 'u32[]', space=smem, size = 0x4, offset = 0x4, fixed_abs, tag = 'smem constant byte address 0x4 - core index']
  #allocation1 [shape = 'u32[144,128]{1,0:T(1,128)}', space=vmem, size = 0x12000, scoped, tag = 'internal scratch']
  %s0 = inlined_call_operand.vmem [shape: f32[2,5,12], index: 0, kind: input, shape index: {}]
  %s1 = inlined_call_operand.vmem [shape: f32[10,12], index: 1, kind: input, shape index: {}]
  %s2 = inlined_call_operand.hbm [shape: f32[1624,128], index: 2, kind: input, shape index: {}]
  %s3 = inlined_call_operand.hbm [shape: f32[2,128], index: 3, kind: output, shape index: {}]
  %s4 = sld [smem:[#allocation0]]
  $region26: #{tpu_custom_call.1} parent=0
    _
  %s6 = ssub.s32 1, %s4
  %s7 = scalar_select 0, %s6, %s4
  $region1: #{tpu_custom_call.1} parent=0
    #allocation2 [shape = 'u8[831488]{0}', space=vmem, size = 0xcb000, scoped, tag = 'input window, operand 2, single buffered']
    #allocation3 [shape = 's32[1]{0}', space=sflag, size = 0x4, scoped, tag = 'scoped memory for tpu_custom_call.1']
    #allocation4 [shape = 's32[1]{0}', space=sflag, size = 0x4, scoped, tag = 'scoped memory for tpu_custom_call.1']
    #allocation5 [shape = 'u8[1024]{0}', space=vmem, size = 0x400, scoped, tag = 'output window, operand 0, single buffered']
    %8 = vsyncpa [#allocation3], 0
    %9 = vsyncpa [#allocation4], 0
    // Predicated region
    $region2: #{tpu_custom_call.1} parent=1 // pred_check
      _
    $region3: #{tpu_custom_call.1} parent=1 // pred_check_branch
      %11 = sbr.rel (0) target = $region5
    $region4: #{tpu_custom_call.1} parent=1 // pred_region
      _
    $region5: #{tpu_custom_call.1} parent=1 // pred_fallthru
      _
    // Predicated region
    $region6: #{tpu_custom_call.1} parent=1 // pred_check
      _
    $region7: #{tpu_custom_call.1} parent=1 // pred_check_branch
      %13 = sbr.rel (0) target = $region9
    $region8: #{tpu_custom_call.1} parent=1 // pred_region
      _
    $region9: #{tpu_custom_call.1} parent=1 // pred_fallthru
      _
    // Predicated region
    $region10: #{tpu_custom_call.1} parent=1 // pred_check
      _
    $region11: #{tpu_custom_call.1} parent=1 // pred_check_branch
      %15 = sbr.rel (0) target = $region13
    $region12: #{tpu_custom_call.1} parent=1 // pred_region
      %s17 = ssub.s32 25984, 25984
      %18 = vsyncadd [#allocation3], %s17
      %s19 = sshll.u32 [#allocation2], 4
      %s20 = int_to_ptr.vmem [resolvable:$true] %s19
      %25 = dma.hbm_to_vmem [thread:$0]  %s2, 25984, %s20, [#allocation3], 128, 128, 8
    $region13: #{tpu_custom_call.1} parent=1 // pred_fallthru
      _
    // Predicated region
    $region14: #{tpu_custom_call.1} parent=1 // pred_check
      _
    $region15: #{tpu_custom_call.1} parent=1 // pred_check_branch
      %27 = sbr.rel (0) target = $region17
    $region16: #{tpu_custom_call.1} parent=1 // pred_region
      %28 = dma.done [#allocation3], 25984
    $region17: #{tpu_custom_call.1} parent=1 // pred_fallthru
      _
    %v30 = vld [vmem:[%s0] sm:$0x1f]
    %v31 = vld [vmem:[%s0 + $0x8] sm:$0x1f]
    %v32 = vld [vmem:[%s1] sm:$0xff]
    %v33 = vld [vmem:[%s1 + $0x8] sm:$0x3]
    %v34 = vld [vmem:[#allocation2] sm:$0xff]
    %v35 = vld [vmem:[#allocation2 + $0x8] sm:$0xf]
    %v36 = vpack.c.bf16 %v33, %v32
    %v37 = vpack.c.bf16 %v35, %v34
    %v38 = vld [vmem:[#allocation2 + $0x10] sm:$0x1]
    %v39 = vlaneseq
    %v40 = vshrl.u32 %v39, 7
    %v41 = vsub.s32 0, %v40
    %v42 = vrot.slane %v38, %v41
    %vm43 = vcmask 97280
    %v45 = vsel %vm43, %v36, 0
    %vm47 = vcmask 1045504
    %v49 = vsel %vm47, %v37, 0
    %51 = vmatprep.subr.bf16.mxu0 0
    %52 = vmatpush1.bf16.msra.mxu0 %v49
    %53 = vmatprep.subr.bf16.mxu0 0
    %54 = vmatpush1.bf16.msra.mxu0 0
    %55 = vmatprep.subr.bf16.mxu0 0
    %56 = vmatpush1.bf16.msra.mxu0 0
    %57 = vmatprep.subr.bf16.mxu0 0
    %58 = vmatpush1.bf16.msra.mxu0 0
    %59 = vmatprep.subr.bf16.mxu0 0
    %60 = vmatpush1.bf16.msra.mxu0 0
    %61 = vmatprep.subr.bf16.mxu0 0
    %62 = vmatpush1.bf16.msra.mxu0 0
    %63 = vmatprep.subr.bf16.mxu0 0
    %64 = vmatpush1.bf16.msra.mxu0 0
    %65 = vmatprep.subr.bf16.mxu0 0
    %66 = vmatpush1.bf16.msra.mxu0 0
    %67 = vmatprep.subr.bf16.mxu0 0
    %68 = vmatpush1.bf16.msra.mxu0 0
    %69 = vmatprep.subr.bf16.mxu0 0
    %70 = vmatpush1.bf16.msra.mxu0 0
    %71 = vmatprep.subr.bf16.mxu0 0
    %72 = vmatpush1.bf16.msra.mxu0 0
    %73 = vmatprep.subr.bf16.mxu0 0
    %74 = vmatpush1.bf16.msra.mxu0 0
    %75 = vmatprep.subr.bf16.mxu0 0
    %76 = vmatpush1.bf16.msra.mxu0 0
    %77 = vmatprep.subr.bf16.mxu0 0
    %78 = vmatpush1.bf16.msra.mxu0 0
    %79 = vmatprep.subr.bf16.mxu0 0
    %80 = vmatpush1.bf16.msra.mxu0 0
    %81 = vmatprep.subr.bf16.mxu0 0
    %82 = vmatpush1.bf16.msra.mxu0 0
    %83 = vmatprep.mubr.bf16.mxu0 0
    %84 = vmatmul.mubr.bf16.gmra.mrb[0].mxu0 %v45
    %v85 = vpop.f32.mrb[0].mxu0
    %v86 = vadd.f32 %v42, %v85
    %v87 = vpop.f32.mrb[0].mxu0
    %v88 = vpop.f32.mrb[0].mxu0
    %v89 = vadd.f32 %v42, %v88
    %v90 = vpop.f32.mrb[0].mxu0
    %91 = vdwg.mxu0
    %v92 = vmax.f32 %v86, 0.0
    %v93 = vmax.f32 %v89, 0.0
    %v94 = vld [vmem:[#allocation2 + $0x18] sm:$0xff]
    %v95 = vld [vmem:[#allocation2 + $0x20] sm:$0xff]
    %v96 = vld [vmem:[#allocation2 + $0x28] sm:$0xff]
    %v97 = vld [vmem:[#allocation2 + $0x30] sm:$0xff]
    %v98 = vld [vmem:[#allocation2 + $0x38] sm:$0xff]
    %v99 = vld [vmem:[#allocation2 + $0x40] sm:$0xff]
    %v100 = vld [vmem:[#allocation2 + $0x48] sm:$0xff]
    %v101 = vld [vmem:[#allocation2 + $0x50] sm:$0xff]
    %v102 = vld [vmem:[#allocation2 + $0x58] sm:$0xff]
    %v103 = vld [vmem:[#allocation2 + $0x60] sm:$0xff]
    %v104 = vld [vmem:[#allocation2 + $0x68] sm:$0xff]
    %v105 = vld [vmem:[#allocation2 + $0x70] sm:$0xff]
    %v106 = vld [vmem:[#allocation2 + $0x78] sm:$0xff]
    %v107 = vld [vmem:[#allocation2 + $0x80] sm:$0xff]
    %v108 = vld [vmem:[#allocation2 + $0x88] sm:$0xff]
    %v109 = vld [vmem:[#allocation2 + $0x90] sm:$0xff]
    %v110 = vpack.c.bf16 %v93, %v92
    %v111 = vpack.c.bf16 %v95, %v94
    %v112 = vpack.c.bf16 %v97, %v96
    %v113 = vpack.c.bf16 %v99, %v98
    %v114 = vpack.c.bf16 %v101, %v100
    %v115 = vpack.c.bf16 %v103, %v102
    %v116 = vpack.c.bf16 %v105, %v104
    %v117 = vpack.c.bf16 %v107, %v106
    %v118 = vpack.c.bf16 %v109, %v108
    %v119 = vld [vmem:[#allocation2 + $0x98] sm:$0x1]
    %v120 = vlaneseq
    %v121 = vshrl.u32 %v120, 7
    %v122 = vsub.s32 0, %v121
    %v123 = vrot.slane %v119, %v122
    %124 = vmatprep.subr.bf16.mxu0 0
    %125 = vmatpush1.bf16.msra.mxu0 %v111
    %126 = vmatprep.subr.bf16.mxu0 0
    %127 = vmatpush1.bf16.msra.mxu0 %v112
    %128 = vmatprep.subr.bf16.mxu0 0
    %129 = vmatpush1.bf16.msra.mxu0 %v113
    %130 = vmatprep.subr.bf16.mxu0 0
    %131 = vmatpush1.bf16.msra.mxu0 %v114
    %132 = vmatprep.subr.bf16.mxu0 0
    %133 = vmatpush1.bf16.msra.mxu0 %v115
    %134 = vmatprep.subr.bf16.mxu0 0
    %135 = vmatpush1.bf16.msra.mxu0 %v116
    %136 = vmatprep.subr.bf16.mxu0 0
    %137 = vmatpush1.bf16.msra.mxu0 %v117
    %138 = vmatprep.subr.bf16.mxu0 0
    %139 = vmatpush1.bf16.msra.mxu0 %v118
    %140 = vmatprep.subr.bf16.mxu0 0
    %141 = vmatpush1.bf16.msra.mxu0 0
    %142 = vmatprep.subr.bf16.mxu0 0
    %143 = vmatpush1.bf16.msra.mxu0 0
    %144 = vmatprep.subr.bf16.mxu0 0
    %145 = vmatpush1.bf16.msra.mxu0 0
    %146 = vmatprep.subr.bf16.mxu0 0
    %147 = vmatpush1.bf16.msra.mxu0 0
    %148 = vmatprep.subr.bf16.mxu0 0
    %149 = vmatpush1.bf16.msra.mxu0 0
    %150 = vmatprep.subr.bf16.mxu0 0
    %151 = vmatpush1.bf16.msra.mxu0 0
    %152 = vmatprep.subr.bf16.mxu0 0
    %153 = vmatpush1.bf16.msra.mxu0 0
    %154 = vmatprep.subr.bf16.mxu0 0
    %155 = vmatpush1.bf16.msra.mxu0 0
    %156 = vmatprep.mubr.bf16.mxu0 0
    %157 = vmatmul.mubr.bf16.gmra.mrb[0].mxu0 %v110
    %v158 = vpop.f32.mrb[0].mxu0
    %v159 = vadd.f32 %v123, %v158
    %v160 = vpop.f32.mrb[0].mxu0
    %v161 = vpop.f32.mrb[0].mxu0
    %v162 = vadd.f32 %v123, %v161
    %v163 = vpop.f32.mrb[0].mxu0
    %164 = vdwg.mxu0
    %v165 = vmax.f32 %v159, 0.0
    %v166 = vmax.f32 %v162, 0.0
    %v169 = vcombine.high %v165, %v165
    %v171 = vunpack.c.l.s4 1966171168
    %v172 = vunpack.c.0.s8 %v171
    %v173 = vlaneseq
    %v174 = vshrl.u32 %v173, 7
    %v175 = vsub.s32 %v172, %v174
    %v176 = vrot.slane %v165, %v175
    %v178 = vunpack.c.l.s4 1966171168
    %v179 = vunpack.c.0.s8 %v178
    %v180 = vlaneseq
    %v181 = vshrl.u32 %v180, 7
    %v182 = vsub.s32 %v179, %v181
    %v183 = vrot.slane %v169, %v182
    %v184 = vcombine.high %v176, %v176
    %v185 = vcombine.high %v183, %v183
    %v187 = vunpack.c.l.s4 1966171168
    %v188 = vunpack.c.0.s8 %v187
    %v189 = vlaneseq
    %v190 = vshrl.u32 %v189, 7
    %v191 = vsub.s32 %v188, %v190
    %v192 = vrot.slane %v176, %v191
    %v194 = vunpack.c.l.s4 1966171168
    %v195 = vunpack.c.0.s8 %v194
    %v196 = vlaneseq
    %v197 = vshrl.u32 %v196, 7
    %v198 = vsub.s32 %v195, %v197
    %v199 = vrot.slane %v183, %v198
    %v201 = vunpack.c.l.s4 1966171168
    %v202 = vunpack.c.0.s8 %v201
    %v203 = vlaneseq
    %v204 = vshrl.u32 %v203, 7
    %v205 = vsub.s32 %v202, %v204
    %v206 = vrot.slane %v184, %v205
    %v208 = vunpack.c.l.s4 1966171168
    %v209 = vunpack.c.0.s8 %v208
    %v210 = vlaneseq
    %v211 = vshrl.u32 %v210, 7
    %v212 = vsub.s32 %v209, %v211
    %v213 = vrot.slane %v185, %v212
    %v214 = vcombine.high %v192, %v192
    %v215 = vcombine.high %v199, %v199
    %v216 = vcombine.high %v206, %v206
    %v217 = vcombine.high %v213, %v213
    %v219 = vunpack.c.l.s4 1966171168
    %v220 = vunpack.c.0.s8 %v219
    %v221 = vlaneseq
    %v222 = vshrl.u32 %v221, 7
    %v223 = vsub.s32 %v220, %v222
    %v224 = vrot.slane %v166, %v223
    %v225 = vcombine.high %v224, %v224
    %v227 = vunpack.c.l.s4 1966171168
    %v228 = vunpack.c.0.s8 %v227
    %v229 = vlaneseq
    %v230 = vshrl.u32 %v229, 7
    %v231 = vsub.s32 %v228, %v230
    %v232 = vrot.slane %v224, %v231
    %v234 = vunpack.c.l.s4 1966171168
    %v235 = vunpack.c.0.s8 %v234
    %v236 = vlaneseq
    %v237 = vshrl.u32 %v236, 7
    %v238 = vsub.s32 %v235, %v237
    %v239 = vrot.slane %v225, %v238
    %v240 = vcombine.low %v192, %v206
    %v241 = vcombine.low %v214, %v216
    %v243 = vunpack.c.l.s4 1966171168
    %v244 = vunpack.c.0.s8 %v243
    %v245 = vlaneseq
    %v246 = vshrl.u32 %v245, 7
    %v247 = vsub.s32 %v244, %v246
    %v248 = vrot.slane %v240, %v247
    %v250 = vunpack.c.l.s4 1966171168
    %v251 = vunpack.c.0.s8 %v250
    %v252 = vlaneseq
    %v253 = vshrl.u32 %v252, 7
    %v254 = vsub.s32 %v251, %v253
    %v255 = vrot.slane %v241, %v254
    %v257 = vunpack.c.l.s4 1966171168
    %v258 = vunpack.c.0.s8 %v257
    %v259 = vlaneseq
    %v260 = vshrl.u32 %v259, 7
    %v261 = vsub.s32 %v258, %v260
    %v262 = vrot.slane %v199, %v261
    %v263 = vcombine.low %v248, %v255
    %v265 = vunpack.c.l.s4 1966171168
    %v266 = vunpack.c.0.s8 %v265
    %v267 = vlaneseq
    %v268 = vshrl.u32 %v267, 7
    %v269 = vsub.s32 %v266, %v268
    %v270 = vrot.slane %v263, %v269
    %v272 = vunpack.c.l.s4 1966171168
    %v273 = vunpack.c.0.s8 %v272
    %v274 = vlaneseq
    %v275 = vshrl.u32 %v274, 7
    %v276 = vsub.s32 %v273, %v275
    %v277 = vrot.slane %v262, %v276
    %v278 = vcombine.low %v270, %v277
    %v279 = vcombine.low %v213, %v215
    %v280 = vcombine.low %v217, %v232
    %v282 = vunpack.c.l.s4 1966171168
    %v283 = vunpack.c.0.s8 %v282
    %v284 = vlaneseq
    %v285 = vshrl.u32 %v284, 7
    %v286 = vsub.s32 %v283, %v285
    %v287 = vrot.slane %v279, %v286
    %v289 = vunpack.c.l.s4 1966171168
    %v290 = vunpack.c.0.s8 %v289
    %v291 = vlaneseq
    %v292 = vshrl.u32 %v291, 7
    %v293 = vsub.s32 %v290, %v292
    %v294 = vrot.slane %v280, %v293
    %v296 = vunpack.c.l.s4 1966171168
    %v297 = vunpack.c.0.s8 %v296
    %v298 = vlaneseq
    %v299 = vshrl.u32 %v298, 7
    %v300 = vsub.s32 %v297, %v299
    %v301 = vrot.slane %v239, %v300
    %v302 = vcombine.low %v287, %v294
    %v304 = vunpack.c.l.s4 1966171168
    %v305 = vunpack.c.0.s8 %v304
    %v306 = vlaneseq
    %v307 = vshrl.u32 %v306, 7
    %v308 = vsub.s32 %v305, %v307
    %v309 = vrot.slane %v302, %v308
    %v311 = vunpack.c.l.s4 1966171168
    %v312 = vunpack.c.0.s8 %v311
    %v313 = vlaneseq
    %v314 = vshrl.u32 %v313, 7
    %v315 = vsub.s32 %v312, %v314
    %v316 = vrot.slane %v301, %v315
    %v317 = vcombine.low %v309, %v316
    %vm320 = vcmask 1044480
    %v321 = vsel %vm320, %v278, 0.0
    %v322 = vrot.slane %v321, 4
    %v323 = vadd.f32 %v321, %v322
    %v324 = vrot.slane %v323, 2
    %v325 = vadd.f32 %v323, %v324
    %v326 = vrot.slane %v325, 1
    %v327 = vadd.f32 %v325, %v326
    %v328 = vsel %vm320, %v317, 0.0
    %v329 = vrot.slane %v328, 4
    %v330 = vadd.f32 %v328, %v329
    %v331 = vrot.slane %v330, 2
    %v332 = vadd.f32 %v330, %v331
    %v333 = vrot.slane %v332, 1
    %v334 = vadd.f32 %v332, %v333
    %v335 = vrcp.pop 5.0
    %v336 = vmul.f32 %v327, %v335
    %v337 = vmul.f32 %v334, %v335
    %v340 = vcombine.high %v336, %v336
    %v342 = vunpack.c.l.s4 1966171168
    %v343 = vunpack.c.0.s8 %v342
    %v344 = vlaneseq
    %v345 = vshrl.u32 %v344, 7
    %v346 = vsub.s32 %v343, %v345
    %v347 = vrot.slane %v336, %v346
    %v349 = vunpack.c.l.s4 1966171168
    %v350 = vunpack.c.0.s8 %v349
    %v351 = vlaneseq
    %v352 = vshrl.u32 %v351, 7
    %v353 = vsub.s32 %v350, %v352
    %v354 = vrot.slane %v340, %v353
    %v355 = vcombine.high %v347, %v347
    %v357 = vunpack.c.l.s4 1966171168
    %v358 = vunpack.c.0.s8 %v357
    %v359 = vlaneseq
    %v360 = vshrl.u32 %v359, 7
    %v361 = vsub.s32 %v358, %v360
    %v362 = vrot.slane %v347, %v361
    %v364 = vunpack.c.l.s4 1966171168
    %v365 = vunpack.c.0.s8 %v364
    %v366 = vlaneseq
    %v367 = vshrl.u32 %v366, 7
    %v368 = vsub.s32 %v365, %v367
    %v369 = vrot.slane %v354, %v368
    %v371 = vunpack.c.l.s4 1966171168
    %v372 = vunpack.c.0.s8 %v371
    %v373 = vlaneseq
    %v374 = vshrl.u32 %v373, 7
    %v375 = vsub.s32 %v372, %v374
    %v376 = vrot.slane %v355, %v375
    %v377 = vcombine.high %v362, %v362
    %v378 = vcombine.high %v376, %v376
    %v379 = vcombine.high %v337, %v337
    %v381 = vunpack.c.l.s4 1966171168
    %v382 = vunpack.c.0.s8 %v381
    %v383 = vlaneseq
    %v384 = vshrl.u32 %v383, 7
    %v385 = vsub.s32 %v382, %v384
    %v386 = vrot.slane %v337, %v385
    %v388 = vunpack.c.l.s4 1966171168
    %v389 = vunpack.c.0.s8 %v388
    %v390 = vlaneseq
    %v391 = vshrl.u32 %v390, 7
    %v392 = vsub.s32 %v389, %v391
    %v393 = vrot.slane %v379, %v392
    %v394 = vcombine.high %v386, %v386
    %v396 = vunpack.c.l.s4 1966171168
    %v397 = vunpack.c.0.s8 %v396
    %v398 = vlaneseq
    %v399 = vshrl.u32 %v398, 7
    %v400 = vsub.s32 %v397, %v399
    %v401 = vrot.slane %v386, %v400
    %v403 = vunpack.c.l.s4 1966171168
    %v404 = vunpack.c.0.s8 %v403
    %v405 = vlaneseq
    %v406 = vshrl.u32 %v405, 7
    %v407 = vsub.s32 %v404, %v406
    %v408 = vrot.slane %v393, %v407
    %v410 = vunpack.c.l.s4 1966171168
    %v411 = vunpack.c.0.s8 %v410
    %v412 = vlaneseq
    %v413 = vshrl.u32 %v412, 7
    %v414 = vsub.s32 %v411, %v413
    %v415 = vrot.slane %v394, %v414
    %v416 = vcombine.high %v401, %v401
    %v417 = vcombine.high %v415, %v415
    %v418 = vld [vmem:[#allocation2 + $0xa0] sm:$0xff]
    %v419 = vld [vmem:[#allocation2 + $0xa8] sm:$0xff]
    %v420 = vld [vmem:[#allocation2 + $0xb0] sm:$0xff]
    %v421 = vld [vmem:[#allocation2 + $0xb8] sm:$0xff]
    %v422 = vld [vmem:[#allocation2 + $0xc0] sm:$0xff]
    %v423 = vld [vmem:[#allocation2 + $0xc8] sm:$0xff]
    %v424 = vld [vmem:[#allocation2 + $0xd0] sm:$0xff]
    %v425 = vld [vmem:[#allocation2 + $0xd8] sm:$0xff]
    %v426 = vld [vmem:[#allocation2 + $0xe0] sm:$0xff]
    %v427 = vld [vmem:[#allocation2 + $0xe8] sm:$0xff]
    %v428 = vld [vmem:[#allocation2 + $0xf0] sm:$0xff]
    %v429 = vld [vmem:[#allocation2 + $0xf8] sm:$0xff]
    %v430 = vld [vmem:[#allocation2 + $0x100] sm:$0xff]
    %v431 = vld [vmem:[#allocation2 + $0x108] sm:$0xff]
    %v432 = vld [vmem:[#allocation2 + $0x110] sm:$0xff]
    %v433 = vld [vmem:[#allocation2 + $0x118] sm:$0xff]
    %v434 = vpack.c.bf16 %v166, %v165
    %v435 = vpack.c.bf16 %v419, %v418
    %v436 = vpack.c.bf16 %v421, %v420
    %v437 = vpack.c.bf16 %v423, %v422
    %v438 = vpack.c.bf16 %v425, %v424
    %v439 = vpack.c.bf16 %v427, %v426
    %v440 = vpack.c.bf16 %v429, %v428
    %v441 = vpack.c.bf16 %v431, %v430
    %v442 = vpack.c.bf16 %v433, %v432
    %v443 = vld [vmem:[#allocation2 + $0x120] sm:$0xff]
    %v444 = vld [vmem:[#allocation2 + $0x128] sm:$0xff]
    %v445 = vld [vmem:[#allocation2 + $0x130] sm:$0xff]
    %v446 = vld [vmem:[#allocation2 + $0x138] sm:$0xff]
    %v447 = vld [vmem:[#allocation2 + $0x140] sm:$0xff]
    %v448 = vld [vmem:[#allocation2 + $0x148] sm:$0xff]
    %v449 = vld [vmem:[#allocation2 + $0x150] sm:$0xff]
    %v450 = vld [vmem:[#allocation2 + $0x158] sm:$0xff]
    %v451 = vld [vmem:[#allocation2 + $0x160] sm:$0xff]
    %v452 = vld [vmem:[#allocation2 + $0x168] sm:$0xff]
    %v453 = vld [vmem:[#allocation2 + $0x170] sm:$0xff]
    %v454 = vld [vmem:[#allocation2 + $0x178] sm:$0xff]
    %v455 = vld [vmem:[#allocation2 + $0x180] sm:$0xff]
    %v456 = vld [vmem:[#allocation2 + $0x188] sm:$0xff]
    %v457 = vld [vmem:[#allocation2 + $0x190] sm:$0xff]
    %v458 = vld [vmem:[#allocation2 + $0x198] sm:$0xff]
    %v459 = vcombine.low %v362, %v376
    %v460 = vcombine.low %v377, %v378
    %v461 = vcombine.low %v369, %v401
    %v462 = vcombine.low %v415, %v416
    %v464 = vunpack.c.l.s4 1966171168
    %v465 = vunpack.c.0.s8 %v464
    %v466 = vlaneseq
    %v467 = vshrl.u32 %v466, 7
    %v468 = vsub.s32 %v465, %v467
    %v469 = vrot.slane %v459, %v468
    %v471 = vunpack.c.l.s4 1966171168
    %v472 = vunpack.c.0.s8 %v471
    %v473 = vlaneseq
    %v474 = vshrl.u32 %v473, 7
    %v475 = vsub.s32 %v472, %v474
    %v476 = vrot.slane %v460, %v475
    %v478 = vunpack.c.l.s4 1966171168
    %v479 = vunpack.c.0.s8 %v478
    %v480 = vlaneseq
    %v481 = vshrl.u32 %v480, 7
    %v482 = vsub.s32 %v479, %v481
    %v483 = vrot.slane %v461, %v482
    %v485 = vunpack.c.l.s4 1966171168
    %v486 = vunpack.c.0.s8 %v485
    %v487 = vlaneseq
    %v488 = vshrl.u32 %v487, 7
    %v489 = vsub.s32 %v486, %v488
    %v490 = vrot.slane %v462, %v489
    %v491 = vcombine.low %v469, %v476
    %v492 = vcombine.low %v483, %v490
    %v494 = vunpack.c.l.s4 1966171168
    %v495 = vunpack.c.0.s8 %v494
    %v496 = vlaneseq
    %v497 = vshrl.u32 %v496, 7
    %v498 = vsub.s32 %v495, %v497
    %v499 = vrot.slane %v491, %v498
    %v501 = vunpack.c.l.s4 1966171168
    %v502 = vunpack.c.0.s8 %v501
    %v503 = vlaneseq
    %v504 = vshrl.u32 %v503, 7
    %v505 = vsub.s32 %v502, %v504
    %v506 = vrot.slane %v492, %v505
    %v507 = vcombine.low %v499, %v506
    %v508 = vcombine.low %v417, %v408
    %v510 = vunpack.c.l.s4 1966171168
    %v511 = vunpack.c.0.s8 %v510
    %v512 = vlaneseq
    %v513 = vshrl.u32 %v512, 7
    %v514 = vsub.s32 %v511, %v513
    %v515 = vrot.slane %v508, %v514
    %v517 = vunpack.c.l.s4 1966171168
    %v518 = vunpack.c.0.s8 %v517
    %v519 = vlaneseq
    %v520 = vshrl.u32 %v519, 7
    %v521 = vsub.s32 %v518, %v520
    %v522 = vrot.slane %v515, %v521
    %v525 = vpack.c.bf16 %v522, %v507
    %v526 = vpack.c.bf16 %v444, %v443
    %v527 = vpack.c.bf16 %v446, %v445
    %v528 = vpack.c.bf16 %v448, %v447
    %v529 = vpack.c.bf16 %v450, %v449
    %v530 = vpack.c.bf16 %v452, %v451
    %v531 = vpack.c.bf16 %v454, %v453
    %v532 = vpack.c.bf16 %v456, %v455
    %v533 = vpack.c.bf16 %v458, %v457
    %534 = vmatprep.subr.bf16.mxu0 0
    %535 = vmatpush1.bf16.msra.mxu0 %v526
    %536 = vmatprep.subr.bf16.mxu0 0
    %537 = vmatpush1.bf16.msra.mxu0 %v527
    %538 = vmatprep.subr.bf16.mxu0 0
    %539 = vmatpush1.bf16.msra.mxu0 %v528
    %540 = vmatprep.subr.bf16.mxu0 0
    %541 = vmatpush1.bf16.msra.mxu0 %v529
    %542 = vmatprep.subr.bf16.mxu0 0
    %543 = vmatpush1.bf16.msra.mxu0 %v530
    %544 = vmatprep.subr.bf16.mxu0 0
    %545 = vmatpush1.bf16.msra.mxu0 %v531
    %546 = vmatprep.subr.bf16.mxu0 0
    %547 = vmatpush1.bf16.msra.mxu0 %v532
    %548 = vmatprep.subr.bf16.mxu0 0
    %549 = vmatpush1.bf16.msra.mxu0 %v533
    %550 = vmatprep.subr.bf16.mxu0 0
    %551 = vmatpush1.bf16.msra.mxu0 0
    %552 = vmatprep.subr.bf16.mxu0 0
    %553 = vmatpush1.bf16.msra.mxu0 0
    %554 = vmatprep.subr.bf16.mxu0 0
    %555 = vmatpush1.bf16.msra.mxu0 0
    %556 = vmatprep.subr.bf16.mxu0 0
    %557 = vmatpush1.bf16.msra.mxu0 0
    %558 = vmatprep.subr.bf16.mxu0 0
    %559 = vmatpush1.bf16.msra.mxu0 0
    %560 = vmatprep.subr.bf16.mxu0 0
    %561 = vmatpush1.bf16.msra.mxu0 0
    %562 = vmatprep.subr.bf16.mxu0 0
    %563 = vmatpush1.bf16.msra.mxu0 0
    %564 = vmatprep.subr.bf16.mxu0 0
    %565 = vmatpush1.bf16.msra.mxu0 0
    %566 = vmatprep.mubr.bf16.mxu0 0
    %567 = vmatmul.mubr.bf16.gmra.mrb[0].mxu0 %v525
    %v568 = vpop.f32.mrb[0].mxu0
    %v569 = vadd.f32 0.0, %v568
    %v570 = vpop.f32.mrb[0].mxu0
    %v571 = vpop.f32.mrb[0].mxu0
    %v572 = vadd.f32 0.0, %v571
    %v573 = vpop.f32.mrb[0].mxu0
    %574 = vdwg.mxu0
    %575 = vmatprep.subr.bf16.mxu0 0
    %576 = vmatpush1.bf16.msra.mxu0 %v435
    %577 = vmatprep.subr.bf16.mxu0 0
    %578 = vmatpush1.bf16.msra.mxu0 %v436
    %579 = vmatprep.subr.bf16.mxu0 0
    %580 = vmatpush1.bf16.msra.mxu0 %v437
    %581 = vmatprep.subr.bf16.mxu0 0
    %582 = vmatpush1.bf16.msra.mxu0 %v438
    %583 = vmatprep.subr.bf16.mxu0 0
    %584 = vmatpush1.bf16.msra.mxu0 %v439
    %585 = vmatprep.subr.bf16.mxu0 0
    %586 = vmatpush1.bf16.msra.mxu0 %v440
    %587 = vmatprep.subr.bf16.mxu0 0
    %588 = vmatpush1.bf16.msra.mxu0 %v441
    %589 = vmatprep.subr.bf16.mxu0 0
    %590 = vmatpush1.bf16.msra.mxu0 %v442
    %591 = vmatprep.subr.bf16.mxu0 0
    %592 = vmatpush1.bf16.msra.mxu0 0
    %593 = vmatprep.subr.bf16.mxu0 0
    %594 = vmatpush1.bf16.msra.mxu0 0
    %595 = vmatprep.subr.bf16.mxu0 0
    %596 = vmatpush1.bf16.msra.mxu0 0
    %597 = vmatprep.subr.bf16.mxu0 0
    %598 = vmatpush1.bf16.msra.mxu0 0
    %599 = vmatprep.subr.bf16.mxu0 0
    %600 = vmatpush1.bf16.msra.mxu0 0
    %601 = vmatprep.subr.bf16.mxu0 0
    %602 = vmatpush1.bf16.msra.mxu0 0
    %603 = vmatprep.subr.bf16.mxu0 0
    %604 = vmatpush1.bf16.msra.mxu0 0
    %605 = vmatprep.subr.bf16.mxu0 0
    %606 = vmatpush1.bf16.msra.mxu0 0
    %607 = vmatprep.mubr.bf16.mxu0 0
    %608 = vmatmul.mubr.bf16.gmra.mrb[0].mxu0 %v434
    %v609 = vpop.f32.mrb[0].mxu0
    %v610 = vadd.f32 %v569, %v609
    %v611 = vpop.f32.mrb[0].mxu0
    %v612 = vpop.f32.mrb[0].mxu0
    %v613 = vadd.f32 %v572, %v612
    %v614 = vpop.f32.mrb[0].mxu0
    %615 = vdwg.mxu0
    %v616 = vld [vmem:[#allocation2 + $0x1a0] sm:$0x1]
    %v617 = vlaneseq
    %v618 = vshrl.u32 %v617, 7
    %v619 = vsub.s32 0, %v618
    %v620 = vrot.slane %v616, %v619
    %v621 = vadd.f32 %v610, %v620
    %v622 = vadd.f32 %v613, %v620
    %v623 = vmax.f32 %v621, 0.0
    %v624 = vmax.f32 %v622, 0.0
    %v625 = vld [vmem:[#allocation2 + $0x1a8] sm:$0xff]
    %v626 = vld [vmem:[#allocation2 + $0x1b0] sm:$0xff]
    %v627 = vld [vmem:[#allocation2 + $0x1b8] sm:$0xff]
    %v628 = vld [vmem:[#allocation2 + $0x1c0] sm:$0xff]
    %v629 = vld [vmem:[#allocation2 + $0x1c8] sm:$0xff]
    %v630 = vld [vmem:[#allocation2 + $0x1d0] sm:$0xff]
    %v631 = vld [vmem:[#allocation2 + $0x1d8] sm:$0xff]
    %v632 = vld [vmem:[#allocation2 + $0x1e0] sm:$0xff]
    %v633 = vld [vmem:[#allocation2 + $0x1e8] sm:$0xff]
    %v634 = vld [vmem:[#allocation2 + $0x1f0] sm:$0xff]
    %v635 = vld [vmem:[#allocation2 + $0x1f8] sm:$0xff]
    %v636 = vld [vmem:[#allocation2 + $0x200] sm:$0xff]
    %v637 = vld [vmem:[#allocation2 + $0x208] sm:$0xff]
    %v638 = vld [vmem:[#allocation2 + $0x210] sm:$0xff]
    %v639 = vld [vmem:[#allocation2 + $0x218] sm:$0xff]
    %v640 = vld [vmem:[#allocation2 + $0x220] sm:$0xff]
    %v641 = vpack.c.bf16 %v624, %v623
    %v642 = vpack.c.bf16 %v626, %v625
    %v643 = vpack.c.bf16 %v628, %v627
    %v644 = vpack.c.bf16 %v630, %v629
    %v645 = vpack.c.bf16 %v632, %v631
    %v646 = vpack.c.bf16 %v634, %v633
    %v647 = vpack.c.bf16 %v636, %v635
    %v648 = vpack.c.bf16 %v638, %v637
    %v649 = vpack.c.bf16 %v640, %v639
    %v650 = vld [vmem:[#allocation2 + $0x228] sm:$0x1]
    %v651 = vlaneseq
    %v652 = vshrl.u32 %v651, 7
    %v653 = vsub.s32 0, %v652
    %v654 = vrot.slane %v650, %v653
    %655 = vmatprep.subr.bf16.mxu0 0
    %656 = vmatpush1.bf16.msra.mxu0 %v642
    %657 = vmatprep.subr.bf16.mxu0 0
    %658 = vmatpush1.bf16.msra.mxu0 %v643
    %659 = vmatprep.subr.bf16.mxu0 0
    %660 = vmatpush1.bf16.msra.mxu0 %v644
    %661 = vmatprep.subr.bf16.mxu0 0
    %662 = vmatpush1.bf16.msra.mxu0 %v645
    %663 = vmatprep.subr.bf16.mxu0 0
    %664 = vmatpush1.bf16.msra.mxu0 %v646
    %665 = vmatprep.subr.bf16.mxu0 0
    %666 = vmatpush1.bf16.msra.mxu0 %v647
    %667 = vmatprep.subr.bf16.mxu0 0
    %668 = vmatpush1.bf16.msra.mxu0 %v648
    %669 = vmatprep.subr.bf16.mxu0 0
    %670 = vmatpush1.bf16.msra.mxu0 %v649
    %671 = vmatprep.subr.bf16.mxu0 0
    %672 = vmatpush1.bf16.msra.mxu0 0
    %673 = vmatprep.subr.bf16.mxu0 0
    %674 = vmatpush1.bf16.msra.mxu0 0
    %675 = vmatprep.subr.bf16.mxu0 0
    %676 = vmatpush1.bf16.msra.mxu0 0
    %677 = vmatprep.subr.bf16.mxu0 0
    %678 = vmatpush1.bf16.msra.mxu0 0
    %679 = vmatprep.subr.bf16.mxu0 0
    %680 = vmatpush1.bf16.msra.mxu0 0
    %681 = vmatprep.subr.bf16.mxu0 0
    %682 = vmatpush1.bf16.msra.mxu0 0
    %683 = vmatprep.subr.bf16.mxu0 0
    %684 = vmatpush1.bf16.msra.mxu0 0
    %685 = vmatprep.subr.bf16.mxu0 0
    %686 = vmatpush1.bf16.msra.mxu0 0
    %687 = vmatprep.mubr.bf16.mxu0 0
    %688 = vmatmul.mubr.bf16.gmra.mrb[0].mxu0 %v641
    %v689 = vpop.f32.mrb[0].mxu0
    %v690 = vadd.f32 %v654, %v689
    %v691 = vpop.f32.mrb[0].mxu0
    %v692 = vpop.f32.mrb[0].mxu0
    %v693 = vadd.f32 %v654, %v692
    %v694 = vpop.f32.mrb[0].mxu0
    %695 = vdwg.mxu0
    %v696 = vmax.f32 %v690, 0.0
    %v697 = vmax.f32 %v693, 0.0
    %v700 = vcombine.high %v696, %v696
    %v702 = vunpack.c.l.s4 1966171168
    %v703 = vunpack.c.0.s8 %v702
    %v704 = vlaneseq
    %v705 = vshrl.u32 %v704, 7
    %v706 = vsub.s32 %v703, %v705
    %v707 = vrot.slane %v696, %v706
    %v709 = vunpack.c.l.s4 1966171168
    %v710 = vunpack.c.0.s8 %v709
    %v711 = vlaneseq
    %v712 = vshrl.u32 %v711, 7
    %v713 = vsub.s32 %v710, %v712
    %v714 = vrot.slane %v700, %v713
    %v715 = vcombine.high %v707, %v707
    %v716 = vcombine.high %v714, %v714
    %v718 = vunpack.c.l.s4 1966171168
    %v719 = vunpack.c.0.s8 %v718
    %v720 = vlaneseq
    %v721 = vshrl.u32 %v720, 7
    %v722 = vsub.s32 %v719, %v721
    %v723 = vrot.slane %v707, %v722
    %v725 = vunpack.c.l.s4 1966171168
    %v726 = vunpack.c.0.s8 %v725
    %v727 = vlaneseq
    %v728 = vshrl.u32 %v727, 7
    %v729 = vsub.s32 %v726, %v728
    %v730 = vrot.slane %v714, %v729
    %v732 = vunpack.c.l.s4 1966171168
    %v733 = vunpack.c.0.s8 %v732
    %v734 = vlaneseq
    %v735 = vshrl.u32 %v734, 7
    %v736 = vsub.s32 %v733, %v735
    %v737 = vrot.slane %v715, %v736
    %v739 = vunpack.c.l.s4 1966171168
    %v740 = vunpack.c.0.s8 %v739
    %v741 = vlaneseq
    %v742 = vshrl.u32 %v741, 7
    %v743 = vsub.s32 %v740, %v742
    %v744 = vrot.slane %v716, %v743
    %v745 = vcombine.high %v723, %v723
    %v746 = vcombine.high %v730, %v730
    %v747 = vcombine.high %v737, %v737
    %v748 = vcombine.high %v744, %v744
    %v750 = vunpack.c.l.s4 1966171168
    %v751 = vunpack.c.0.s8 %v750
    %v752 = vlaneseq
    %v753 = vshrl.u32 %v752, 7
    %v754 = vsub.s32 %v751, %v753
    %v755 = vrot.slane %v697, %v754
    %v756 = vcombine.high %v755, %v755
    %v758 = vunpack.c.l.s4 1966171168
    %v759 = vunpack.c.0.s8 %v758
    %v760 = vlaneseq
    %v761 = vshrl.u32 %v760, 7
    %v762 = vsub.s32 %v759, %v761
    %v763 = vrot.slane %v755, %v762
    %v765 = vunpack.c.l.s4 1966171168
    %v766 = vunpack.c.0.s8 %v765
    %v767 = vlaneseq
    %v768 = vshrl.u32 %v767, 7
    %v769 = vsub.s32 %v766, %v768
    %v770 = vrot.slane %v756, %v769
    %v781 = vld [vmem:[#allocation2 + $0x230] sm:$0x1]
    %v782 = vlaneseq
    %v783 = vshrl.u32 %v782, 7
    %v784 = vsub.s32 0, %v783
    %v785 = vrot.slane %v781, %v784
    %v787 = vcombine.high %v785, %v785
    %v789 = vunpack.c.l.s4 1966171168
    %v790 = vunpack.c.0.s8 %v789
    %v791 = vlaneseq
    %v792 = vshrl.u32 %v791, 7
    %v793 = vsub.s32 %v790, %v792
    %v794 = vrot.slane %v785, %v793
    %v796 = vunpack.c.l.s4 1966171168
    %v797 = vunpack.c.0.s8 %v796
    %v798 = vlaneseq
    %v799 = vshrl.u32 %v798, 7
    %v800 = vsub.s32 %v797, %v799
    %v801 = vrot.slane %v787, %v800
    %v802 = vcombine.high %v794, %v794
    %v804 = vunpack.c.l.s4 1966171168
    %v805 = vunpack.c.0.s8 %v804
    %v806 = vlaneseq
    %v807 = vshrl.u32 %v806, 7
    %v808 = vsub.s32 %v805, %v807
    %v809 = vrot.slane %v794, %v808
    %v811 = vunpack.c.l.s4 1966171168
    %v812 = vunpack.c.0.s8 %v811
    %v813 = vlaneseq
    %v814 = vshrl.u32 %v813, 7
    %v815 = vsub.s32 %v812, %v814
    %v816 = vrot.slane %v801, %v815
    %v818 = vunpack.c.l.s4 1966171168
    %v819 = vunpack.c.0.s8 %v818
    %v820 = vlaneseq
    %v821 = vshrl.u32 %v820, 7
    %v822 = vsub.s32 %v819, %v821
    %v823 = vrot.slane %v802, %v822
    %v824 = vcombine.high %v809, %v809
    %v825 = vcombine.high %v823, %v823
    %v831 = vmul.f32 %v723, %v809
    %v832 = vmul.f32 %v737, %v823
    %v833 = vmul.f32 %v745, %v824
    %v834 = vmul.f32 %v747, %v825
    %v835 = vmul.f32 %v730, %v816
    %v836 = vmul.f32 %v744, %v809
    %v837 = vmul.f32 %v746, %v823
    %v838 = vmul.f32 %v748, %v824
    %v839 = vmul.f32 %v763, %v825
    %v840 = vmul.f32 %v770, %v816
    %v851 = vcombine.low %v831, %v832
    %v852 = vcombine.low %v833, %v834
    %v854 = vunpack.c.l.s4 1966171168
    %v855 = vunpack.c.0.s8 %v854
    %v856 = vlaneseq
    %v857 = vshrl.u32 %v856, 7
    %v858 = vsub.s32 %v855, %v857
    %v859 = vrot.slane %v851, %v858
    %v861 = vunpack.c.l.s4 1966171168
    %v862 = vunpack.c.0.s8 %v861
    %v863 = vlaneseq
    %v864 = vshrl.u32 %v863, 7
    %v865 = vsub.s32 %v862, %v864
    %v866 = vrot.slane %v852, %v865
    %v868 = vunpack.c.l.s4 1966171168
    %v869 = vunpack.c.0.s8 %v868
    %v870 = vlaneseq
    %v871 = vshrl.u32 %v870, 7
    %v872 = vsub.s32 %v869, %v871
    %v873 = vrot.slane %v835, %v872
    %v874 = vcombine.low %v859, %v866
    %v876 = vunpack.c.l.s4 1966171168
    %v877 = vunpack.c.0.s8 %v876
    %v878 = vlaneseq
    %v879 = vshrl.u32 %v878, 7
    %v880 = vsub.s32 %v877, %v879
    %v881 = vrot.slane %v874, %v880
    %v883 = vunpack.c.l.s4 1966171168
    %v884 = vunpack.c.0.s8 %v883
    %v885 = vlaneseq
    %v886 = vshrl.u32 %v885, 7
    %v887 = vsub.s32 %v884, %v886
    %v888 = vrot.slane %v873, %v887
    %v889 = vcombine.low %v881, %v888
    %v890 = vcombine.low %v836, %v837
    %v891 = vcombine.low %v838, %v839
    %v893 = vunpack.c.l.s4 1966171168
    %v894 = vunpack.c.0.s8 %v893
    %v895 = vlaneseq
    %v896 = vshrl.u32 %v895, 7
    %v897 = vsub.s32 %v894, %v896
    %v898 = vrot.slane %v890, %v897
    %v900 = vunpack.c.l.s4 1966171168
    %v901 = vunpack.c.0.s8 %v900
    %v902 = vlaneseq
    %v903 = vshrl.u32 %v902, 7
    %v904 = vsub.s32 %v901, %v903
    %v905 = vrot.slane %v891, %v904
    %v907 = vunpack.c.l.s4 1966171168
    %v908 = vunpack.c.0.s8 %v907
    %v909 = vlaneseq
    %v910 = vshrl.u32 %v909, 7
    %v911 = vsub.s32 %v908, %v910
    %v912 = vrot.slane %v840, %v911
    %v913 = vcombine.low %v898, %v905
    %v915 = vunpack.c.l.s4 1966171168
    %v916 = vunpack.c.0.s8 %v915
    %v917 = vlaneseq
    %v918 = vshrl.u32 %v917, 7
    %v919 = vsub.s32 %v916, %v918
    %v920 = vrot.slane %v913, %v919
    %v922 = vunpack.c.l.s4 1966171168
    %v923 = vunpack.c.0.s8 %v922
    %v924 = vlaneseq
    %v925 = vshrl.u32 %v924, 7
    %v926 = vsub.s32 %v923, %v925
    %v927 = vrot.slane %v912, %v926
    %v928 = vcombine.low %v920, %v927
    %v931 = vsel %vm320, %v889, 0.0
    %932 = vadd.xlane.f32.xlu0 %v931
    %v933 = vpop.xlane.xlu0 %932
    %v934 = vsel %vm320, %v928, 0.0
    %935 = vadd.xlane.f32.xlu0 %v934
    %v936 = vpop.xlane.xlu0 %935
    %v937 = vld [vmem:[#allocation2 + $0x238] sm:$0x1]
    %s939 = vtos %v937
    %v940 = vstv %s939
    %v942 = vadd.f32 %v933, %v940
    %v943 = vadd.f32 %v936, %v940
    %v946 = vlaneseq
    %v947 = vand.u32 %v946, 127
    %v948 = vlaneseq
    %v949 = vshrl.u32 %v948, 7
    %v950 = vsub.s32 %v947, %v949
    %v951 = vrot.slane %v942, %v950
    %v952 = vlaneseq
    %v953 = vshrl.u32 %v952, 7
    %v954 = vsub.s32 %v947, %v953
    %v955 = vrot.slane %v943, %v954
    %vm956 = vcmask 1041409
    %v957 = vsel %vm956, %v955, %v951
    %vm959 = vcmask 33792
    %v960 = vsel %vm959, %v957, -inf
    %961 = vmax.xlane.f32.xlu0 %v960
    %v962 = vpop.xlane.xlu0 %961
    %v964 = vlaneseq
    %v965 = vshrl.u32 %v964, 7
    %v966 = vsub.s32 0, %v965
    %v967 = vrot.slane %v962, %v966
    %v968 = vlaneseq
    %v969 = vshrl.u32 %v968, 7
    %v970 = vsub.s32 1, %v969
    %v971 = vrot.slane %v962, %v970
    %v974 = vsub.f32 %v942, %v967
    %v975 = vsub.f32 %v943, %v971
    %v976 = vmul.f32 %v974, 1.442695
    %v977 = vpow.pop %v976
    %v978 = vmul.f32 %v975, 1.442695
    %v979 = vpow.pop %v978
    %982 = vset.pattern.permute.xlu0 0
    %983 = vperm.xlu0 %982, %v977
    %v984 = vpop.permute.xlu0 %983
    %985 = vset.pattern.permute.xlu0 0
    %986 = vperm.xlu0 %985, %v979
    %v987 = vpop.permute.xlu0 %986
    %v988 = vlaneseq
    %v989 = vshrl.u32 %v988, 7
    %v990 = vsub.s32 %v947, %v989
    %v991 = vrot.slane %v984, %v990
    %v992 = vlaneseq
    %v993 = vshrl.u32 %v992, 7
    %v994 = vsub.s32 %v947, %v993
    %v995 = vrot.slane %v987, %v994
    %v996 = vsel %vm956, %v995, %v991
    %v998 = vsel %vm959, %v996, 0.0
    %999 = vadd.xlane.f32.xlu0 %v998
    %v1000 = vpop.xlane.xlu0 %999
    %v1002 = vlaneseq
    %v1003 = vshrl.u32 %v1002, 7
    %v1004 = vsub.s32 0, %v1003
    %v1005 = vrot.slane %v1000, %v1004
    %v1006 = vlaneseq
    %v1007 = vshrl.u32 %v1006, 7
    %v1008 = vsub.s32 1, %v1007
    %v1009 = vrot.slane %v1000, %v1008
    %v1012 = vrcp.pop %v1005
    %v1013 = vmul.f32 %v977, %v1012
    %v1014 = vrcp.pop %v1009
    %v1015 = vmul.f32 %v979, %v1014
    %1017 = vset.pattern.permute.xlu0 0
    %1018 = vperm.xlu0 %1017, %v1013
    %v1019 = vpop.permute.xlu0 %1018
    %1022 = vset.pattern.permute.xlu0 0
    %1023 = vperm.xlu0 %1022, %v1015
    %v1024 = vpop.permute.xlu0 %1023
    %v1026 = vmul.f32 %v1019, %v278
    %v1027 = vmul.f32 %v1024, %v317
    %v1028 = vsel %vm320, %v1026, 0.0
    %v1029 = vrot.slane %v1028, 4
    %v1030 = vadd.f32 %v1028, %v1029
    %v1031 = vrot.slane %v1030, 2
    %v1032 = vadd.f32 %v1030, %v1031
    %v1033 = vrot.slane %v1032, 1
    %v1034 = vadd.f32 %v1032, %v1033
    %v1035 = vsel %vm320, %v1027, 0.0
    %v1036 = vrot.slane %v1035, 4
    %v1037 = vadd.f32 %v1035, %v1036
    %v1038 = vrot.slane %v1037, 2
    %v1039 = vadd.f32 %v1037, %v1038
    %v1040 = vrot.slane %v1039, 1
    %v1041 = vadd.f32 %v1039, %v1040
    %v1042 = vld [vmem:[#allocation2 + $0x240] sm:$0x1f]
    %v1043 = vpack.c.bf16 %v30, %v30
    %v1044 = vpack.c.bf16 %v31, %v31
    %v1045 = vpack.c.bf16 %v1042, %v1042
    %v1046 = vld [vmem:[#allocation2 + $0x248] sm:$0xff]
    %v1047 = vld [vmem:[#allocation2 + $0x250] sm:$0xff]
    %v1048 = vld [vmem:[#allocation2 + $0x258] sm:$0xff]
    %v1049 = vld [vmem:[#allocation2 + $0x260] sm:$0xff]
    %v1050 = vld [vmem:[#allocation2 + $0x268] sm:$0xff]
    %v1051 = vld [vmem:[#allocation2 + $0x270] sm:$0xff]
    %v1052 = vld [vmem:[#allocation2 + $0x278] sm:$0xff]
    %v1053 = vld [vmem:[#allocation2 + $0x280] sm:$0xff]
    %v1054 = vld [vmem:[#allocation2 + $0x288] sm:$0xff]
    %v1055 = vld [vmem:[#allocation2 + $0x290] sm:$0xff]
    %v1056 = vld [vmem:[#allocation2 + $0x298] sm:$0xff]
    %v1057 = vld [vmem:[#allocation2 + $0x2a0] sm:$0xff]
    %v1058 = vld [vmem:[#allocation2 + $0x2a8] sm:$0xff]
    %v1059 = vld [vmem:[#allocation2 + $0x2b0] sm:$0xff]
    %v1060 = vld [vmem:[#allocation2 + $0x2b8] sm:$0xff]
    %v1061 = vld [vmem:[#allocation2 + $0x2c0] sm:$0xff]
    %v1062 = vpack.c.bf16 %v1034, %v1034
    %v1063 = vpack.c.bf16 %v1041, %v1041
    %v1064 = vpack.c.bf16 %v1047, %v1046
    %v1065 = vpack.c.bf16 %v1049, %v1048
    %v1066 = vpack.c.bf16 %v1051, %v1050
    %v1067 = vpack.c.bf16 %v1053, %v1052
    %v1068 = vpack.c.bf16 %v1055, %v1054
    %v1069 = vpack.c.bf16 %v1057, %v1056
    %v1070 = vpack.c.bf16 %v1059, %v1058
    %v1071 = vpack.c.bf16 %v1061, %v1060
    %v1074 = vunpack.c.l.b16 %v1062
    %v1075 = vunpack.c.l.b16 %v1063
    %v1076 = vsel %vm956, %v1075, %v1074
    %v1077 = vpack.c.b16 %v1076, %v1076
    %1079 = vmatprep.subr.bf16.mxu0 0
    %1080 = vmatpush1.bf16.msra.mxu0 %v1064
    %1081 = vmatprep.subr.bf16.mxu0 0
    %1082 = vmatpush1.bf16.msra.mxu0 %v1065
    %1083 = vmatprep.subr.bf16.mxu0 0
    %1084 = vmatpush1.bf16.msra.mxu0 %v1066
    %1085 = vmatprep.subr.bf16.mxu0 0
    %1086 = vmatpush1.bf16.msra.mxu0 %v1067
    %1087 = vmatprep.subr.bf16.mxu0 0
    %1088 = vmatpush1.bf16.msra.mxu0 %v1068
    %1089 = vmatprep.subr.bf16.mxu0 0
    %1090 = vmatpush1.bf16.msra.mxu0 %v1069
    %1091 = vmatprep.subr.bf16.mxu0 0
    %1092 = vmatpush1.bf16.msra.mxu0 %v1070
    %1093 = vmatprep.subr.bf16.mxu0 0
    %1094 = vmatpush1.bf16.msra.mxu0 %v1071
    %1095 = vmatprep.subr.bf16.mxu0 0
    %1096 = vmatpush1.bf16.msra.mxu0 0
    %1097 = vmatprep.subr.bf16.mxu0 0
    %1098 = vmatpush1.bf16.msra.mxu0 0
    %1099 = vmatprep.subr.bf16.mxu0 0
    %1100 = vmatpush1.bf16.msra.mxu0 0
    %1101 = vmatprep.subr.bf16.mxu0 0
    %1102 = vmatpush1.bf16.msra.mxu0 0
    %1103 = vmatprep.subr.bf16.mxu0 0
    %1104 = vmatpush1.bf16.msra.mxu0 0
    %1105 = vmatprep.subr.bf16.mxu0 0
    %1106 = vmatpush1.bf16.msra.mxu0 0
    %1107 = vmatprep.subr.bf16.mxu0 0
    %1108 = vmatpush1.bf16.msra.mxu0 0
    %1109 = vmatprep.subr.bf16.mxu0 0
    %1110 = vmatpush1.bf16.msra.mxu0 0
    %1111 = vmatprep.mubr.bf16.mxu0 0
    %1112 = vmatmul.mubr.bf16.gmra.mrb[0].mxu0 %v1077
    %v1113 = vpop.f32.mrb[0].mxu0
    %v1114 = vadd.f32 0.0, %v1113
    %v1115 = vpop.f32.mrb[0].mxu0
    %v1116 = vpop.f32.mrb[0].mxu0
    %v1117 = vpop.f32.mrb[0].mxu0
    %1118 = vdwg.mxu0
    %v1121 = vunpack.c.l.b16 %v1043
    %v1122 = vunpack.c.l.b16 %v1044
    %v1123 = vrot.slane %v1122, 7
    %v1124 = vsel %vm956, %v1123, %v1121
    %v1125 = vpack.c.b16 %v1124, %v1124
    %vm1126 = vcmask 39936
    %v1128 = vsel %vm1126, %v1125, 0
    %vm1130 = vcmask 1041408
    %vm1131 = vcmask 1042432
    %v1132 = vsel %vm1130, 4294967295, 65535
    %v1133 = vsel %vm1131, %v1132, 0
    %v1135 = vand.u32 %v1045, %v1133
    %1137 = vmatprep.subr.bf16.mxu0 0
    %1138 = vmatpush1.bf16.msra.mxu0 %v1135
    %1139 = vmatprep.subr.bf16.mxu0 0
    %1140 = vmatpush1.bf16.msra.mxu0 0
    %1141 = vmatprep.subr.bf16.mxu0 0
    %1142 = vmatpush1.bf16.msra.mxu0 0
    %1143 = vmatprep.subr.bf16.mxu0 0
    %1144 = vmatpush1.bf16.msra.mxu0 0
    %1145 = vmatprep.subr.bf16.mxu0 0
    %1146 = vmatpush1.bf16.msra.mxu0 0
    %1147 = vmatprep.subr.bf16.mxu0 0
    %1148 = vmatpush1.bf16.msra.mxu0 0
    %1149 = vmatprep.subr.bf16.mxu0 0
    %1150 = vmatpush1.bf16.msra.mxu0 0
    %1151 = vmatprep.subr.bf16.mxu0 0
    %1152 = vmatpush1.bf16.msra.mxu0 0
    %1153 = vmatprep.subr.bf16.mxu0 0
    %1154 = vmatpush1.bf16.msra.mxu0 0
    %1155 = vmatprep.subr.bf16.mxu0 0
    %1156 = vmatpush1.bf16.msra.mxu0 0
    %1157 = vmatprep.subr.bf16.mxu0 0
    %1158 = vmatpush1.bf16.msra.mxu0 0
    %1159 = vmatprep.subr.bf16.mxu0 0
    %1160 = vmatpush1.bf16.msra.mxu0 0
    %1161 = vmatprep.subr.bf16.mxu0 0
    %1162 = vmatpush1.bf16.msra.mxu0 0
    %1163 = vmatprep.subr.bf16.mxu0 0
    %1164 = vmatpush1.bf16.msra.mxu0 0
    %1165 = vmatprep.subr.bf16.mxu0 0
    %1166 = vmatpush1.bf16.msra.mxu0 0
    %1167 = vmatprep.subr.bf16.mxu0 0
    %1168 = vmatpush1.bf16.msra.mxu0 0
    %1169 = vmatprep.mubr.bf16.mxu0 0
    %1170 = vmatmul.mubr.bf16.gmra.mrb[0].mxu0 %v1128
    %v1171 = vpop.f32.mrb[0].mxu0
    %v1172 = vadd.f32 %v1114, %v1171
    %v1173 = vpop.f32.mrb[0].mxu0
    %v1174 = vpop.f32.mrb[0].mxu0
    %v1175 = vpop.f32.mrb[0].mxu0
    %1176 = vdwg.mxu0
    %v1177 = vld [vmem:[#allocation2 + $0x2c8] sm:$0x1]
    %v1178 = vlaneseq
    %v1179 = vshrl.u32 %v1178, 7
    %v1180 = vsub.s32 0, %v1179
    %v1181 = vrot.slane %v1177, %v1180
    %v1182 = vadd.f32 %v1172, %v1181
    %v1183 = vmax.f32 %v1182, 0.0
    %v1184 = vld [vmem:[#allocation2 + $0x2d0] sm:$0xff]
    %v1185 = vld [vmem:[#allocation2 + $0x2d8] sm:$0xff]
    %v1186 = vld [vmem:[#allocation2 + $0x2e0] sm:$0xff]
    %v1187 = vld [vmem:[#allocation2 + $0x2e8] sm:$0xff]
    %v1188 = vld [vmem:[#allocation2 + $0x2f0] sm:$0xff]
    %v1189 = vld [vmem:[#allocation2 + $0x2f8] sm:$0xff]
    %v1190 = vld [vmem:[#allocation2 + $0x300] sm:$0xff]
    %v1191 = vld [vmem:[#allocation2 + $0x308] sm:$0xff]
    %v1192 = vld [vmem:[#allocation2 + $0x310] sm:$0xff]
    %v1193 = vld [vmem:[#allocation2 + $0x318] sm:$0xff]
    %v1194 = vld [vmem:[#allocation2 + $0x320] sm:$0xff]
    %v1195 = vld [vmem:[#allocation2 + $0x328] sm:$0xff]
    %v1196 = vld [vmem:[#allocation2 + $0x330] sm:$0xff]
    %v1197 = vld [vmem:[#allocation2 + $0x338] sm:$0xff]
    %v1198 = vld [vmem:[#allocation2 + $0x340] sm:$0xff]
    %v1199 = vld [vmem:[#allocation2 + $0x348] sm:$0xff]
    %v1200 = vpack.c.bf16 %v1183, %v1183
    %v1201 = vpack.c.bf16 %v1185, %v1184
    %v1202 = vpack.c.bf16 %v1187, %v1186
    %v1203 = vpack.c.bf16 %v1189, %v1188
    %v1204 = vpack.c.bf16 %v1191, %v1190
    %v1205 = vpack.c.bf16 %v1193, %v1192
    %v1206 = vpack.c.bf16 %v1195, %v1194
    %v1207 = vpack.c.bf16 %v1197, %v1196
    %v1208 = vpack.c.bf16 %v1199, %v1198
    %v1209 = vld [vmem:[#allocation2 + $0x350] sm:$0x1]
    %v1210 = vlaneseq
    %v1211 = vshrl.u32 %v1210, 7
    %v1212 = vsub.s32 0, %v1211
    %v1213 = vrot.slane %v1209, %v1212
    %1214 = vmatprep.subr.bf16.mxu0 0
    %1215 = vmatpush1.bf16.msra.mxu0 %v1201
    %1216 = vmatprep.subr.bf16.mxu0 0
    %1217 = vmatpush1.bf16.msra.mxu0 %v1202
    %1218 = vmatprep.subr.bf16.mxu0 0
    %1219 = vmatpush1.bf16.msra.mxu0 %v1203
    %1220 = vmatprep.subr.bf16.mxu0 0
    %1221 = vmatpush1.bf16.msra.mxu0 %v1204
    %1222 = vmatprep.subr.bf16.mxu0 0
    %1223 = vmatpush1.bf16.msra.mxu0 %v1205
    %1224 = vmatprep.subr.bf16.mxu0 0
    %1225 = vmatpush1.bf16.msra.mxu0 %v1206
    %1226 = vmatprep.subr.bf16.mxu0 0
    %1227 = vmatpush1.bf16.msra.mxu0 %v1207
    %1228 = vmatprep.subr.bf16.mxu0 0
    %1229 = vmatpush1.bf16.msra.mxu0 %v1208
    %1230 = vmatprep.subr.bf16.mxu0 0
    %1231 = vmatpush1.bf16.msra.mxu0 0
    %1232 = vmatprep.subr.bf16.mxu0 0
    %1233 = vmatpush1.bf16.msra.mxu0 0
    %1234 = vmatprep.subr.bf16.mxu0 0
    %1235 = vmatpush1.bf16.msra.mxu0 0
    %1236 = vmatprep.subr.bf16.mxu0 0
    %1237 = vmatpush1.bf16.msra.mxu0 0
    %1238 = vmatprep.subr.bf16.mxu0 0
    %1239 = vmatpush1.bf16.msra.mxu0 0
    %1240 = vmatprep.subr.bf16.mxu0 0
    %1241 = vmatpush1.bf16.msra.mxu0 0
    %1242 = vmatprep.subr.bf16.mxu0 0
    %1243 = vmatpush1.bf16.msra.mxu0 0
    %1244 = vmatprep.subr.bf16.mxu0 0
    %1245 = vmatpush1.bf16.msra.mxu0 0
    %1246 = vmatprep.mubr.bf16.mxu0 0
    %1247 = vmatmul.mubr.bf16.gmra.mrb[0].mxu0 %v1200
    %v1248 = vpop.f32.mrb[0].mxu0
    %v1249 = vadd.f32 %v1213, %v1248
    %v1250 = vpop.f32.mrb[0].mxu0
    %v1251 = vpop.f32.mrb[0].mxu0
    %v1252 = vpop.f32.mrb[0].mxu0
    %1253 = vdwg.mxu0
    %v1254 = vmul.f32 %v30, %v30
    %v1255 = vmul.f32 %v31, %v31
    %1258 = vrot.lane.b32.xlu0 %v1254, 127
    %v1259 = vpop.permute.xlu0 %1258
    %1260 = vrot.lane.b32.xlu0 %v1255, 127
    %v1261 = vpop.permute.xlu0 %1260
    %v1264 = vadd.f32 %v1254, %v1259
    %v1265 = vadd.f32 %v1255, %v1261
    %v1266 = vrsqrt.pop %v1264
    %v1267 = vmul.f32 %v1264, %v1266
    %vm1268 = vcmp.eq.f32.partialorder %v1264, inf
    %v1269 = vsel %vm1268, %v1264, %v1267
    %vm1270 = vcmp.eq.f32.partialorder %v1264, 0.0
    %v1271 = vand.u32 %v1264, 2147483648
    %v1272 = vsel %vm1270, %v1271, %v1269
    %v1273 = vrsqrt.pop %v1265
    %v1274 = vmul.f32 %v1265, %v1273
    %vm1275 = vcmp.eq.f32.partialorder %v1265, inf
    %v1276 = vsel %vm1275, %v1265, %v1274
    %vm1277 = vcmp.eq.f32.partialorder %v1265, 0.0
    %v1278 = vand.u32 %v1265, 2147483648
    %v1279 = vsel %vm1277, %v1278, %v1276
    %v1280 = vmul.f32 %v30, 0.25
    %v1281 = vmul.f32 %v31, 0.25
    %1284 = vrot.lane.b32.xlu0 %v30, 2
    %v1285 = vpop.permute.xlu0 %1284
    %1286 = vrot.lane.b32.xlu0 %v31, 2
    %v1287 = vpop.permute.xlu0 %1286
    %v1290 = vadd.f32 %v1280, %v1285
    %v1291 = vadd.f32 %v1281, %v1287
    %v1292 = vmul.f32 %v1290, %v1290
    %v1293 = vmul.f32 %v1291, %v1291
    %1296 = vrot.lane.b32.xlu0 %v1292, 127
    %v1297 = vpop.permute.xlu0 %1296
    %1298 = vrot.lane.b32.xlu0 %v1293, 127
    %v1299 = vpop.permute.xlu0 %1298
    %v1302 = vadd.f32 %v1292, %v1297
    %v1303 = vadd.f32 %v1293, %v1299
    %v1304 = vrsqrt.pop %v1302
    %v1305 = vmul.f32 %v1302, %v1304
    %vm1306 = vcmp.eq.f32.partialorder %v1302, inf
    %v1307 = vsel %vm1306, %v1302, %v1305
    %vm1308 = vcmp.eq.f32.partialorder %v1302, 0.0
    %v1309 = vand.u32 %v1302, 2147483648
    %v1310 = vsel %vm1308, %v1309, %v1307
    %v1311 = vrsqrt.pop %v1303
    %v1312 = vmul.f32 %v1303, %v1311
    %vm1313 = vcmp.eq.f32.partialorder %v1303, inf
    %v1314 = vsel %vm1313, %v1303, %v1312
    %vm1315 = vcmp.eq.f32.partialorder %v1303, 0.0
    %v1316 = vand.u32 %v1303, 2147483648
    %v1317 = vsel %vm1315, %v1316, %v1314
    %v1318 = vmul.f32 %v1272, 0.8
    %v1319 = vmul.f32 %v1279, 0.8
    %v1320 = vmul.f32 %v1310, 0.2
    %v1321 = vmul.f32 %v1317, 0.2
    %1324 = vrot.lane.b32.xlu0 %v1320, 126
    %v1325 = vpop.permute.xlu0 %1324
    %1326 = vrot.lane.b32.xlu0 %v1321, 126
    %v1327 = vpop.permute.xlu0 %1326
    %v1330 = vadd.f32 %v1318, %v1325
    %v1331 = vadd.f32 %v1319, %v1327
    %vm1332 = vcmp.eq.f32.partialorder %v30, 0.0
    %vm1333 = vcmp.eq.f32.partialorder %v31, 0.0
    %v1334 = vsel %vm1332, 1, 0
    %v1335 = vsel %vm1333, 1, 0
    %1336 = vrot.lane.b32.xlu0 %v1334, 127
    %v1337 = vpop.permute.xlu0 %1336
    %1338 = vrot.lane.b32.xlu0 %v1335, 127
    %v1339 = vpop.permute.xlu0 %1338
    %vm1340 = vcmp.ne.s32.totalorder %v1337, 0
    %vm1341 = vcmp.ne.s32.totalorder %v1339, 0
    %vm1342 = vmor %vm1332, %vm1340
    %vm1343 = vmor %vm1333, %vm1341
    %v1344 = vsel %vm1342, inf, %v1330
    %v1345 = vsel %vm1343, inf, %v1331
    %v1346 = vlaneseq
    %v1347 = vshrl.u32 %v1346, 7
    %1349 = vset.pattern.permute.xlu0 5
    %1350 = vperm.xlu0 %1349, %v1344
    %v1351 = vpop.permute.xlu0 %1350
    %1353 = vset.pattern.permute.xlu0 5
    %1354 = vperm.xlu0 %1353, %v1345
    %v1355 = vpop.permute.xlu0 %1354
    %v1356 = vlaneseq
    %v1357 = vshrl.u32 %v1356, 7
    %v1358 = vsub.s32 0, %v1357
    %v1359 = vrot.slane %v1351, %v1358
    %v1360 = vlaneseq
    %v1361 = vshrl.u32 %v1360, 7
    %v1362 = vsub.s32 1, %v1361
    %v1363 = vrot.slane %v1351, %v1362
    %v1364 = vlaneseq
    %v1365 = vshrl.u32 %v1364, 7
    %v1366 = vsub.s32 2, %v1365
    %v1367 = vrot.slane %v1351, %v1366
    %v1368 = vlaneseq
    %v1369 = vshrl.u32 %v1368, 7
    %v1370 = vsub.s32 3, %v1369
    %v1371 = vrot.slane %v1351, %v1370
    %v1372 = vlaneseq
    %v1373 = vshrl.u32 %v1372, 7
    %v1374 = vsub.s32 4, %v1373
    %v1375 = vrot.slane %v1351, %v1374
    %v1376 = vlaneseq
    %v1377 = vshrl.u32 %v1376, 7
    %v1378 = vsub.s32 0, %v1377
    %v1379 = vrot.slane %v1355, %v1378
    %v1380 = vlaneseq
    %v1381 = vshrl.u32 %v1380, 7
    %v1382 = vsub.s32 1, %v1381
    %v1383 = vrot.slane %v1355, %v1382
    %v1384 = vlaneseq
    %v1385 = vshrl.u32 %v1384, 7
    %v1386 = vsub.s32 2, %v1385
    %v1387 = vrot.slane %v1355, %v1386
    %v1388 = vlaneseq
    %v1389 = vshrl.u32 %v1388, 7
    %v1390 = vsub.s32 3, %v1389
    %v1391 = vrot.slane %v1355, %v1390
    %v1392 = vlaneseq
    %v1393 = vshrl.u32 %v1392, 7
    %v1394 = vsub.s32 4, %v1393
    %v1395 = vrot.slane %v1355, %v1394
    %vm1406 = vcmp.gt.f32.partialorder %v1344, %v1359
    %vm1407 = vcmp.gt.f32.partialorder %v1344, %v1363
    %vm1408 = vcmp.gt.f32.partialorder %v1344, %v1367
    %vm1409 = vcmp.gt.f32.partialorder %v1344, %v1371
    %vm1410 = vcmp.gt.f32.partialorder %v1344, %v1375
    %vm1411 = vcmp.gt.f32.partialorder %v1345, %v1379
    %vm1412 = vcmp.gt.f32.partialorder %v1345, %v1383
    %vm1413 = vcmp.gt.f32.partialorder %v1345, %v1387
    %vm1414 = vcmp.gt.f32.partialorder %v1345, %v1391
    %vm1415 = vcmp.gt.f32.partialorder %v1345, %v1395
    %v1416 = vsel %vm1406, 1, 0
    %v1417 = vsel %vm1407, 1, 0
    %v1418 = vsel %vm1408, 1, 0
    %v1419 = vsel %vm1409, 1, 0
    %v1420 = vsel %vm1410, 1, 0
    %v1421 = vsel %vm1411, 1, 0
    %v1422 = vsel %vm1412, 1, 0
    %v1423 = vsel %vm1413, 1, 0
    %v1424 = vsel %vm1414, 1, 0
    %v1425 = vsel %vm1415, 1, 0
    %vm1426 = vcmp.eq.f32.partialorder %v1344, %v1359
    %vm1427 = vcmp.eq.f32.partialorder %v1344, %v1363
    %vm1428 = vcmp.eq.f32.partialorder %v1344, %v1367
    %vm1429 = vcmp.eq.f32.partialorder %v1344, %v1371
    %vm1430 = vcmp.eq.f32.partialorder %v1344, %v1375
    %vm1431 = vcmp.eq.f32.partialorder %v1345, %v1379
    %vm1432 = vcmp.eq.f32.partialorder %v1345, %v1383
    %vm1433 = vcmp.eq.f32.partialorder %v1345, %v1387
    %vm1434 = vcmp.eq.f32.partialorder %v1345, %v1391
    %vm1435 = vcmp.eq.f32.partialorder %v1345, %v1395
    %vm1436 = vcmp.lt.s32.totalorder %v947, %v1347
    %v1437 = vsel %vm1436, 1, 0
    %v1438 = vlaneseq
    %v1439 = vshrl.u32 %v1438, 7
    %v1440 = vsub.s32 0, %v1439
    %v1441 = vrot.slane %v1437, %v1440
    %1443 = vbcast.lane.b32.xlu0 %v1441, 256
    %v1444 = vpop.permute.xlu0 %1443
    %v1445 = vlaneseq
    %v1446 = vshrl.u32 %v1445, 7
    %v1447 = vsub.s32 1, %v1446
    %v1448 = vrot.slane %v1437, %v1447
    %1450 = vbcast.lane.b32.xlu0 %v1448, 256
    %v1451 = vpop.permute.xlu0 %1450
    %v1452 = vlaneseq
    %v1453 = vshrl.u32 %v1452, 7
    %v1454 = vsub.s32 2, %v1453
    %v1455 = vrot.slane %v1437, %v1454
    %1457 = vbcast.lane.b32.xlu0 %v1455, 256
    %v1458 = vpop.permute.xlu0 %1457
    %v1459 = vlaneseq
    %v1460 = vshrl.u32 %v1459, 7
    %v1461 = vsub.s32 3, %v1460
    %v1462 = vrot.slane %v1437, %v1461
    %1464 = vbcast.lane.b32.xlu0 %v1462, 256
    %v1465 = vpop.permute.xlu0 %1464
    %v1466 = vlaneseq
    %v1467 = vshrl.u32 %v1466, 7
    %v1468 = vsub.s32 4, %v1467
    %v1469 = vrot.slane %v1437, %v1468
    %1471 = vbcast.lane.b32.xlu0 %v1469, 256
    %v1472 = vpop.permute.xlu0 %1471
    %vm1473 = vcmp.ne.s32.totalorder %v1444, 0
    %vm1474 = vcmp.ne.s32.totalorder %v1451, 0
    %vm1475 = vcmp.ne.s32.totalorder %v1458, 0
    %vm1476 = vcmp.ne.s32.totalorder %v1465, 0
    %vm1477 = vcmp.ne.s32.totalorder %v1472, 0
    %vm1478 = vmand %vm1426, %vm1473
    %vm1479 = vmand %vm1427, %vm1474
    %vm1480 = vmand %vm1428, %vm1475
    %vm1481 = vmand %vm1429, %vm1476
    %vm1482 = vmand %vm1430, %vm1477
    %vm1483 = vmand %vm1431, %vm1473
    %vm1484 = vmand %vm1432, %vm1474
    %vm1485 = vmand %vm1433, %vm1475
    %vm1486 = vmand %vm1434, %vm1476
    %vm1487 = vmand %vm1435, %vm1477
    %v1488 = vsel %vm1478, 1, 0
    %v1489 = vsel %vm1479, 1, 0
    %v1490 = vsel %vm1480, 1, 0
    %v1491 = vsel %vm1481, 1, 0
    %v1492 = vsel %vm1482, 1, 0
    %v1493 = vsel %vm1483, 1, 0
    %v1494 = vsel %vm1484, 1, 0
    %v1495 = vsel %vm1485, 1, 0
    %v1496 = vsel %vm1486, 1, 0
    %v1497 = vsel %vm1487, 1, 0
    %v1498 = vadd.s32 %v1416, %v1488
    %v1499 = vadd.s32 %v1417, %v1489
    %v1500 = vadd.s32 %v1418, %v1490
    %v1501 = vadd.s32 %v1419, %v1491
    %v1502 = vadd.s32 %v1420, %v1492
    %v1503 = vadd.s32 %v1421, %v1493
    %v1504 = vadd.s32 %v1422, %v1494
    %v1505 = vadd.s32 %v1423, %v1495
    %v1506 = vadd.s32 %v1424, %v1496
    %v1507 = vadd.s32 %v1425, %v1497
    %1508 = vset.pattern.permute.xlu0 5
    %1509 = vperm.xlu0 %1508, %v1498
    %v1510 = vpop.permute.xlu0 %1509
    %1511 = vset.pattern.permute.xlu0 5
    %1512 = vperm.xlu0 %1511, %v1499
    %v1513 = vpop.permute.xlu0 %1512
    %1514 = vset.pattern.permute.xlu0 5
    %1515 = vperm.xlu0 %1514, %v1500
    %v1516 = vpop.permute.xlu0 %1515
    %1517 = vset.pattern.permute.xlu0 5
    %1518 = vperm.xlu0 %1517, %v1501
    %v1519 = vpop.permute.xlu0 %1518
    %1520 = vset.pattern.permute.xlu0 5
    %1521 = vperm.xlu0 %1520, %v1502
    %v1522 = vpop.permute.xlu0 %1521
    %1523 = vset.pattern.permute.xlu0 5
    %1524 = vperm.xlu0 %1523, %v1503
    %v1525 = vpop.permute.xlu0 %1524
    %1526 = vset.pattern.permute.xlu0 5
    %1527 = vperm.xlu0 %1526, %v1504
    %v1528 = vpop.permute.xlu0 %1527
    %1529 = vset.pattern.permute.xlu0 5
    %1530 = vperm.xlu0 %1529, %v1505
    %v1531 = vpop.permute.xlu0 %1530
    %1532 = vset.pattern.permute.xlu0 5
    %1533 = vperm.xlu0 %1532, %v1506
    %v1534 = vpop.permute.xlu0 %1533
    %1535 = vset.pattern.permute.xlu0 5
    %1536 = vperm.xlu0 %1535, %v1507
    %v1537 = vpop.permute.xlu0 %1536
    %v1538 = vlaneseq
    %v1539 = vshrl.u32 %v1538, 7
    %v1540 = vsub.s32 %v947, %v1539
    %v1541 = vrot.slane %v1510, %v1540
    %v1542 = vlaneseq
    %v1543 = vshrl.u32 %v1542, 7
    %v1544 = vsub.s32 %v947, %v1543
    %v1545 = vrot.slane %v1513, %v1544
    %v1546 = vlaneseq
    %v1547 = vshrl.u32 %v1546, 7
    %v1548 = vsub.s32 %v947, %v1547
    %v1549 = vrot.slane %v1516, %v1548
    %v1550 = vlaneseq
    %v1551 = vshrl.u32 %v1550, 7
    %v1552 = vsub.s32 %v947, %v1551
    %v1553 = vrot.slane %v1519, %v1552
    %v1554 = vlaneseq
    %v1555 = vshrl.u32 %v1554, 7
    %v1556 = vsub.s32 %v947, %v1555
    %v1557 = vrot.slane %v1522, %v1556
    %v1558 = vlaneseq
    %v1559 = vshrl.u32 %v1558, 7
    %v1560 = vsub.s32 %v947, %v1559
    %v1561 = vrot.slane %v1525, %v1560
    %v1562 = vlaneseq
    %v1563 = vshrl.u32 %v1562, 7
    %v1564 = vsub.s32 %v947, %v1563
    %v1565 = vrot.slane %v1528, %v1564
    %v1566 = vlaneseq
    %v1567 = vshrl.u32 %v1566, 7
    %v1568 = vsub.s32 %v947, %v1567
    %v1569 = vrot.slane %v1531, %v1568
    %v1570 = vlaneseq
    %v1571 = vshrl.u32 %v1570, 7
    %v1572 = vsub.s32 %v947, %v1571
    %v1573 = vrot.slane %v1534, %v1572
    %v1574 = vlaneseq
    %v1575 = vshrl.u32 %v1574, 7
    %v1576 = vsub.s32 %v947, %v1575
    %v1577 = vrot.slane %v1537, %v1576
    %v1578 = vsel %vm956, %v1545, %v1541
    %vm1579 = vcmask 1042434
    %v1580 = vsel %vm1579, %v1549, %v1578
    %vm1581 = vcmask 1043459
    %v1582 = vsel %vm1581, %v1553, %v1580
    %vm1583 = vcmask 1044484
    %v1584 = vsel %vm1583, %v1557, %v1582
    %v1585 = vsel %vm956, %v1565, %v1561
    %v1586 = vsel %vm1579, %v1569, %v1585
    %v1587 = vsel %vm1581, %v1573, %v1586
    %v1588 = vsel %vm1583, %v1577, %v1587
    %vm1589 = vcmask 36864
    %v1590 = vsel %vm1589, %v1584, 0
    %v1591 = vand.u32 %v1590, 65535
    %v1592 = vshrl.u32 %v1590, 16
    %v1593 = vcvt.s32.f32 %v1591
    %v1594 = vcvt.s32.f32 %v1592
    %1595 = vadd.xlane.f32.xlu0 %v1593
    %v1596 = vpop.xlane.xlu0 %1595
    %1597 = vadd.xlane.f32.xlu0 %v1594
    %v1598 = vpop.xlane.xlu0 %1597
    %v1599 = vcvt.f32.s32 %v1596
    %v1600 = vcvt.f32.s32 %v1598
    %v1601 = vshll.u32 %v1600, 16
    %v1602 = vadd.s32 %v1601, %v1599
    %v1603 = vsel %vm1589, %v1588, 0
    %v1604 = vand.u32 %v1603, 65535
    %v1605 = vshrl.u32 %v1603, 16
    %v1606 = vcvt.s32.f32 %v1604
    %v1607 = vcvt.s32.f32 %v1605
    %1608 = vadd.xlane.f32.xlu0 %v1606
    %v1609 = vpop.xlane.xlu0 %1608
    %1610 = vadd.xlane.f32.xlu0 %v1607
    %v1611 = vpop.xlane.xlu0 %1610
    %v1612 = vcvt.f32.s32 %v1609
    %v1613 = vcvt.f32.s32 %v1611
    %v1614 = vshll.u32 %v1613, 16
    %v1615 = vadd.s32 %v1614, %v1612
    %vm1616 = vcmp.eq.s32.totalorder %v1602, 0
    %vm1617 = vcmp.eq.s32.totalorder %v1615, 0
    %v1618 = vsel %vm1616, 1, 0
    %v1619 = vsel %vm1617, 1, 0
    %vm1620 = vcmp.eq.s32.totalorder %v1618, 1
    %vm1621 = vcmp.eq.s32.totalorder %v1619, 1
    %v1622 = vsel %vm1620, %v30, 0.0
    %v1623 = vsel %vm1621, %v31, 0.0
    %vm1624 = vcmask 94248
    %v1625 = vsel %vm1624, %v1622, 0.0
    %v1626 = vrot.slane %v1625, 4
    %v1627 = vadd.f32 %v1625, %v1626
    %v1628 = vrot.slane %v1627, 2
    %v1629 = vadd.f32 %v1627, %v1628
    %v1630 = vrot.slane %v1629, 1
    %v1631 = vadd.f32 %v1629, %v1630
    %v1632 = vsel %vm1624, %v1623, 0.0
    %v1633 = vrot.slane %v1632, 4
    %v1634 = vadd.f32 %v1632, %v1633
    %v1635 = vrot.slane %v1634, 2
    %v1636 = vadd.f32 %v1634, %v1635
    %v1637 = vrot.slane %v1636, 1
    %v1638 = vadd.f32 %v1636, %v1637
    %vm1639 = vcmp.eq.s32.totalorder %v1602, 1
    %vm1640 = vcmp.eq.s32.totalorder %v1615, 1
    %v1641 = vsel %vm1639, 1, 0
    %v1642 = vsel %vm1640, 1, 0
    %vm1643 = vcmp.eq.s32.totalorder %v1641, 1
    %vm1644 = vcmp.eq.s32.totalorder %v1642, 1
    %v1645 = vsel %vm1643, %v30, 0.0
    %v1646 = vsel %vm1644, %v31, 0.0
    %v1647 = vsel %vm1624, %v1645, 0.0
    %v1648 = vrot.slane %v1647, 4
    %v1649 = vadd.f32 %v1647, %v1648
    %v1650 = vrot.slane %v1649, 2
    %v1651 = vadd.f32 %v1649, %v1650
    %v1652 = vrot.slane %v1651, 1
    %v1653 = vadd.f32 %v1651, %v1652
    %v1654 = vsel %vm1624, %v1646, 0.0
    %v1655 = vrot.slane %v1654, 4
    %v1656 = vadd.f32 %v1654, %v1655
    %v1657 = vrot.slane %v1656, 2
    %v1658 = vadd.f32 %v1656, %v1657
    %v1659 = vrot.slane %v1658, 1
    %v1660 = vadd.f32 %v1658, %v1659
    %vm1661 = vcmp.eq.s32.totalorder %v1602, 2
    %vm1662 = vcmp.eq.s32.totalorder %v1615, 2
    %v1663 = vsel %vm1661, 1, 0
    %v1664 = vsel %vm1662, 1, 0
    %vm1665 = vcmp.eq.s32.totalorder %v1663, 1
    %vm1666 = vcmp.eq.s32.totalorder %v1664, 1
    %v1667 = vsel %vm1665, %v30, 0.0
    %v1668 = vsel %vm1666, %v31, 0.0
    %v1669 = vsel %vm1624, %v1667, 0.0
    %v1670 = vrot.slane %v1669, 4
    %v1671 = vadd.f32 %v1669, %v1670
    %v1672 = vrot.slane %v1671, 2
    %v1673 = vadd.f32 %v1671, %v1672
    %v1674 = vrot.slane %v1673, 1
    %v1675 = vadd.f32 %v1673, %v1674
    %v1676 = vsel %vm1624, %v1668, 0.0
    %v1677 = vrot.slane %v1676, 4
    %v1678 = vadd.f32 %v1676, %v1677
    %v1679 = vrot.slane %v1678, 2
    %v1680 = vadd.f32 %v1678, %v1679
    %v1681 = vrot.slane %v1680, 1
    %v1682 = vadd.f32 %v1680, %v1681
    %vm1683 = vcmp.eq.s32.totalorder %v1602, 3
    %vm1684 = vcmp.eq.s32.totalorder %v1615, 3
    %v1685 = vsel %vm1683, 1, 0
    %v1686 = vsel %vm1684, 1, 0
    %vm1687 = vcmp.eq.s32.totalorder %v1685, 1
    %vm1688 = vcmp.eq.s32.totalorder %v1686, 1
    %v1689 = vsel %vm1687, %v30, 0.0
    %v1690 = vsel %vm1688, %v31, 0.0
    %v1691 = vsel %vm1624, %v1689, 0.0
    %v1692 = vrot.slane %v1691, 4
    %v1693 = vadd.f32 %v1691, %v1692
    %v1694 = vrot.slane %v1693, 2
    %v1695 = vadd.f32 %v1693, %v1694
    %v1696 = vrot.slane %v1695, 1
    %v1697 = vadd.f32 %v1695, %v1696
    %v1698 = vsel %vm1624, %v1690, 0.0
    %v1699 = vrot.slane %v1698, 4
    %v1700 = vadd.f32 %v1698, %v1699
    %v1701 = vrot.slane %v1700, 2
    %v1702 = vadd.f32 %v1700, %v1701
    %v1703 = vrot.slane %v1702, 1
    %v1704 = vadd.f32 %v1702, %v1703
    %vm1705 = vcmp.eq.s32.totalorder %v1602, 4
    %vm1706 = vcmp.eq.s32.totalorder %v1615, 4
    %v1707 = vsel %vm1705, 1, 0
    %v1708 = vsel %vm1706, 1, 0
    %vm1709 = vcmp.eq.s32.totalorder %v1707, 1
    %vm1710 = vcmp.eq.s32.totalorder %v1708, 1
    %v1711 = vsel %vm1709, %v30, 0.0
    %v1712 = vsel %vm1710, %v31, 0.0
    %v1713 = vsel %vm1624, %v1711, 0.0
    %v1714 = vrot.slane %v1713, 4
    %v1715 = vadd.f32 %v1713, %v1714
    %v1716 = vrot.slane %v1715, 2
    %v1717 = vadd.f32 %v1715, %v1716
    %v1718 = vrot.slane %v1717, 1
    %v1719 = vadd.f32 %v1717, %v1718
    %v1720 = vsel %vm1624, %v1712, 0.0
    %v1721 = vrot.slane %v1720, 4
    %v1722 = vadd.f32 %v1720, %v1721
    %v1723 = vrot.slane %v1722, 2
    %v1724 = vadd.f32 %v1722, %v1723
    %v1725 = vrot.slane %v1724, 1
    %v1726 = vadd.f32 %v1724, %v1725
    %v1729 = vsel %vm956, %v1638, %v1631
    %v1733 = vsel %vm1581, %v1660, %v1653
    %vm1737 = vcmask 1045509
    %v1738 = vsel %vm1737, %v1682, %v1675
    %vm1742 = vcmask 1047559
    %v1743 = vsel %vm1742, %v1704, %v1697
    %v1747 = vsel %vm956, %v1726, %v1719
    %v1749 = vsel %vm1130, %v1729, %v1733
    %vm1750 = vcmask 1043456
    %v1751 = vsel %vm1750, %v1749, %v1738
    %v1752 = vsel %vm47, %v1751, %v1743
    %v1753 = vld [vmem:[#allocation2 + $0x358] sm:$0x7f]
    %v1754 = vpack.c.bf16 %v1747, %v1752
    %v1755 = vpack.c.bf16 %v1753, %v1753
    %v1756 = vld [vmem:[#allocation2 + $0x380] sm:$0x1]
    %v1757 = vlaneseq
    %v1758 = vshrl.u32 %v1757, 7
    %v1759 = vsub.s32 0, %v1758
    %v1760 = vrot.slane %v1756, %v1759
    %1762 = vrot.lane.b32.xlu0 %v1754, 123
    %v1763 = vpop.permute.xlu0 %1762
    %vm1764 = vcmask 56320
    %v1766 = vsel %vm1764, %v1763, 0
    %v1768 = vsel %vm1131, 4294967295, 65535
    %v1769 = vsel %vm1750, %v1768, 0
    %v1771 = vand.u32 %v1755, %v1769
    %1773 = vmatprep.subr.bf16.mxu0 0
    %1774 = vmatpush1.bf16.msra.mxu0 %v1771
    %1775 = vmatprep.subr.bf16.mxu0 0
    %1776 = vmatpush1.bf16.msra.mxu0 0
    %1777 = vmatprep.subr.bf16.mxu0 0
    %1778 = vmatpush1.bf16.msra.mxu0 0
    %1779 = vmatprep.subr.bf16.mxu0 0
    %1780 = vmatpush1.bf16.msra.mxu0 0
    %1781 = vmatprep.subr.bf16.mxu0 0
    %1782 = vmatpush1.bf16.msra.mxu0 0
    %1783 = vmatprep.subr.bf16.mxu0 0
    %1784 = vmatpush1.bf16.msra.mxu0 0
    %1785 = vmatprep.subr.bf16.mxu0 0
    %1786 = vmatpush1.bf16.msra.mxu0 0
    %1787 = vmatprep.subr.bf16.mxu0 0
    %1788 = vmatpush1.bf16.msra.mxu0 0
    %1789 = vmatprep.subr.bf16.mxu0 0
    %1790 = vmatpush1.bf16.msra.mxu0 0
    %1791 = vmatprep.subr.bf16.mxu0 0
    %1792 = vmatpush1.bf16.msra.mxu0 0
    %1793 = vmatprep.subr.bf16.mxu0 0
    %1794 = vmatpush1.bf16.msra.mxu0 0
    %1795 = vmatprep.subr.bf16.mxu0 0
    %1796 = vmatpush1.bf16.msra.mxu0 0
    %1797 = vmatprep.subr.bf16.mxu0 0
    %1798 = vmatpush1.bf16.msra.mxu0 0
    %1799 = vmatprep.subr.bf16.mxu0 0
    %1800 = vmatpush1.bf16.msra.mxu0 0
    %1801 = vmatprep.subr.bf16.mxu0 0
    %1802 = vmatpush1.bf16.msra.mxu0 0
    %1803 = vmatprep.subr.bf16.mxu0 0
    %1804 = vmatpush1.bf16.msra.mxu0 0
    %1805 = vmatprep.mubr.bf16.mxu0 0
    %1806 = vmatmul.mubr.bf16.gmra.mrb[0].mxu0 %v1766
    %v1807 = vpop.f32.mrb[0].mxu0
    %v1808 = vadd.f32 %v1760, %v1807
    %v1809 = vpop.f32.mrb[0].mxu0
    %v1810 = vpop.f32.mrb[0].mxu0
    %v1811 = vadd.f32 %v1760, %v1810
    %v1812 = vpop.f32.mrb[0].mxu0
    %1813 = vdwg.mxu0
    %v1814 = vld [vmem:[#allocation2 + $0x360] sm:$0xff]
    %v1815 = vld [vmem:[#allocation2 + $0x368] sm:$0xff]
    %v1816 = vld [vmem:[#allocation2 + $0x370] sm:$0xff]
    %v1817 = vld [vmem:[#allocation2 + $0x378] sm:$0xff]
    %v1818 = vpack.c.bf16 %v1815, %v1814
    %v1819 = vpack.c.bf16 %v1817, %v1816
    %vm1820 = vcmask 261120
    %v1822 = vsel %vm1820, 0, 0
    %1824 = vmatprep.subr.bf16.mxu0 0
    %1825 = vmatpush1.bf16.msra.mxu0 %v1818
    %1826 = vmatprep.subr.bf16.mxu0 0
    %1827 = vmatpush1.bf16.msra.mxu0 %v1819
    %1828 = vmatprep.subr.bf16.mxu0 0
    %1829 = vmatpush1.bf16.msra.mxu0 0
    %1830 = vmatprep.subr.bf16.mxu0 0
    %1831 = vmatpush1.bf16.msra.mxu0 0
    %1832 = vmatprep.subr.bf16.mxu0 0
    %1833 = vmatpush1.bf16.msra.mxu0 0
    %1834 = vmatprep.subr.bf16.mxu0 0
    %1835 = vmatpush1.bf16.msra.mxu0 0
    %1836 = vmatprep.subr.bf16.mxu0 0
    %1837 = vmatpush1.bf16.msra.mxu0 0
    %1838 = vmatprep.subr.bf16.mxu0 0
    %1839 = vmatpush1.bf16.msra.mxu0 0
    %1840 = vmatprep.subr.bf16.mxu0 0
    %1841 = vmatpush1.bf16.msra.mxu0 0
    %1842 = vmatprep.subr.bf16.mxu0 0
    %1843 = vmatpush1.bf16.msra.mxu0 0
    %1844 = vmatprep.subr.bf16.mxu0 0
    %1845 = vmatpush1.bf16.msra.mxu0 0
    %1846 = vmatprep.subr.bf16.mxu0 0
    %1847 = vmatpush1.bf16.msra.mxu0 0
    %1848 = vmatprep.subr.bf16.mxu0 0
    %1849 = vmatpush1.bf16.msra.mxu0 0
    %1850 = vmatprep.subr.bf16.mxu0 0
    %1851 = vmatpush1.bf16.msra.mxu0 0
    %1852 = vmatprep.subr.bf16.mxu0 0
    %1853 = vmatpush1.bf16.msra.mxu0 0
    %1854 = vmatprep.subr.bf16.mxu0 0
    %1855 = vmatpush1.bf16.msra.mxu0 0
    %1856 = vmatprep.mubr.bf16.mxu0 0
    %1857 = vmatmul.mubr.bf16.gmra.mrb[0].mxu0 %v1822
    %v1858 = vpop.f32.mrb[0].mxu0
    %v1859 = vadd.f32 0.0, %v1858
    %v1860 = vpop.f32.mrb[0].mxu0
    %v1861 = vpop.f32.mrb[0].mxu0
    %v1862 = vpop.f32.mrb[0].mxu0
    %1863 = vdwg.mxu0
    %v1864 = vadd.f32 %v1808, %v1859
    %v1865 = vxor.u32 %v1864, 2147483648
    %v1866 = vmul.f32 %v1865, 1.442695
    %v1867 = vpow.pop %v1866
    %v1868 = vadd.f32 %v1867, 1.0
    %v1869 = vrcp.pop %v1868
    %v1870 = vmul.f32 1.0, %v1869
    %v1871 = vtanh.pop %v1864
    %v1872 = vmul.f32 %v1870, 0.0
    %1874 = vrot.lane.b32.xlu0 %v1871, 32
    %v1875 = vpop.permute.xlu0 %1874
    %v1877 = vmul.f32 %v1870, %v1875
    %1879 = vrot.lane.b32.xlu0 %v1877, 32
    %v1880 = vpop.permute.xlu0 %1879
    %v1882 = vadd.f32 %v1872, %v1880
    %v1883 = vtanh.pop %v1882
    %1885 = vrot.lane.b32.xlu0 %v1883, 32
    %v1886 = vpop.permute.xlu0 %1885
    %v1888 = vmul.f32 %v1870, %v1886
    %v1889 = vpack.c.bf16 %v1888, %v1888
    %1891 = vrot.lane.b32.xlu0 %v1889, 64
    %v1892 = vpop.permute.xlu0 %1891
    %v1894 = vsel %vm1820, %v1892, 0
    %1896 = vmatprep.subr.bf16.mxu0 0
    %1897 = vmatpush1.bf16.msra.mxu0 %v1818
    %1898 = vmatprep.subr.bf16.mxu0 0
    %1899 = vmatpush1.bf16.msra.mxu0 %v1819
    %1900 = vmatprep.subr.bf16.mxu0 0
    %1901 = vmatpush1.bf16.msra.mxu0 0
    %1902 = vmatprep.subr.bf16.mxu0 0
    %1903 = vmatpush1.bf16.msra.mxu0 0
    %1904 = vmatprep.subr.bf16.mxu0 0
    %1905 = vmatpush1.bf16.msra.mxu0 0
    %1906 = vmatprep.subr.bf16.mxu0 0
    %1907 = vmatpush1.bf16.msra.mxu0 0
    %1908 = vmatprep.subr.bf16.mxu0 0
    %1909 = vmatpush1.bf16.msra.mxu0 0
    %1910 = vmatprep.subr.bf16.mxu0 0
    %1911 = vmatpush1.bf16.msra.mxu0 0
    %1912 = vmatprep.subr.bf16.mxu0 0
    %1913 = vmatpush1.bf16.msra.mxu0 0
    %1914 = vmatprep.subr.bf16.mxu0 0
    %1915 = vmatpush1.bf16.msra.mxu0 0
    %1916 = vmatprep.subr.bf16.mxu0 0
    %1917 = vmatpush1.bf16.msra.mxu0 0
    %1918 = vmatprep.subr.bf16.mxu0 0
    %1919 = vmatpush1.bf16.msra.mxu0 0
    %1920 = vmatprep.subr.bf16.mxu0 0
    %1921 = vmatpush1.bf16.msra.mxu0 0
    %1922 = vmatprep.subr.bf16.mxu0 0
    %1923 = vmatpush1.bf16.msra.mxu0 0
    %1924 = vmatprep.subr.bf16.mxu0 0
    %1925 = vmatpush1.bf16.msra.mxu0 0
    %1926 = vmatprep.subr.bf16.mxu0 0
    %1927 = vmatpush1.bf16.msra.mxu0 0
    %1928 = vmatprep.mubr.bf16.mxu0 0
    %1929 = vmatmul.mubr.bf16.gmra.mrb[0].mxu0 %v1894
    %v1930 = vpop.f32.mrb[0].mxu0
    %v1931 = vadd.f32 0.0, %v1930
    %v1932 = vpop.f32.mrb[0].mxu0
    %v1933 = vpop.f32.mrb[0].mxu0
    %v1934 = vpop.f32.mrb[0].mxu0
    %1935 = vdwg.mxu0
    %v1937 = vrot.slane %v1931, 6
    %v1939 = vadd.f32 %v1808, %v1937
    %v1940 = vxor.u32 %v1939, 2147483648
    %v1941 = vmul.f32 %v1940, 1.442695
    %v1942 = vpow.pop %v1941
    %v1943 = vadd.f32 %v1942, 1.0
    %v1944 = vrcp.pop %v1943
    %v1945 = vmul.f32 1.0, %v1944
    %v1946 = vtanh.pop %v1939
    %v1948 = vrot.slane %v1882, 6
    %v1950 = vmul.f32 %v1945, %v1948
    %1952 = vrot.lane.b32.xlu0 %v1946, 32
    %v1953 = vpop.permute.xlu0 %1952
    %v1955 = vmul.f32 %v1945, %v1953
    %1957 = vrot.lane.b32.xlu0 %v1955, 32
    %v1958 = vpop.permute.xlu0 %1957
    %v1960 = vadd.f32 %v1950, %v1958
    %v1961 = vtanh.pop %v1960
    %1963 = vrot.lane.b32.xlu0 %v1961, 32
    %v1964 = vpop.permute.xlu0 %1963
    %v1966 = vmul.f32 %v1945, %v1964
    %v1967 = vpack.c.bf16 %v1966, %v1966
    %v1969 = vrot.slane %v1967, 1
    %1970 = vrot.lane.b32.xlu0 %v1969, 64
    %v1971 = vpop.permute.xlu0 %1970
    %v1973 = vsel %vm1820, %v1971, 0
    %1975 = vmatprep.subr.bf16.mxu0 0
    %1976 = vmatpush1.bf16.msra.mxu0 %v1818
    %1977 = vmatprep.subr.bf16.mxu0 0
    %1978 = vmatpush1.bf16.msra.mxu0 %v1819
    %1979 = vmatprep.subr.bf16.mxu0 0
    %1980 = vmatpush1.bf16.msra.mxu0 0
    %1981 = vmatprep.subr.bf16.mxu0 0
    %1982 = vmatpush1.bf16.msra.mxu0 0
    %1983 = vmatprep.subr.bf16.mxu0 0
    %1984 = vmatpush1.bf16.msra.mxu0 0
    %1985 = vmatprep.subr.bf16.mxu0 0
    %1986 = vmatpush1.bf16.msra.mxu0 0
    %1987 = vmatprep.subr.bf16.mxu0 0
    %1988 = vmatpush1.bf16.msra.mxu0 0
    %1989 = vmatprep.subr.bf16.mxu0 0
    %1990 = vmatpush1.bf16.msra.mxu0 0
    %1991 = vmatprep.subr.bf16.mxu0 0
    %1992 = vmatpush1.bf16.msra.mxu0 0
    %1993 = vmatprep.subr.bf16.mxu0 0
    %1994 = vmatpush1.bf16.msra.mxu0 0
    %1995 = vmatprep.subr.bf16.mxu0 0
    %1996 = vmatpush1.bf16.msra.mxu0 0
    %1997 = vmatprep.subr.bf16.mxu0 0
    %1998 = vmatpush1.bf16.msra.mxu0 0
    %1999 = vmatprep.subr.bf16.mxu0 0
    %2000 = vmatpush1.bf16.msra.mxu0 0
    %2001 = vmatprep.subr.bf16.mxu0 0
    %2002 = vmatpush1.bf16.msra.mxu0 0
    %2003 = vmatprep.subr.bf16.mxu0 0
    %2004 = vmatpush1.bf16.msra.mxu0 0
    %2005 = vmatprep.subr.bf16.mxu0 0
    %2006 = vmatpush1.bf16.msra.mxu0 0
    %2007 = vmatprep.mubr.bf16.mxu0 0
    %2008 = vmatmul.mubr.bf16.gmra.mrb[0].mxu0 %v1973
    %v2009 = vpop.f32.mrb[0].mxu0
    %v2010 = vadd.f32 0.0, %v2009
    %v2011 = vpop.f32.mrb[0].mxu0
    %v2012 = vpop.f32.mrb[0].mxu0
    %v2013 = vpop.f32.mrb[0].mxu0
    %2014 = vdwg.mxu0
    %v2016 = vrot.slane %v2010, 4
    %v2018 = vadd.f32 %v1808, %v2016
    %v2019 = vxor.u32 %v2018, 2147483648
    %v2020 = vmul.f32 %v2019, 1.442695
    %v2021 = vpow.pop %v2020
    %v2022 = vadd.f32 %v2021, 1.0
    %v2023 = vrcp.pop %v2022
    %v2024 = vmul.f32 1.0, %v2023
    %v2025 = vtanh.pop %v2018
    %v2027 = vrot.slane %v1960, 6
    %v2029 = vmul.f32 %v2024, %v2027
    %2031 = vrot.lane.b32.xlu0 %v2025, 32
    %v2032 = vpop.permute.xlu0 %2031
    %v2034 = vmul.f32 %v2024, %v2032
    %2036 = vrot.lane.b32.xlu0 %v2034, 32
    %v2037 = vpop.permute.xlu0 %2036
    %v2039 = vadd.f32 %v2029, %v2037
    %v2040 = vtanh.pop %v2039
    %2042 = vrot.lane.b32.xlu0 %v2040, 32
    %v2043 = vpop.permute.xlu0 %2042
    %v2045 = vmul.f32 %v2024, %v2043
    %v2046 = vpack.c.bf16 %v2045, %v2045
    %v2048 = vrot.slane %v2046, 2
    %2049 = vrot.lane.b32.xlu0 %v2048, 64
    %v2050 = vpop.permute.xlu0 %2049
    %v2052 = vsel %vm1820, %v2050, 0
    %2054 = vmatprep.subr.bf16.mxu0 0
    %2055 = vmatpush1.bf16.msra.mxu0 %v1818
    %2056 = vmatprep.subr.bf16.mxu0 0
    %2057 = vmatpush1.bf16.msra.mxu0 %v1819
    %2058 = vmatprep.subr.bf16.mxu0 0
    %2059 = vmatpush1.bf16.msra.mxu0 0
    %2060 = vmatprep.subr.bf16.mxu0 0
    %2061 = vmatpush1.bf16.msra.mxu0 0
    %2062 = vmatprep.subr.bf16.mxu0 0
    %2063 = vmatpush1.bf16.msra.mxu0 0
    %2064 = vmatprep.subr.bf16.mxu0 0
    %2065 = vmatpush1.bf16.msra.mxu0 0
    %2066 = vmatprep.subr.bf16.mxu0 0
    %2067 = vmatpush1.bf16.msra.mxu0 0
    %2068 = vmatprep.subr.bf16.mxu0 0
    %2069 = vmatpush1.bf16.msra.mxu0 0
    %2070 = vmatprep.subr.bf16.mxu0 0
    %2071 = vmatpush1.bf16.msra.mxu0 0
    %2072 = vmatprep.subr.bf16.mxu0 0
    %2073 = vmatpush1.bf16.msra.mxu0 0
    %2074 = vmatprep.subr.bf16.mxu0 0
    %2075 = vmatpush1.bf16.msra.mxu0 0
    %2076 = vmatprep.subr.bf16.mxu0 0
    %2077 = vmatpush1.bf16.msra.mxu0 0
    %2078 = vmatprep.subr.bf16.mxu0 0
    %2079 = vmatpush1.bf16.msra.mxu0 0
    %2080 = vmatprep.subr.bf16.mxu0 0
    %2081 = vmatpush1.bf16.msra.mxu0 0
    %2082 = vmatprep.subr.bf16.mxu0 0
    %2083 = vmatpush1.bf16.msra.mxu0 0
    %2084 = vmatprep.subr.bf16.mxu0 0
    %2085 = vmatpush1.bf16.msra.mxu0 0
    %2086 = vmatprep.mubr.bf16.mxu0 0
    %2087 = vmatmul.mubr.bf16.gmra.mrb[0].mxu0 %v2052
    %v2088 = vpop.f32.mrb[0].mxu0
    %v2089 = vadd.f32 0.0, %v2088
    %v2090 = vpop.f32.mrb[0].mxu0
    %v2091 = vpop.f32.mrb[0].mxu0
    %v2092 = vpop.f32.mrb[0].mxu0
    %2093 = vdwg.mxu0
    %v2095 = vrot.slane %v2089, 2
    %v2097 = vadd.f32 %v1808, %v2095
    %v2098 = vxor.u32 %v2097, 2147483648
    %v2099 = vmul.f32 %v2098, 1.442695
    %v2100 = vpow.pop %v2099
    %v2101 = vadd.f32 %v2100, 1.0
    %v2102 = vrcp.pop %v2101
    %v2103 = vmul.f32 1.0, %v2102
    %v2104 = vtanh.pop %v2097
    %v2106 = vrot.slane %v2039, 6
    %v2108 = vmul.f32 %v2103, %v2106
    %2110 = vrot.lane.b32.xlu0 %v2104, 32
    %v2111 = vpop.permute.xlu0 %2110
    %v2113 = vmul.f32 %v2103, %v2111
    %2115 = vrot.lane.b32.xlu0 %v2113, 32
    %v2116 = vpop.permute.xlu0 %2115
    %v2118 = vadd.f32 %v2108, %v2116
    %v2119 = vtanh.pop %v2118
    %2121 = vrot.lane.b32.xlu0 %v2119, 32
    %v2122 = vpop.permute.xlu0 %2121
    %v2124 = vmul.f32 %v2103, %v2122
    %v2125 = vpack.c.bf16 %v2124, %v2124
    %v2127 = vrot.slane %v2125, 3
    %2128 = vrot.lane.b32.xlu0 %v2127, 64
    %v2129 = vpop.permute.xlu0 %2128
    %v2131 = vsel %vm1820, %v2129, 0
    %2133 = vmatprep.subr.bf16.mxu0 0
    %2134 = vmatpush1.bf16.msra.mxu0 %v1818
    %2135 = vmatprep.subr.bf16.mxu0 0
    %2136 = vmatpush1.bf16.msra.mxu0 %v1819
    %2137 = vmatprep.subr.bf16.mxu0 0
    %2138 = vmatpush1.bf16.msra.mxu0 0
    %2139 = vmatprep.subr.bf16.mxu0 0
    %2140 = vmatpush1.bf16.msra.mxu0 0
    %2141 = vmatprep.subr.bf16.mxu0 0
    %2142 = vmatpush1.bf16.msra.mxu0 0
    %2143 = vmatprep.subr.bf16.mxu0 0
    %2144 = vmatpush1.bf16.msra.mxu0 0
    %2145 = vmatprep.subr.bf16.mxu0 0
    %2146 = vmatpush1.bf16.msra.mxu0 0
    %2147 = vmatprep.subr.bf16.mxu0 0
    %2148 = vmatpush1.bf16.msra.mxu0 0
    %2149 = vmatprep.subr.bf16.mxu0 0
    %2150 = vmatpush1.bf16.msra.mxu0 0
    %2151 = vmatprep.subr.bf16.mxu0 0
    %2152 = vmatpush1.bf16.msra.mxu0 0
    %2153 = vmatprep.subr.bf16.mxu0 0
    %2154 = vmatpush1.bf16.msra.mxu0 0
    %2155 = vmatprep.subr.bf16.mxu0 0
    %2156 = vmatpush1.bf16.msra.mxu0 0
    %2157 = vmatprep.subr.bf16.mxu0 0
    %2158 = vmatpush1.bf16.msra.mxu0 0
    %2159 = vmatprep.subr.bf16.mxu0 0
    %2160 = vmatpush1.bf16.msra.mxu0 0
    %2161 = vmatprep.subr.bf16.mxu0 0
    %2162 = vmatpush1.bf16.msra.mxu0 0
    %2163 = vmatprep.subr.bf16.mxu0 0
    %2164 = vmatpush1.bf16.msra.mxu0 0
    %2165 = vmatprep.mubr.bf16.mxu0 0
    %2166 = vmatmul.mubr.bf16.gmra.mrb[0].mxu0 %v2131
    %v2167 = vpop.f32.mrb[0].mxu0
    %v2168 = vadd.f32 0.0, %v2167
    %v2169 = vpop.f32.mrb[0].mxu0
    %v2170 = vpop.f32.mrb[0].mxu0
    %v2171 = vpop.f32.mrb[0].mxu0
    %2172 = vdwg.mxu0
    %v2173 = vadd.f32 %v1811, %v2168
    %v2174 = vxor.u32 %v2173, 2147483648
    %v2175 = vmul.f32 %v2174, 1.442695
    %v2176 = vpow.pop %v2175
    %v2177 = vadd.f32 %v2176, 1.0
    %v2178 = vrcp.pop %v2177
    %v2179 = vmul.f32 1.0, %v2178
    %v2180 = vtanh.pop %v2173
    %v2182 = vrot.slane %v2118, 6
    %v2184 = vmul.f32 %v2179, %v2182
    %2186 = vrot.lane.b32.xlu0 %v2180, 32
    %v2187 = vpop.permute.xlu0 %2186
    %v2189 = vmul.f32 %v2179, %v2187
    %2191 = vrot.lane.b32.xlu0 %v2189, 32
    %v2192 = vpop.permute.xlu0 %2191
    %v2194 = vadd.f32 %v2184, %v2192
    %v2195 = vtanh.pop %v2194
    %2197 = vrot.lane.b32.xlu0 %v2195, 32
    %v2198 = vpop.permute.xlu0 %2197
    %v2200 = vmul.f32 %v2179, %v2198
    %v2201 = vld [vmem:[#allocation2 + $0x388] sm:$0x1f]
    %v2202 = vpack.c.bf16 %v2201, %v2201
    %v2203 = vld [vmem:[#allocation2 + $0x390] sm:$0xff]
    %v2204 = vld [vmem:[#allocation2 + $0x398] sm:$0xff]
    %v2205 = vld [vmem:[#allocation2 + $0x3a0] sm:$0xff]
    %v2206 = vld [vmem:[#allocation2 + $0x3a8] sm:$0xff]
    %v2207 = vpack.c.bf16 %v2200, %v2200
    %v2208 = vpack.c.bf16 %v2204, %v2203
    %v2209 = vpack.c.bf16 %v2206, %v2205
    %2211 = vrot.lane.b32.xlu0 %v2207, 64
    %v2212 = vpop.permute.xlu0 %2211
    %v2214 = vsel %vm1820, %v2212, 0
    %2216 = vmatprep.subr.bf16.mxu0 0
    %2217 = vmatpush1.bf16.msra.mxu0 %v2208
    %2218 = vmatprep.subr.bf16.mxu0 0
    %2219 = vmatpush1.bf16.msra.mxu0 %v2209
    %2220 = vmatprep.subr.bf16.mxu0 0
    %2221 = vmatpush1.bf16.msra.mxu0 0
    %2222 = vmatprep.subr.bf16.mxu0 0
    %2223 = vmatpush1.bf16.msra.mxu0 0
    %2224 = vmatprep.subr.bf16.mxu0 0
    %2225 = vmatpush1.bf16.msra.mxu0 0
    %2226 = vmatprep.subr.bf16.mxu0 0
    %2227 = vmatpush1.bf16.msra.mxu0 0
    %2228 = vmatprep.subr.bf16.mxu0 0
    %2229 = vmatpush1.bf16.msra.mxu0 0
    %2230 = vmatprep.subr.bf16.mxu0 0
    %2231 = vmatpush1.bf16.msra.mxu0 0
    %2232 = vmatprep.subr.bf16.mxu0 0
    %2233 = vmatpush1.bf16.msra.mxu0 0
    %2234 = vmatprep.subr.bf16.mxu0 0
    %2235 = vmatpush1.bf16.msra.mxu0 0
    %2236 = vmatprep.subr.bf16.mxu0 0
    %2237 = vmatpush1.bf16.msra.mxu0 0
    %2238 = vmatprep.subr.bf16.mxu0 0
    %2239 = vmatpush1.bf16.msra.mxu0 0
    %2240 = vmatprep.subr.bf16.mxu0 0
    %2241 = vmatpush1.bf16.msra.mxu0 0
    %2242 = vmatprep.subr.bf16.mxu0 0
    %2243 = vmatpush1.bf16.msra.mxu0 0
    %2244 = vmatprep.subr.bf16.mxu0 0
    %2245 = vmatpush1.bf16.msra.mxu0 0
    %2246 = vmatprep.subr.bf16.mxu0 0
    %2247 = vmatpush1.bf16.msra.mxu0 0
    %2248 = vmatprep.mubr.bf16.mxu0 0
    %2249 = vmatmul.mubr.bf16.gmra.mrb[0].mxu0 %v2214
    %v2250 = vpop.f32.mrb[0].mxu0
    %v2251 = vadd.f32 0.0, %v2250
    %v2252 = vpop.f32.mrb[0].mxu0
    %v2253 = vpop.f32.mrb[0].mxu0
    %v2254 = vpop.f32.mrb[0].mxu0
    %2255 = vdwg.mxu0
    %v2257 = vand.u32 %v2202, %v1133
    %2259 = vmatprep.subr.bf16.mxu0 0
    %2260 = vmatpush1.bf16.msra.mxu0 %v2257
    %2261 = vmatprep.subr.bf16.mxu0 0
    %2262 = vmatpush1.bf16.msra.mxu0 0
    %2263 = vmatprep.subr.bf16.mxu0 0
    %2264 = vmatpush1.bf16.msra.mxu0 0
    %2265 = vmatprep.subr.bf16.mxu0 0
    %2266 = vmatpush1.bf16.msra.mxu0 0
    %2267 = vmatprep.subr.bf16.mxu0 0
    %2268 = vmatpush1.bf16.msra.mxu0 0
    %2269 = vmatprep.subr.bf16.mxu0 0
    %2270 = vmatpush1.bf16.msra.mxu0 0
    %2271 = vmatprep.subr.bf16.mxu0 0
    %2272 = vmatpush1.bf16.msra.mxu0 0
    %2273 = vmatprep.subr.bf16.mxu0 0
    %2274 = vmatpush1.bf16.msra.mxu0 0
    %2275 = vmatprep.subr.bf16.mxu0 0
    %2276 = vmatpush1.bf16.msra.mxu0 0
    %2277 = vmatprep.subr.bf16.mxu0 0
    %2278 = vmatpush1.bf16.msra.mxu0 0
    %2279 = vmatprep.subr.bf16.mxu0 0
    %2280 = vmatpush1.bf16.msra.mxu0 0
    %2281 = vmatprep.subr.bf16.mxu0 0
    %2282 = vmatpush1.bf16.msra.mxu0 0
    %2283 = vmatprep.subr.bf16.mxu0 0
    %2284 = vmatpush1.bf16.msra.mxu0 0
    %2285 = vmatprep.subr.bf16.mxu0 0
    %2286 = vmatpush1.bf16.msra.mxu0 0
    %2287 = vmatprep.subr.bf16.mxu0 0
    %2288 = vmatpush1.bf16.msra.mxu0 0
    %2289 = vmatprep.subr.bf16.mxu0 0
    %2290 = vmatpush1.bf16.msra.mxu0 0
    %2291 = vmatprep.mubr.bf16.mxu0 0
    %2292 = vmatmul.mubr.bf16.gmra.mrb[0].mxu0 %v1128
    %v2293 = vpop.f32.mrb[0].mxu0
    %v2294 = vadd.f32 %v2251, %v2293
    %v2295 = vpop.f32.mrb[0].mxu0
    %v2296 = vpop.f32.mrb[0].mxu0
    %v2297 = vpop.f32.mrb[0].mxu0
    %2298 = vdwg.mxu0
    %v2299 = vld [vmem:[#allocation2 + $0x3b0] sm:$0x1]
    %v2300 = vlaneseq
    %v2301 = vshrl.u32 %v2300, 7
    %v2302 = vsub.s32 0, %v2301
    %v2303 = vrot.slane %v2299, %v2302
    %v2304 = vadd.f32 %v2294, %v2303
    %v2305 = vmax.f32 %v2304, 0.0
    %v2306 = vld [vmem:[#allocation2 + $0x3b8] sm:$0xff]
    %v2307 = vld [vmem:[#allocation2 + $0x3c0] sm:$0xff]
    %v2308 = vld [vmem:[#allocation2 + $0x3c8] sm:$0xff]
    %v2309 = vld [vmem:[#allocation2 + $0x3d0] sm:$0xff]
    %v2310 = vld [vmem:[#allocation2 + $0x3d8] sm:$0xff]
    %v2311 = vld [vmem:[#allocation2 + $0x3e0] sm:$0xff]
    %v2312 = vld [vmem:[#allocation2 + $0x3e8] sm:$0xff]
    %v2313 = vld [vmem:[#allocation2 + $0x3f0] sm:$0xff]
    %v2314 = vld [vmem:[#allocation2 + $0x3f8] sm:$0xff]
    %v2315 = vld [vmem:[#allocation2 + $0x400] sm:$0xff]
    %v2316 = vld [vmem:[#allocation2 + $0x408] sm:$0xff]
    %v2317 = vld [vmem:[#allocation2 + $0x410] sm:$0xff]
    %v2318 = vld [vmem:[#allocation2 + $0x418] sm:$0xff]
    %v2319 = vld [vmem:[#allocation2 + $0x420] sm:$0xff]
    %v2320 = vld [vmem:[#allocation2 + $0x428] sm:$0xff]
    %v2321 = vld [vmem:[#allocation2 + $0x430] sm:$0xff]
    %v2322 = vpack.c.bf16 %v2305, %v2305
    %v2323 = vpack.c.bf16 %v2307, %v2306
    %v2324 = vpack.c.bf16 %v2309, %v2308
    %v2325 = vpack.c.bf16 %v2311, %v2310
    %v2326 = vpack.c.bf16 %v2313, %v2312
    %v2327 = vpack.c.bf16 %v2315, %v2314
    %v2328 = vpack.c.bf16 %v2317, %v2316
    %v2329 = vpack.c.bf16 %v2319, %v2318
    %v2330 = vpack.c.bf16 %v2321, %v2320
    %v2331 = vld [vmem:[#allocation2 + $0x438] sm:$0x1]
    %v2332 = vlaneseq
    %v2333 = vshrl.u32 %v2332, 7
    %v2334 = vsub.s32 0, %v2333
    %v2335 = vrot.slane %v2331, %v2334
    %2336 = vmatprep.subr.bf16.mxu0 0
    %2337 = vmatpush1.bf16.msra.mxu0 %v2323
    %2338 = vmatprep.subr.bf16.mxu0 0
    %2339 = vmatpush1.bf16.msra.mxu0 %v2324
    %2340 = vmatprep.subr.bf16.mxu0 0
    %2341 = vmatpush1.bf16.msra.mxu0 %v2325
    %2342 = vmatprep.subr.bf16.mxu0 0
    %2343 = vmatpush1.bf16.msra.mxu0 %v2326
    %2344 = vmatprep.subr.bf16.mxu0 0
    %2345 = vmatpush1.bf16.msra.mxu0 %v2327
    %2346 = vmatprep.subr.bf16.mxu0 0
    %2347 = vmatpush1.bf16.msra.mxu0 %v2328
    %2348 = vmatprep.subr.bf16.mxu0 0
    %2349 = vmatpush1.bf16.msra.mxu0 %v2329
    %2350 = vmatprep.subr.bf16.mxu0 0
    %2351 = vmatpush1.bf16.msra.mxu0 %v2330
    %2352 = vmatprep.subr.bf16.mxu0 0
    %2353 = vmatpush1.bf16.msra.mxu0 0
    %2354 = vmatprep.subr.bf16.mxu0 0
    %2355 = vmatpush1.bf16.msra.mxu0 0
    %2356 = vmatprep.subr.bf16.mxu0 0
    %2357 = vmatpush1.bf16.msra.mxu0 0
    %2358 = vmatprep.subr.bf16.mxu0 0
    %2359 = vmatpush1.bf16.msra.mxu0 0
    %2360 = vmatprep.subr.bf16.mxu0 0
    %2361 = vmatpush1.bf16.msra.mxu0 0
    %2362 = vmatprep.subr.bf16.mxu0 0
    %2363 = vmatpush1.bf16.msra.mxu0 0
    %2364 = vmatprep.subr.bf16.mxu0 0
    %2365 = vmatpush1.bf16.msra.mxu0 0
    %2366 = vmatprep.subr.bf16.mxu0 0
    %2367 = vmatpush1.bf16.msra.mxu0 0
    %2368 = vmatprep.mubr.bf16.mxu0 0
    %2369 = vmatmul.mubr.bf16.gmra.mrb[0].mxu0 %v2322
    %v2370 = vpop.f32.mrb[0].mxu0
    %v2371 = vadd.f32 %v2335, %v2370
    %v2372 = vpop.f32.mrb[0].mxu0
    %v2373 = vpop.f32.mrb[0].mxu0
    %v2374 = vpop.f32.mrb[0].mxu0
    %2375 = vdwg.mxu0
    %v2376 = vld [vmem:[#allocation2 + $0x440] sm:$0xff]
    %v2377 = vld [vmem:[#allocation2 + $0x448] sm:$0xff]
    %v2378 = vld [vmem:[#allocation2 + $0x450] sm:$0xff]
    %v2379 = vld [vmem:[#allocation2 + $0x458] sm:$0xff]
    %v2380 = vld [vmem:[#allocation2 + $0x460] sm:$0xff]
    %v2381 = vld [vmem:[#allocation2 + $0x468] sm:$0xff]
    %v2382 = vld [vmem:[#allocation2 + $0x470] sm:$0xff]
    %v2383 = vld [vmem:[#allocation2 + $0x478] sm:$0xff]
    %v2384 = vld [vmem:[#allocation2 + $0x480] sm:$0xff]
    %v2385 = vld [vmem:[#allocation2 + $0x488] sm:$0xff]
    %v2386 = vld [vmem:[#allocation2 + $0x490] sm:$0xff]
    %v2387 = vld [vmem:[#allocation2 + $0x498] sm:$0xff]
    %v2388 = vld [vmem:[#allocation2 + $0x4a0] sm:$0xff]
    %v2389 = vld [vmem:[#allocation2 + $0x4a8] sm:$0xff]
    %v2390 = vld [vmem:[#allocation2 + $0x4b0] sm:$0xff]
    %v2391 = vld [vmem:[#allocation2 + $0x4b8] sm:$0xff]
    %v2392 = vpack.c.bf16 %v2371, %v2371
    %v2393 = vpack.c.bf16 %v2377, %v2376
    %v2394 = vpack.c.bf16 %v2379, %v2378
    %v2395 = vpack.c.bf16 %v2381, %v2380
    %v2396 = vpack.c.bf16 %v2383, %v2382
    %v2397 = vpack.c.bf16 %v2385, %v2384
    %v2398 = vpack.c.bf16 %v2387, %v2386
    %v2399 = vpack.c.bf16 %v2389, %v2388
    %v2400 = vpack.c.bf16 %v2391, %v2390
    %v2401 = vld [vmem:[#allocation2 + $0x4c0] sm:$0xff]
    %v2402 = vld [vmem:[#allocation2 + $0x4c8] sm:$0xff]
    %v2403 = vld [vmem:[#allocation2 + $0x4d0] sm:$0xff]
    %v2404 = vld [vmem:[#allocation2 + $0x4d8] sm:$0xff]
    %v2405 = vld [vmem:[#allocation2 + $0x4e0] sm:$0xff]
    %v2406 = vld [vmem:[#allocation2 + $0x4e8] sm:$0xff]
    %v2407 = vld [vmem:[#allocation2 + $0x4f0] sm:$0xff]
    %v2408 = vld [vmem:[#allocation2 + $0x4f8] sm:$0xff]
    %v2409 = vld [vmem:[#allocation2 + $0x500] sm:$0xff]
    %v2410 = vld [vmem:[#allocation2 + $0x508] sm:$0xff]
    %v2411 = vld [vmem:[#allocation2 + $0x510] sm:$0xff]
    %v2412 = vld [vmem:[#allocation2 + $0x518] sm:$0xff]
    %v2413 = vld [vmem:[#allocation2 + $0x520] sm:$0xff]
    %v2414 = vld [vmem:[#allocation2 + $0x528] sm:$0xff]
    %v2415 = vld [vmem:[#allocation2 + $0x530] sm:$0xff]
    %v2416 = vld [vmem:[#allocation2 + $0x538] sm:$0xff]
    %v2417 = vpack.c.bf16 %v1249, %v1249
    %v2418 = vpack.c.bf16 %v2402, %v2401
    %v2419 = vpack.c.bf16 %v2404, %v2403
    %v2420 = vpack.c.bf16 %v2406, %v2405
    %v2421 = vpack.c.bf16 %v2408, %v2407
    %v2422 = vpack.c.bf16 %v2410, %v2409
    %v2423 = vpack.c.bf16 %v2412, %v2411
    %v2424 = vpack.c.bf16 %v2414, %v2413
    %v2425 = vpack.c.bf16 %v2416, %v2415
    %2426 = vmatprep.subr.bf16.mxu0 0
    %2427 = vmatpush1.bf16.msra.mxu0 %v2418
    %2428 = vmatprep.subr.bf16.mxu0 0
    %2429 = vmatpush1.bf16.msra.mxu0 %v2419
    %2430 = vmatprep.subr.bf16.mxu0 0
    %2431 = vmatpush1.bf16.msra.mxu0 %v2420
    %2432 = vmatprep.subr.bf16.mxu0 0
    %2433 = vmatpush1.bf16.msra.mxu0 %v2421
    %2434 = vmatprep.subr.bf16.mxu0 0
    %2435 = vmatpush1.bf16.msra.mxu0 %v2422
    %2436 = vmatprep.subr.bf16.mxu0 0
    %2437 = vmatpush1.bf16.msra.mxu0 %v2423
    %2438 = vmatprep.subr.bf16.mxu0 0
    %2439 = vmatpush1.bf16.msra.mxu0 %v2424
    %2440 = vmatprep.subr.bf16.mxu0 0
    %2441 = vmatpush1.bf16.msra.mxu0 %v2425
    %2442 = vmatprep.subr.bf16.mxu0 0
    %2443 = vmatpush1.bf16.msra.mxu0 0
    %2444 = vmatprep.subr.bf16.mxu0 0
    %2445 = vmatpush1.bf16.msra.mxu0 0
    %2446 = vmatprep.subr.bf16.mxu0 0
    %2447 = vmatpush1.bf16.msra.mxu0 0
    %2448 = vmatprep.subr.bf16.mxu0 0
    %2449 = vmatpush1.bf16.msra.mxu0 0
    %2450 = vmatprep.subr.bf16.mxu0 0
    %2451 = vmatpush1.bf16.msra.mxu0 0
    %2452 = vmatprep.subr.bf16.mxu0 0
    %2453 = vmatpush1.bf16.msra.mxu0 0
    %2454 = vmatprep.subr.bf16.mxu0 0
    %2455 = vmatpush1.bf16.msra.mxu0 0
    %2456 = vmatprep.subr.bf16.mxu0 0
    %2457 = vmatpush1.bf16.msra.mxu0 0
    %2458 = vmatprep.mubr.bf16.mxu0 0
    %2459 = vmatmul.mubr.bf16.gmra.mrb[0].mxu0 %v2417
    %v2460 = vpop.f32.mrb[0].mxu0
    %v2461 = vadd.f32 0.0, %v2460
    %v2462 = vpop.f32.mrb[0].mxu0
    %v2463 = vpop.f32.mrb[0].mxu0
    %v2464 = vpop.f32.mrb[0].mxu0
    %2465 = vdwg.mxu0
    %2466 = vmatprep.subr.bf16.mxu0 0
    %2467 = vmatpush1.bf16.msra.mxu0 %v2393
    %2468 = vmatprep.subr.bf16.mxu0 0
    %2469 = vmatpush1.bf16.msra.mxu0 %v2394
    %2470 = vmatprep.subr.bf16.mxu0 0
    %2471 = vmatpush1.bf16.msra.mxu0 %v2395
    %2472 = vmatprep.subr.bf16.mxu0 0
    %2473 = vmatpush1.bf16.msra.mxu0 %v2396
    %2474 = vmatprep.subr.bf16.mxu0 0
    %2475 = vmatpush1.bf16.msra.mxu0 %v2397
    %2476 = vmatprep.subr.bf16.mxu0 0
    %2477 = vmatpush1.bf16.msra.mxu0 %v2398
    %2478 = vmatprep.subr.bf16.mxu0 0
    %2479 = vmatpush1.bf16.msra.mxu0 %v2399
    %2480 = vmatprep.subr.bf16.mxu0 0
    %2481 = vmatpush1.bf16.msra.mxu0 %v2400
    %2482 = vmatprep.subr.bf16.mxu0 0
    %2483 = vmatpush1.bf16.msra.mxu0 0
    %2484 = vmatprep.subr.bf16.mxu0 0
    %2485 = vmatpush1.bf16.msra.mxu0 0
    %2486 = vmatprep.subr.bf16.mxu0 0
    %2487 = vmatpush1.bf16.msra.mxu0 0
    %2488 = vmatprep.subr.bf16.mxu0 0
    %2489 = vmatpush1.bf16.msra.mxu0 0
    %2490 = vmatprep.subr.bf16.mxu0 0
    %2491 = vmatpush1.bf16.msra.mxu0 0
    %2492 = vmatprep.subr.bf16.mxu0 0
    %2493 = vmatpush1.bf16.msra.mxu0 0
    %2494 = vmatprep.subr.bf16.mxu0 0
    %2495 = vmatpush1.bf16.msra.mxu0 0
    %2496 = vmatprep.subr.bf16.mxu0 0
    %2497 = vmatpush1.bf16.msra.mxu0 0
    %2498 = vmatprep.mubr.bf16.mxu0 0
    %2499 = vmatmul.mubr.bf16.gmra.mrb[0].mxu0 %v2392
    %v2500 = vpop.f32.mrb[0].mxu0
    %v2501 = vadd.f32 %v2461, %v2500
    %v2502 = vpop.f32.mrb[0].mxu0
    %v2503 = vpop.f32.mrb[0].mxu0
    %v2504 = vpop.f32.mrb[0].mxu0
    %2505 = vdwg.mxu0
    %v2506 = vld [vmem:[#allocation2 + $0x540] sm:$0x1]
    %v2507 = vlaneseq
    %v2508 = vshrl.u32 %v2507, 7
    %v2509 = vsub.s32 0, %v2508
    %v2510 = vrot.slane %v2506, %v2509
    %v2511 = vadd.f32 %v2501, %v2510
    %v2512 = vmax.f32 %v2511, 0.0
    %v2513 = vld [vmem:[#allocation2 + $0x548] sm:$0xff]
    %v2514 = vld [vmem:[#allocation2 + $0x550] sm:$0xff]
    %v2515 = vld [vmem:[#allocation2 + $0x558] sm:$0xff]
    %v2516 = vld [vmem:[#allocation2 + $0x560] sm:$0xff]
    %v2517 = vld [vmem:[#allocation2 + $0x568] sm:$0xff]
    %v2518 = vld [vmem:[#allocation2 + $0x570] sm:$0xff]
    %v2519 = vld [vmem:[#allocation2 + $0x578] sm:$0xff]
    %v2520 = vld [vmem:[#allocation2 + $0x580] sm:$0xff]
    %v2521 = vld [vmem:[#allocation2 + $0x588] sm:$0xff]
    %v2522 = vld [vmem:[#allocation2 + $0x590] sm:$0xff]
    %v2523 = vld [vmem:[#allocation2 + $0x598] sm:$0xff]
    %v2524 = vld [vmem:[#allocation2 + $0x5a0] sm:$0xff]
    %v2525 = vld [vmem:[#allocation2 + $0x5a8] sm:$0xff]
    %v2526 = vld [vmem:[#allocation2 + $0x5b0] sm:$0xff]
    %v2527 = vld [vmem:[#allocation2 + $0x5b8] sm:$0xff]
    %v2528 = vld [vmem:[#allocation2 + $0x5c0] sm:$0xff]
    %v2529 = vpack.c.bf16 %v2512, %v2512
    %v2530 = vpack.c.bf16 %v2514, %v2513
    %v2531 = vpack.c.bf16 %v2516, %v2515
    %v2532 = vpack.c.bf16 %v2518, %v2517
    %v2533 = vpack.c.bf16 %v2520, %v2519
    %v2534 = vpack.c.bf16 %v2522, %v2521
    %v2535 = vpack.c.bf16 %v2524, %v2523
    %v2536 = vpack.c.bf16 %v2526, %v2525
    %v2537 = vpack.c.bf16 %v2528, %v2527
    %v2538 = vld [vmem:[#allocation2 + $0x5c8] sm:$0x1]
    %v2539 = vlaneseq
    %v2540 = vshrl.u32 %v2539, 7
    %v2541 = vsub.s32 0, %v2540
    %v2542 = vrot.slane %v2538, %v2541
    %2543 = vmatprep.subr.bf16.mxu0 0
    %2544 = vmatpush1.bf16.msra.mxu0 %v2530
    %2545 = vmatprep.subr.bf16.mxu0 0
    %2546 = vmatpush1.bf16.msra.mxu0 %v2531
    %2547 = vmatprep.subr.bf16.mxu0 0
    %2548 = vmatpush1.bf16.msra.mxu0 %v2532
    %2549 = vmatprep.subr.bf16.mxu0 0
    %2550 = vmatpush1.bf16.msra.mxu0 %v2533
    %2551 = vmatprep.subr.bf16.mxu0 0
    %2552 = vmatpush1.bf16.msra.mxu0 %v2534
    %2553 = vmatprep.subr.bf16.mxu0 0
    %2554 = vmatpush1.bf16.msra.mxu0 %v2535
    %2555 = vmatprep.subr.bf16.mxu0 0
    %2556 = vmatpush1.bf16.msra.mxu0 %v2536
    %2557 = vmatprep.subr.bf16.mxu0 0
    %2558 = vmatpush1.bf16.msra.mxu0 %v2537
    %2559 = vmatprep.subr.bf16.mxu0 0
    %2560 = vmatpush1.bf16.msra.mxu0 0
    %2561 = vmatprep.subr.bf16.mxu0 0
    %2562 = vmatpush1.bf16.msra.mxu0 0
    %2563 = vmatprep.subr.bf16.mxu0 0
    %2564 = vmatpush1.bf16.msra.mxu0 0
    %2565 = vmatprep.subr.bf16.mxu0 0
    %2566 = vmatpush1.bf16.msra.mxu0 0
    %2567 = vmatprep.subr.bf16.mxu0 0
    %2568 = vmatpush1.bf16.msra.mxu0 0
    %2569 = vmatprep.subr.bf16.mxu0 0
    %2570 = vmatpush1.bf16.msra.mxu0 0
    %2571 = vmatprep.subr.bf16.mxu0 0
    %2572 = vmatpush1.bf16.msra.mxu0 0
    %2573 = vmatprep.subr.bf16.mxu0 0
    %2574 = vmatpush1.bf16.msra.mxu0 0
    %2575 = vmatprep.mubr.bf16.mxu0 0
    %2576 = vmatmul.mubr.bf16.gmra.mrb[0].mxu0 %v2529
    %v2577 = vpop.f32.mrb[0].mxu0
    %v2578 = vadd.f32 %v2542, %v2577
    %v2579 = vpop.f32.mrb[0].mxu0
    %v2580 = vpop.f32.mrb[0].mxu0
    %v2581 = vpop.f32.mrb[0].mxu0
    %2582 = vdwg.mxu0
    %v2583 = vmax.f32 %v2578, 0.0
    %v2584 = vld [vmem:[#allocation2 + $0x5d0] sm:$0xff]
    %v2585 = vld [vmem:[#allocation2 + $0x5d8] sm:$0xff]
    %v2586 = vld [vmem:[#allocation2 + $0x5e0] sm:$0xff]
    %v2587 = vld [vmem:[#allocation2 + $0x5e8] sm:$0xff]
    %v2588 = vld [vmem:[#allocation2 + $0x5f0] sm:$0xff]
    %v2589 = vld [vmem:[#allocation2 + $0x5f8] sm:$0xff]
    %v2590 = vld [vmem:[#allocation2 + $0x600] sm:$0xff]
    %v2591 = vld [vmem:[#allocation2 + $0x608] sm:$0xff]
    %v2592 = vld [vmem:[#allocation2 + $0x610] sm:$0xff]
    %v2593 = vld [vmem:[#allocation2 + $0x618] sm:$0xff]
    %v2594 = vld [vmem:[#allocation2 + $0x620] sm:$0xff]
    %v2595 = vld [vmem:[#allocation2 + $0x628] sm:$0xff]
    %v2596 = vld [vmem:[#allocation2 + $0x630] sm:$0xff]
    %v2597 = vld [vmem:[#allocation2 + $0x638] sm:$0xff]
    %v2598 = vld [vmem:[#allocation2 + $0x640] sm:$0xff]
    %v2599 = vld [vmem:[#allocation2 + $0x648] sm:$0xff]
    %v2600 = vpack.c.bf16 %v2583, %v2583
    %v2601 = vpack.c.bf16 %v2585, %v2584
    %v2602 = vpack.c.bf16 %v2587, %v2586
    %v2603 = vpack.c.bf16 %v2589, %v2588
    %v2604 = vpack.c.bf16 %v2591, %v2590
    %v2605 = vpack.c.bf16 %v2593, %v2592
    %v2606 = vpack.c.bf16 %v2595, %v2594
    %v2607 = vpack.c.bf16 %v2597, %v2596
    %v2608 = vpack.c.bf16 %v2599, %v2598
    %v2609 = vld [vmem:[#allocation2 + $0x650] sm:$0x1]
    %v2610 = vlaneseq
    %v2611 = vshrl.u32 %v2610, 7
    %v2612 = vsub.s32 0, %v2611
    %v2613 = vrot.slane %v2609, %v2612
    %2614 = vmatprep.subr.bf16.mxu0 0
    %2615 = vmatpush1.bf16.msra.mxu0 %v2601
    %2616 = vmatprep.subr.bf16.mxu0 0
    %2617 = vmatpush1.bf16.msra.mxu0 %v2602
    %2618 = vmatprep.subr.bf16.mxu0 0
    %2619 = vmatpush1.bf16.msra.mxu0 %v2603
    %2620 = vmatprep.subr.bf16.mxu0 0
    %2621 = vmatpush1.bf16.msra.mxu0 %v2604
    %2622 = vmatprep.subr.bf16.mxu0 0
    %2623 = vmatpush1.bf16.msra.mxu0 %v2605
    %2624 = vmatprep.subr.bf16.mxu0 0
    %2625 = vmatpush1.bf16.msra.mxu0 %v2606
    %2626 = vmatprep.subr.bf16.mxu0 0
    %2627 = vmatpush1.bf16.msra.mxu0 %v2607
    %2628 = vmatprep.subr.bf16.mxu0 0
    %2629 = vmatpush1.bf16.msra.mxu0 %v2608
    %2630 = vmatprep.subr.bf16.mxu0 0
    %2631 = vmatpush1.bf16.msra.mxu0 0
    %2632 = vmatprep.subr.bf16.mxu0 0
    %2633 = vmatpush1.bf16.msra.mxu0 0
    %2634 = vmatprep.subr.bf16.mxu0 0
    %2635 = vmatpush1.bf16.msra.mxu0 0
    %2636 = vmatprep.subr.bf16.mxu0 0
    %2637 = vmatpush1.bf16.msra.mxu0 0
    %2638 = vmatprep.subr.bf16.mxu0 0
    %2639 = vmatpush1.bf16.msra.mxu0 0
    %2640 = vmatprep.subr.bf16.mxu0 0
    %2641 = vmatpush1.bf16.msra.mxu0 0
    %2642 = vmatprep.subr.bf16.mxu0 0
    %2643 = vmatpush1.bf16.msra.mxu0 0
    %2644 = vmatprep.subr.bf16.mxu0 0
    %2645 = vmatpush1.bf16.msra.mxu0 0
    %2646 = vmatprep.mubr.bf16.mxu0 0
    %2647 = vmatmul.mubr.bf16.gmra.mrb[0].mxu0 %v2600
    %v2648 = vpop.f32.mrb[0].mxu0
    %v2649 = vadd.f32 %v2613, %v2648
    %v2650 = vpop.f32.mrb[0].mxu0
    %v2651 = vpop.f32.mrb[0].mxu0
    %v2652 = vpop.f32.mrb[0].mxu0
    %2653 = vdwg.mxu0
    %2654 = vst [vmem:[#allocation5] sm:$0x3] %v2649
    // Predicated region
    $region18: #{tpu_custom_call.1} parent=1 // pred_check
      _
    $region19: #{tpu_custom_call.1} parent=1 // pred_check_branch
      %2656 = sbr.rel (0) target = $region21
    $region20: #{tpu_custom_call.1} parent=1 // pred_region
      %s2658 = ssub.s32 32, 32
      %2659 = vsyncadd [#allocation4], %s2658
      %s2661 = sshll.u32 [#allocation5], 4
      %s2662 = int_to_ptr.vmem [resolvable:$true] %s2661
      %2664 = dma.vmem_to_hbm [thread:$0]  %s2662, 32, %s3, [#allocation4]
    $region21: #{tpu_custom_call.1} parent=1 // pred_fallthru
      _
    // Predicated region
    $region22: #{tpu_custom_call.1} parent=1 // pred_check
      _
    $region23: #{tpu_custom_call.1} parent=1 // pred_check_branch
      %2666 = sbr.rel (0) target = $region25
    $region24: #{tpu_custom_call.1} parent=1 // pred_region
      %2667 = dma.done [#allocation4], 32
    $region25: #{tpu_custom_call.1} parent=1 // pred_fallthru
      _
    %2668 = vsyncpa [#allocation3], 1
    %2669 = vsyncpa [#allocation4], 1

</llo_original>
